<compile_context>
chip_gen: v7x
topology: tpu7x:2x2x1
jax: 0.10.0
libtpu: 0.0.40
codegen_flags: <defaults>
</compile_context>

<pallas_src>
import functools

import jax
import jax.numpy as jnp
from jax.experimental import pallas as pl
from jax.experimental.pallas import tpu as pltpu


def _unified_loss_kernel(temp_ref, prT_ref, piT_ref, qrT_ref, qiT_ref, lab_ref,
                         loss_ref, pred_ref, *, gmm_lambda, num_classes):
    # Block shapes (batch on lanes, features/classes on sublanes):
    #   prT_ref / piT_ref : (F, BT)   float32
    #   qrT_ref / qiT_ref : (F, C)    float32   (grid-resident, constant index)
    #   lab_ref           : (1, BT)   int32     (lane-dense labels)
    #   loss_ref          : (1, BT)   float32   (lane-dense per-sample loss)
    #   pred_ref          : (1, BT)   int32     (lane-dense argmax class)
    f32 = jnp.float32
    prT = prT_ref[...]                         # (F, BT)
    piT = piT_ref[...]
    qrT = qrT_ref[...]                         # (F, C)
    qiT = qiT_ref[...]
    labels = lab_ref[...]                      # (1, BT) int32
    feat, bt = prT.shape
    C = num_classes
    CP = ((C + 7) // 8) * 8                    # pad class axis to whole sublane tiles
    big = f32(1e30)

    cls = jax.lax.broadcasted_iota(jnp.int32, (CP, bt), 0)   # class id per sublane
    valid = cls < C

    # ---- stage 1: per-class reductions over F (EUP sqrt is the hot cost) ----
    d2t = jnp.full((CP, bt), big, f32)         # sum_F |z - p_c|^2 ; padded rows stay 'big'
    dst = jnp.zeros((CP, bt), f32)             # sum_F |z - p_c|   (L1)
    for c in range(C):
        dr = prT - qrT[:, c:c + 1]             # (F, BT)
        di = piT - qiT[:, c:c + 1]
        sq = dr * dr + di * di                 # |z - p_c|^2 ; dr/di die here
        ab = jnp.sqrt(sq)                      # EUP — irreducible hot loop
        sel = cls == c
        d2t = jnp.where(sel, jnp.sum(sq, axis=0, keepdims=True), d2t)
        dst = jnp.where(sel, jnp.sum(ab, axis=0, keepdims=True), dst)

    # ---- stage 2: lane-dense per-sample math on (CP, BT) ----------------------
    # GMM soft-MSE: r = softmax(-D2) (PyTorch hardcodes t = 1.0 here),
    # softmse = sum_c r_c * D2_c, stabilized with the class-wise min of D2.
    d2min = jnp.min(d2t, axis=0, keepdims=True)                # (1, BT)
    e = jnp.exp(d2min - d2t)                                   # (CP, BT); padded rows -> 0
    esum = jnp.sum(e, axis=0, keepdims=True)
    wsum = jnp.sum(e * d2t, axis=0, keepdims=True)
    softmse = wsum / esum                                      # (1, BT)

    # logits = -temp * mean_F(dists)  ==  (-temp / F) * DS   (constant folded)
    temp = temp_ref[0, 0]
    logits = jnp.where(valid, (temp * f32(-1.0 / feat)) * dst, -big)   # (CP, BT)

    # cross-entropy (log-sum-exp) + first-occurrence argmax, sharing one max
    lmax = jnp.max(logits, axis=0, keepdims=True)              # (1, BT)
    zsum = jnp.sum(jnp.exp(logits - lmax), axis=0, keepdims=True)
    onehot = cls == labels                                     # (CP, BT); labels broadcast
    picked = jnp.sum(jnp.where(onehot, logits, f32(0.0)), axis=0, keepdims=True)
    ce = jnp.log(zsum) + lmax - picked                         # (1, BT)

    loss_ref[...] = ce + f32(gmm_lambda) * softmse             # lane-dense (1, BT) store

    is_max = logits == lmax
    best = jnp.min(jnp.where(is_max, cls.astype(f32), f32(CP)),
                   axis=0, keepdims=True)                      # first argmax, exact small ints
    pred_ref[...] = best.astype(jnp.int32)                     # lane-dense (1, BT) store


def _round_up(x, m):
    return ((x + m - 1) // m) * m


def unified_loss_prototype(preds_re, preds_im, labels, prototypes_param,
                           temp_param, gmm_lambda=0.01, block_b=512):
    """Forward pass of UnifiedLoss(loss_type='prototype', distance_metric='L1').

    Returns (total_loss, preds_lbl) exactly like the PyTorch module.
    Handles arbitrary batch sizes via zero-padding + wrapper-side slicing.
    """
    B, F = preds_re.shape
    C = prototypes_param.shape[2]

    # --- tile-size selection (lane width never below 128; no forced split) ----
    bt = max(128, min(_round_up(int(block_b), 128), _round_up(B, 128)))
    B_pad = _round_up(B, bt)
    num_tiles = B_pad // bt

    if B_pad != B:
        pad = B_pad - B
        preds_re = jnp.pad(preds_re, ((0, pad), (0, 0)))
        preds_im = jnp.pad(preds_im, ((0, pad), (0, 0)))
        labels = jnp.pad(labels, ((0, pad),))

    # Layout plumbing only: batch on lanes, features on sublanes.
    prT = jnp.asarray(preds_re, jnp.float32).T                 # (F, B_pad)
    piT = jnp.asarray(preds_im, jnp.float32).T
    qrT = jnp.asarray(prototypes_param[0, 0], jnp.float32).T   # (F, C)
    qiT = jnp.asarray(prototypes_param[1, 0], jnp.float32).T
    labels_row = labels.astype(jnp.int32).reshape(1, B_pad)
    temp2d = jnp.asarray(temp_param, jnp.float32).reshape(1, 1)

    # TODO(synk): gmm_lambda is baked as a static constant (recompile on change).
    kernel = functools.partial(_unified_loss_kernel,
                               gmm_lambda=float(gmm_lambda),
                               num_classes=int(C))

    loss_row, pred_row = pl.pallas_call(
        kernel,
        out_shape=(jax.ShapeDtypeStruct((1, B_pad), jnp.float32),
                   jax.ShapeDtypeStruct((1, B_pad), jnp.int32)),
        grid_spec=pltpu.PrefetchScalarGridSpec(
            num_scalar_prefetch=0,
            grid=(num_tiles,),
            in_specs=[
                pl.BlockSpec(memory_space=pltpu.MemorySpace.SMEM),  # temp (1, 1)
                pl.BlockSpec((F, bt), lambda i: (0, i)),            # preds_re^T
                pl.BlockSpec((F, bt), lambda i: (0, i)),            # preds_im^T
                pl.BlockSpec((F, C), lambda i: (0, 0)),             # proto_re^T (resident)
                pl.BlockSpec((F, C), lambda i: (0, 0)),             # proto_im^T (resident)
                pl.BlockSpec((1, bt), lambda i: (0, i)),            # labels (lane-dense)
            ],
            out_specs=[
                pl.BlockSpec((1, bt), lambda i: (0, i)),            # per-sample loss
                pl.BlockSpec((1, bt), lambda i: (0, i)),            # argmax class
            ],
        ),
        compiler_params=pltpu.CompilerParams(
            dimension_semantics=("parallel",)),
    )(temp2d, prT, piT, qrT, qiT, labels_row)

    # total_loss = mean(CE) + lambda * mean(softMSE) = mean(per-sample totals)
    per_sample = loss_row[0, :B]
    total_loss = jnp.mean(per_sample)
    preds_lbl = pred_row[0, :B]
    return total_loss, preds_lbl


def _reference(preds_re, preds_im, labels, prototypes_param, temp_param, gmm_lambda):
    """Plain-JAX reference mirroring the PyTorch forward (prototype / L1)."""
    preds = preds_re + 1j * preds_im
    proto = prototypes_param[0, 0] + 1j * prototypes_param[1, 0]
    delta = jnp.abs(preds[:, None, :] - proto[None, :, :]) ** 2
    d2 = delta.sum(axis=2)
    r = jax.nn.softmax(-d2, axis=1)
    loss_softmse = (r * d2).sum(axis=1).mean()
    dists = jnp.abs(preds[:, None, :] - proto[None, :, :])
    logits = -temp_param * dists.mean(axis=2)
    logp = jax.nn.log_softmax(logits, axis=1)
    ce = -jnp.take_along_axis(logp, labels[:, None], axis=1).mean()
    total = ce + gmm_lambda * loss_softmse
    return total, jnp.argmax(logits, axis=1)


if __name__ == "__main__":
    # Module config: loss_type='prototype', num_classes=9, dist_features=128,
    # temperature=1.0, gmm_lambda=0.01, criterion=CrossEntropyLoss (default).
    B, C, F = 16, 9, 128
    gmm_lambda = 0.01

    key = jax.random.PRNGKey(0)
    k_pre, k_pim, k_proto, k_lab = jax.random.split(key, 4)

    prototypes_param = jax.random.normal(k_proto, (2, 1, C, F), dtype=jnp.float32)
    temp_param = jnp.float32(1.0)
    preds_re = jax.random.normal(k_pre, (B, F), dtype=jnp.float32)
    preds_im = jax.random.normal(k_pim, (B, F), dtype=jnp.float32)
    labels = jax.random.randint(k_lab, (B,), 0, C, dtype=jnp.int32)

    total_loss, preds_lbl = unified_loss_prototype(
        preds_re, preds_im, labels, prototypes_param, temp_param, gmm_lambda)
    jax.block_until_ready((total_loss, preds_lbl))

    ref_loss, ref_lbl = _reference(
        preds_re, preds_im, labels, prototypes_param, temp_param, gmm_lambda)
    assert jnp.allclose(total_loss, ref_loss, atol=1e-4, rtol=1e-4), (total_loss, ref_loss)
    assert jnp.array_equal(preds_lbl, ref_lbl), (preds_lbl, ref_lbl)

    # Ragged batch (not a multiple of the tile) exercises the pad/slice path.
    B2 = 13
    loss2, lbl2 = unified_loss_prototype(
        preds_re[:B2], preds_im[:B2], labels[:B2], prototypes_param, temp_param, gmm_lambda)
    jax.block_until_ready((loss2, lbl2))
    ref_loss2, ref_lbl2 = _reference(
        preds_re[:B2], preds_im[:B2], labels[:B2], prototypes_param, temp_param, gmm_lambda)
    assert jnp.allclose(loss2, ref_loss2, atol=1e-4, rtol=1e-4), (loss2, ref_loss2)
    assert jnp.array_equal(lbl2, ref_lbl2), (lbl2, ref_lbl2)

    # Larger batch exercises the multi-tile grid path (3 grid steps at bt=128).
    B3 = 260
    k3r, k3i, k3l = jax.random.split(jax.random.PRNGKey(1), 3)
    preds_re3 = jax.random.normal(k3r, (B3, F), dtype=jnp.float32)
    preds_im3 = jax.random.normal(k3i, (B3, F), dtype=jnp.float32)
    labels3 = jax.random.randint(k3l, (B3,), 0, C, dtype=jnp.int32)
    loss3, lbl3 = unified_loss_prototype(
        preds_re3, preds_im3, labels3, prototypes_param, temp_param, gmm_lambda,
        block_b=128)
    jax.block_until_ready((loss3, lbl3))
    ref_loss3, ref_lbl3 = _reference(
        preds_re3, preds_im3, labels3, prototypes_param, temp_param, gmm_lambda)
    assert jnp.allclose(loss3, ref_loss3, atol=1e-4, rtol=1e-4), (loss3, ref_loss3)
    assert jnp.array_equal(lbl3, ref_lbl3), (lbl3, ref_lbl3)

    # TODO(synk): 'label_encoding' and 'simple' loss_type branches and the
    # 'L2'/'orth' distance metrics are not built here; the squared-distance
    # variants should use an MXU dot (||z||^2 + ||p||^2 - 2*Re<z,p>).
    print("KERNEL_OK")
</pallas_src>

<mosaic_0001>
module attributes {stable_mosaic.version = 11 : i64} {
  func.func @_unified_loss_kernel(%arg0: i32, %arg1: memref<1x1xf32, #tpu.memory_space<smem>>, %arg2: memref<128x128xf32, #tpu.memory_space<vmem>>, %arg3: memref<128x128xf32, #tpu.memory_space<vmem>>, %arg4: memref<128x9xf32, #tpu.memory_space<vmem>>, %arg5: memref<128x9xf32, #tpu.memory_space<vmem>>, %arg6: memref<1x128xi32, #tpu.memory_space<vmem>>, %arg7: memref<1x128xf32, #tpu.memory_space<vmem>>, %arg8: memref<1x128xi32, #tpu.memory_space<vmem>>) attributes {dimension_semantics = [#tpu.dimension_semantics<parallel>], iteration_bounds = array<i64: 1>, scalar_prefetch = 0 : i64, scratch_operands = 0 : i64, tpu.core_type = #tpu.core_type<tc>, window_params = [{transform_indices = @transform_0, window_bounds = array<i64: 1, 1>}, {transform_indices = @transform_1, window_bounds = array<i64: 128, 128>}, {transform_indices = @transform_2, window_bounds = array<i64: 128, 128>}, {pipeline_mode = #tpu.pipeline_mode<synchronous>, transform_indices = @transform_3, window_bounds = array<i64: 128, 9>}, {pipeline_mode = #tpu.pipeline_mode<synchronous>, transform_indices = @transform_4, window_bounds = array<i64: 128, 9>}, {transform_indices = @transform_5, window_bounds = array<i64: 1, 128>}, {transform_indices = @transform_6, window_bounds = array<i64: 1, 128>}, {transform_indices = @transform_7, window_bounds = array<i64: 1, 128>}]} {
    %c0 = arith.constant 0 : index
    %c0_0 = arith.constant 0 : index
    %0 = vector.load %arg2[%c0, %c0_0] : memref<128x128xf32, #tpu.memory_space<vmem>>, vector<128x128xf32>
    %c0_1 = arith.constant 0 : index
    %c0_2 = arith.constant 0 : index
    %1 = vector.load %arg3[%c0_1, %c0_2] : memref<128x128xf32, #tpu.memory_space<vmem>>, vector<128x128xf32>
    %c0_3 = arith.constant 0 : index
    %c0_4 = arith.constant 0 : index
    %2 = vector.load %arg4[%c0_3, %c0_4] : memref<128x9xf32, #tpu.memory_space<vmem>>, vector<128x9xf32>
    %c0_5 = arith.constant 0 : index
    %c0_6 = arith.constant 0 : index
    %3 = vector.load %arg5[%c0_5, %c0_6] : memref<128x9xf32, #tpu.memory_space<vmem>>, vector<128x9xf32>
    %c0_7 = arith.constant 0 : index
    %c0_8 = arith.constant 0 : index
    %4 = vector.load %arg6[%c0_7, %c0_8] : memref<1x128xi32, #tpu.memory_space<vmem>>, vector<1x128xi32>
    %5 = tpu.iota {dimensions = array<i32: 0>} : vector<16x128xi32>
    %c9_i32 = arith.constant 9 : i32
    %6 = vector.broadcast %c9_i32 : i32 to vector<16x128xi32>
    %7 = arith.cmpi slt, %5, %6 : vector<16x128xi32>
    %cst = arith.constant 1.000000e+30 : f32
    %8 = vector.broadcast %cst : f32 to vector<16x128xf32>
    %cst_9 = arith.constant 0.000000e+00 : f32
    %9 = vector.broadcast %cst_9 : f32 to vector<16x128xf32>
    %10 = vector.extract_strided_slice %2 {offsets = [0, 0], sizes = [128, 1], strides = [1, 1]} : vector<128x9xf32> to vector<128x1xf32>
    %11 = vector.broadcast %10 : vector<128x1xf32> to vector<128x128xf32>
    %12 = arith.subf %0, %11 : vector<128x128xf32>
    %13 = vector.extract_strided_slice %3 {offsets = [0, 0], sizes = [128, 1], strides = [1, 1]} : vector<128x9xf32> to vector<128x1xf32>
    %14 = vector.broadcast %13 : vector<128x1xf32> to vector<128x128xf32>
    %15 = arith.subf %1, %14 : vector<128x128xf32>
    %16 = arith.mulf %12, %12 : vector<128x128xf32>
    %17 = arith.mulf %15, %15 : vector<128x128xf32>
    %18 = arith.addf %16, %17 : vector<128x128xf32>
    %19 = math.sqrt %18 : vector<128x128xf32>
    %c0_i32 = arith.constant 0 : i32
    %20 = vector.broadcast %c0_i32 : i32 to vector<16x128xi32>
    %21 = arith.cmpi eq, %5, %20 : vector<16x128xi32>
    %cst_10 = arith.constant dense<0.000000e+00> : vector<128xf32>
    %22 = vector.multi_reduction <add>, %18, %cst_10 [0] : vector<128x128xf32> to vector<128xf32>
    %23 = vector.shape_cast %22 : vector<128xf32> to vector<1x128xf32>
    %24 = vector.shape_cast %23 : vector<1x128xf32> to vector<1x128xf32>
    %25 = vector.broadcast %24 : vector<1x128xf32> to vector<16x128xf32>
    %26 = arith.select %21, %25, %8 : vector<16x128xi1>, vector<16x128xf32>
    %cst_11 = arith.constant dense<0.000000e+00> : vector<128xf32>
    %27 = vector.multi_reduction <add>, %19, %cst_11 [0] : vector<128x128xf32> to vector<128xf32>
    %28 = vector.shape_cast %27 : vector<128xf32> to vector<1x128xf32>
    %29 = vector.shape_cast %28 : vector<1x128xf32> to vector<1x128xf32>
    %30 = vector.broadcast %29 : vector<1x128xf32> to vector<16x128xf32>
    %31 = arith.select %21, %30, %9 : vector<16x128xi1>, vector<16x128xf32>
    %32 = vector.extract_strided_slice %2 {offsets = [0, 1], sizes = [128, 1], strides = [1, 1]} : vector<128x9xf32> to vector<128x1xf32>
    %33 = vector.broadcast %32 : vector<128x1xf32> to vector<128x128xf32>
    %34 = arith.subf %0, %33 : vector<128x128xf32>
    %35 = vector.extract_strided_slice %3 {offsets = [0, 1], sizes = [128, 1], strides = [1, 1]} : vector<128x9xf32> to vector<128x1xf32>
    %36 = vector.broadcast %35 : vector<128x1xf32> to vector<128x128xf32>
    %37 = arith.subf %1, %36 : vector<128x128xf32>
    %38 = arith.mulf %34, %34 : vector<128x128xf32>
    %39 = arith.mulf %37, %37 : vector<128x128xf32>
    %40 = arith.addf %38, %39 : vector<128x128xf32>
    %41 = math.sqrt %40 : vector<128x128xf32>
    %c1_i32 = arith.constant 1 : i32
    %42 = vector.broadcast %c1_i32 : i32 to vector<16x128xi32>
    %43 = arith.cmpi eq, %5, %42 : vector<16x128xi32>
    %cst_12 = arith.constant dense<0.000000e+00> : vector<128xf32>
    %44 = vector.multi_reduction <add>, %40, %cst_12 [0] : vector<128x128xf32> to vector<128xf32>
    %45 = vector.shape_cast %44 : vector<128xf32> to vector<1x128xf32>
    %46 = vector.shape_cast %45 : vector<1x128xf32> to vector<1x128xf32>
    %47 = vector.broadcast %46 : vector<1x128xf32> to vector<16x128xf32>
    %48 = arith.select %43, %47, %26 : vector<16x128xi1>, vector<16x128xf32>
    %cst_13 = arith.constant dense<0.000000e+00> : vector<128xf32>
    %49 = vector.multi_reduction <add>, %41, %cst_13 [0] : vector<128x128xf32> to vector<128xf32>
    %50 = vector.shape_cast %49 : vector<128xf32> to vector<1x128xf32>
    %51 = vector.shape_cast %50 : vector<1x128xf32> to vector<1x128xf32>
    %52 = vector.broadcast %51 : vector<1x128xf32> to vector<16x128xf32>
    %53 = arith.select %43, %52, %31 : vector<16x128xi1>, vector<16x128xf32>
    %54 = vector.extract_strided_slice %2 {offsets = [0, 2], sizes = [128, 1], strides = [1, 1]} : vector<128x9xf32> to vector<128x1xf32>
    %55 = vector.broadcast %54 : vector<128x1xf32> to vector<128x128xf32>
    %56 = arith.subf %0, %55 : vector<128x128xf32>
    %57 = vector.extract_strided_slice %3 {offsets = [0, 2], sizes = [128, 1], strides = [1, 1]} : vector<128x9xf32> to vector<128x1xf32>
    %58 = vector.broadcast %57 : vector<128x1xf32> to vector<128x128xf32>
    %59 = arith.subf %1, %58 : vector<128x128xf32>
    %60 = arith.mulf %56, %56 : vector<128x128xf32>
    %61 = arith.mulf %59, %59 : vector<128x128xf32>
    %62 = arith.addf %60, %61 : vector<128x128xf32>
    %63 = math.sqrt %62 : vector<128x128xf32>
    %c2_i32 = arith.constant 2 : i32
    %64 = vector.broadcast %c2_i32 : i32 to vector<16x128xi32>
    %65 = arith.cmpi eq, %5, %64 : vector<16x128xi32>
    %cst_14 = arith.constant dense<0.000000e+00> : vector<128xf32>
    %66 = vector.multi_reduction <add>, %62, %cst_14 [0] : vector<128x128xf32> to vector<128xf32>
    %67 = vector.shape_cast %66 : vector<128xf32> to vector<1x128xf32>
    %68 = vector.shape_cast %67 : vector<1x128xf32> to vector<1x128xf32>
    %69 = vector.broadcast %68 : vector<1x128xf32> to vector<16x128xf32>
    %70 = arith.select %65, %69, %48 : vector<16x128xi1>, vector<16x128xf32>
    %cst_15 = arith.constant dense<0.000000e+00> : vector<128xf32>
    %71 = vector.multi_reduction <add>, %63, %cst_15 [0] : vector<128x128xf32> to vector<128xf32>
    %72 = vector.shape_cast %71 : vector<128xf32> to vector<1x128xf32>
    %73 = vector.shape_cast %72 : vector<1x128xf32> to vector<1x128xf32>
    %74 = vector.broadcast %73 : vector<1x128xf32> to vector<16x128xf32>
    %75 = arith.select %65, %74, %53 : vector<16x128xi1>, vector<16x128xf32>
    %76 = vector.extract_strided_slice %2 {offsets = [0, 3], sizes = [128, 1], strides = [1, 1]} : vector<128x9xf32> to vector<128x1xf32>
    %77 = vector.broadcast %76 : vector<128x1xf32> to vector<128x128xf32>
    %78 = arith.subf %0, %77 : vector<128x128xf32>
    %79 = vector.extract_strided_slice %3 {offsets = [0, 3], sizes = [128, 1], strides = [1, 1]} : vector<128x9xf32> to vector<128x1xf32>
    %80 = vector.broadcast %79 : vector<128x1xf32> to vector<128x128xf32>
    %81 = arith.subf %1, %80 : vector<128x128xf32>
    %82 = arith.mulf %78, %78 : vector<128x128xf32>
    %83 = arith.mulf %81, %81 : vector<128x128xf32>
    %84 = arith.addf %82, %83 : vector<128x128xf32>
    %85 = math.sqrt %84 : vector<128x128xf32>
    %c3_i32 = arith.constant 3 : i32
    %86 = vector.broadcast %c3_i32 : i32 to vector<16x128xi32>
    %87 = arith.cmpi eq, %5, %86 : vector<16x128xi32>
    %cst_16 = arith.constant dense<0.000000e+00> : vector<128xf32>
    %88 = vector.multi_reduction <add>, %84, %cst_16 [0] : vector<128x128xf32> to vector<128xf32>
    %89 = vector.shape_cast %88 : vector<128xf32> to vector<1x128xf32>
    %90 = vector.shape_cast %89 : vector<1x128xf32> to vector<1x128xf32>
    %91 = vector.broadcast %90 : vector<1x128xf32> to vector<16x128xf32>
    %92 = arith.select %87, %91, %70 : vector<16x128xi1>, vector<16x128xf32>
    %cst_17 = arith.constant dense<0.000000e+00> : vector<128xf32>
    %93 = vector.multi_reduction <add>, %85, %cst_17 [0] : vector<128x128xf32> to vector<128xf32>
    %94 = vector.shape_cast %93 : vector<128xf32> to vector<1x128xf32>
    %95 = vector.shape_cast %94 : vector<1x128xf32> to vector<1x128xf32>
    %96 = vector.broadcast %95 : vector<1x128xf32> to vector<16x128xf32>
    %97 = arith.select %87, %96, %75 : vector<16x128xi1>, vector<16x128xf32>
    %98 = vector.extract_strided_slice %2 {offsets = [0, 4], sizes = [128, 1], strides = [1, 1]} : vector<128x9xf32> to vector<128x1xf32>
    %99 = vector.broadcast %98 : vector<128x1xf32> to vector<128x128xf32>
    %100 = arith.subf %0, %99 : vector<128x128xf32>
    %101 = vector.extract_strided_slice %3 {offsets = [0, 4], sizes = [128, 1], strides = [1, 1]} : vector<128x9xf32> to vector<128x1xf32>
    %102 = vector.broadcast %101 : vector<128x1xf32> to vector<128x128xf32>
    %103 = arith.subf %1, %102 : vector<128x128xf32>
    %104 = arith.mulf %100, %100 : vector<128x128xf32>
    %105 = arith.mulf %103, %103 : vector<128x128xf32>
    %106 = arith.addf %104, %105 : vector<128x128xf32>
    %107 = math.sqrt %106 : vector<128x128xf32>
    %c4_i32 = arith.constant 4 : i32
    %108 = vector.broadcast %c4_i32 : i32 to vector<16x128xi32>
    %109 = arith.cmpi eq, %5, %108 : vector<16x128xi32>
    %cst_18 = arith.constant dense<0.000000e+00> : vector<128xf32>
    %110 = vector.multi_reduction <add>, %106, %cst_18 [0] : vector<128x128xf32> to vector<128xf32>
    %111 = vector.shape_cast %110 : vector<128xf32> to vector<1x128xf32>
    %112 = vector.shape_cast %111 : vector<1x128xf32> to vector<1x128xf32>
    %113 = vector.broadcast %112 : vector<1x128xf32> to vector<16x128xf32>
    %114 = arith.select %109, %113, %92 : vector<16x128xi1>, vector<16x128xf32>
    %cst_19 = arith.constant dense<0.000000e+00> : vector<128xf32>
    %115 = vector.multi_reduction <add>, %107, %cst_19 [0] : vector<128x128xf32> to vector<128xf32>
    %116 = vector.shape_cast %115 : vector<128xf32> to vector<1x128xf32>
    %117 = vector.shape_cast %116 : vector<1x128xf32> to vector<1x128xf32>
    %118 = vector.broadcast %117 : vector<1x128xf32> to vector<16x128xf32>
    %119 = arith.select %109, %118, %97 : vector<16x128xi1>, vector<16x128xf32>
    %120 = vector.extract_strided_slice %2 {offsets = [0, 5], sizes = [128, 1], strides = [1, 1]} : vector<128x9xf32> to vector<128x1xf32>
    %121 = vector.broadcast %120 : vector<128x1xf32> to vector<128x128xf32>
    %122 = arith.subf %0, %121 : vector<128x128xf32>
    %123 = vector.extract_strided_slice %3 {offsets = [0, 5], sizes = [128, 1], strides = [1, 1]} : vector<128x9xf32> to vector<128x1xf32>
    %124 = vector.broadcast %123 : vector<128x1xf32> to vector<128x128xf32>
    %125 = arith.subf %1, %124 : vector<128x128xf32>
    %126 = arith.mulf %122, %122 : vector<128x128xf32>
    %127 = arith.mulf %125, %125 : vector<128x128xf32>
    %128 = arith.addf %126, %127 : vector<128x128xf32>
    %129 = math.sqrt %128 : vector<128x128xf32>
    %c5_i32 = arith.constant 5 : i32
    %130 = vector.broadcast %c5_i32 : i32 to vector<16x128xi32>
    %131 = arith.cmpi eq, %5, %130 : vector<16x128xi32>
    %cst_20 = arith.constant dense<0.000000e+00> : vector<128xf32>
    %132 = vector.multi_reduction <add>, %128, %cst_20 [0] : vector<128x128xf32> to vector<128xf32>
    %133 = vector.shape_cast %132 : vector<128xf32> to vector<1x128xf32>
    %134 = vector.shape_cast %133 : vector<1x128xf32> to vector<1x128xf32>
    %135 = vector.broadcast %134 : vector<1x128xf32> to vector<16x128xf32>
    %136 = arith.select %131, %135, %114 : vector<16x128xi1>, vector<16x128xf32>
    %cst_21 = arith.constant dense<0.000000e+00> : vector<128xf32>
    %137 = vector.multi_reduction <add>, %129, %cst_21 [0] : vector<128x128xf32> to vector<128xf32>
    %138 = vector.shape_cast %137 : vector<128xf32> to vector<1x128xf32>
    %139 = vector.shape_cast %138 : vector<1x128xf32> to vector<1x128xf32>
    %140 = vector.broadcast %139 : vector<1x128xf32> to vector<16x128xf32>
    %141 = arith.select %131, %140, %119 : vector<16x128xi1>, vector<16x128xf32>
    %142 = vector.extract_strided_slice %2 {offsets = [0, 6], sizes = [128, 1], strides = [1, 1]} : vector<128x9xf32> to vector<128x1xf32>
    %143 = vector.broadcast %142 : vector<128x1xf32> to vector<128x128xf32>
    %144 = arith.subf %0, %143 : vector<128x128xf32>
    %145 = vector.extract_strided_slice %3 {offsets = [0, 6], sizes = [128, 1], strides = [1, 1]} : vector<128x9xf32> to vector<128x1xf32>
    %146 = vector.broadcast %145 : vector<128x1xf32> to vector<128x128xf32>
    %147 = arith.subf %1, %146 : vector<128x128xf32>
    %148 = arith.mulf %144, %144 : vector<128x128xf32>
    %149 = arith.mulf %147, %147 : vector<128x128xf32>
    %150 = arith.addf %148, %149 : vector<128x128xf32>
    %151 = math.sqrt %150 : vector<128x128xf32>
    %c6_i32 = arith.constant 6 : i32
    %152 = vector.broadcast %c6_i32 : i32 to vector<16x128xi32>
    %153 = arith.cmpi eq, %5, %152 : vector<16x128xi32>
    %cst_22 = arith.constant dense<0.000000e+00> : vector<128xf32>
    %154 = vector.multi_reduction <add>, %150, %cst_22 [0] : vector<128x128xf32> to vector<128xf32>
    %155 = vector.shape_cast %154 : vector<128xf32> to vector<1x128xf32>
    %156 = vector.shape_cast %155 : vector<1x128xf32> to vector<1x128xf32>
    %157 = vector.broadcast %156 : vector<1x128xf32> to vector<16x128xf32>
    %158 = arith.select %153, %157, %136 : vector<16x128xi1>, vector<16x128xf32>
    %cst_23 = arith.constant dense<0.000000e+00> : vector<128xf32>
    %159 = vector.multi_reduction <add>, %151, %cst_23 [0] : vector<128x128xf32> to vector<128xf32>
    %160 = vector.shape_cast %159 : vector<128xf32> to vector<1x128xf32>
    %161 = vector.shape_cast %160 : vector<1x128xf32> to vector<1x128xf32>
    %162 = vector.broadcast %161 : vector<1x128xf32> to vector<16x128xf32>
    %163 = arith.select %153, %162, %141 : vector<16x128xi1>, vector<16x128xf32>
    %164 = vector.extract_strided_slice %2 {offsets = [0, 7], sizes = [128, 1], strides = [1, 1]} : vector<128x9xf32> to vector<128x1xf32>
    %165 = vector.broadcast %164 : vector<128x1xf32> to vector<128x128xf32>
    %166 = arith.subf %0, %165 : vector<128x128xf32>
    %167 = vector.extract_strided_slice %3 {offsets = [0, 7], sizes = [128, 1], strides = [1, 1]} : vector<128x9xf32> to vector<128x1xf32>
    %168 = vector.broadcast %167 : vector<128x1xf32> to vector<128x128xf32>
    %169 = arith.subf %1, %168 : vector<128x128xf32>
    %170 = arith.mulf %166, %166 : vector<128x128xf32>
    %171 = arith.mulf %169, %169 : vector<128x128xf32>
    %172 = arith.addf %170, %171 : vector<128x128xf32>
    %173 = math.sqrt %172 : vector<128x128xf32>
    %c7_i32 = arith.constant 7 : i32
    %174 = vector.broadcast %c7_i32 : i32 to vector<16x128xi32>
    %175 = arith.cmpi eq, %5, %174 : vector<16x128xi32>
    %cst_24 = arith.constant dense<0.000000e+00> : vector<128xf32>
    %176 = vector.multi_reduction <add>, %172, %cst_24 [0] : vector<128x128xf32> to vector<128xf32>
    %177 = vector.shape_cast %176 : vector<128xf32> to vector<1x128xf32>
    %178 = vector.shape_cast %177 : vector<1x128xf32> to vector<1x128xf32>
    %179 = vector.broadcast %178 : vector<1x128xf32> to vector<16x128xf32>
    %180 = arith.select %175, %179, %158 : vector<16x128xi1>, vector<16x128xf32>
    %cst_25 = arith.constant dense<0.000000e+00> : vector<128xf32>
    %181 = vector.multi_reduction <add>, %173, %cst_25 [0] : vector<128x128xf32> to vector<128xf32>
    %182 = vector.shape_cast %181 : vector<128xf32> to vector<1x128xf32>
    %183 = vector.shape_cast %182 : vector<1x128xf32> to vector<1x128xf32>
    %184 = vector.broadcast %183 : vector<1x128xf32> to vector<16x128xf32>
    %185 = arith.select %175, %184, %163 : vector<16x128xi1>, vector<16x128xf32>
    %186 = vector.extract_strided_slice %2 {offsets = [0, 8], sizes = [128, 1], strides = [1, 1]} : vector<128x9xf32> to vector<128x1xf32>
    %187 = vector.broadcast %186 : vector<128x1xf32> to vector<128x128xf32>
    %188 = arith.subf %0, %187 : vector<128x128xf32>
    %189 = vector.extract_strided_slice %3 {offsets = [0, 8], sizes = [128, 1], strides = [1, 1]} : vector<128x9xf32> to vector<128x1xf32>
    %190 = vector.broadcast %189 : vector<128x1xf32> to vector<128x128xf32>
    %191 = arith.subf %1, %190 : vector<128x128xf32>
    %192 = arith.mulf %188, %188 : vector<128x128xf32>
    %193 = arith.mulf %191, %191 : vector<128x128xf32>
    %194 = arith.addf %192, %193 : vector<128x128xf32>
    %195 = math.sqrt %194 : vector<128x128xf32>
    %c8_i32 = arith.constant 8 : i32
    %196 = vector.broadcast %c8_i32 : i32 to vector<16x128xi32>
    %197 = arith.cmpi eq, %5, %196 : vector<16x128xi32>
    %cst_26 = arith.constant dense<0.000000e+00> : vector<128xf32>
    %198 = vector.multi_reduction <add>, %194, %cst_26 [0] : vector<128x128xf32> to vector<128xf32>
    %199 = vector.shape_cast %198 : vector<128xf32> to vector<1x128xf32>
    %200 = vector.shape_cast %199 : vector<1x128xf32> to vector<1x128xf32>
    %201 = vector.broadcast %200 : vector<1x128xf32> to vector<16x128xf32>
    %202 = arith.select %197, %201, %180 : vector<16x128xi1>, vector<16x128xf32>
    %cst_27 = arith.constant dense<0.000000e+00> : vector<128xf32>
    %203 = vector.multi_reduction <add>, %195, %cst_27 [0] : vector<128x128xf32> to vector<128xf32>
    %204 = vector.shape_cast %203 : vector<128xf32> to vector<1x128xf32>
    %205 = vector.shape_cast %204 : vector<1x128xf32> to vector<1x128xf32>
    %206 = vector.broadcast %205 : vector<1x128xf32> to vector<16x128xf32>
    %207 = arith.select %197, %206, %185 : vector<16x128xi1>, vector<16x128xf32>
    %cst_28 = arith.constant dense<0x7F800000> : vector<128xf32>
    %208 = vector.multi_reduction <minimumf>, %202, %cst_28 [0] : vector<16x128xf32> to vector<128xf32>
    %209 = vector.shape_cast %208 : vector<128xf32> to vector<1x128xf32>
    %210 = vector.broadcast %209 : vector<1x128xf32> to vector<16x128xf32>
    %211 = arith.subf %210, %202 : vector<16x128xf32>
    %212 = math.exp %211 : vector<16x128xf32>
    %cst_29 = arith.constant dense<0.000000e+00> : vector<128xf32>
    %213 = vector.multi_reduction <add>, %212, %cst_29 [0] : vector<16x128xf32> to vector<128xf32>
    %214 = vector.shape_cast %213 : vector<128xf32> to vector<1x128xf32>
    %215 = arith.mulf %212, %202 : vector<16x128xf32>
    %cst_30 = arith.constant dense<0.000000e+00> : vector<128xf32>
    %216 = vector.multi_reduction <add>, %215, %cst_30 [0] : vector<16x128xf32> to vector<128xf32>
    %217 = vector.shape_cast %216 : vector<128xf32> to vector<1x128xf32>
    %218 = arith.divf %217, %214 : vector<1x128xf32>
    %c0_31 = arith.constant 0 : index
    %c0_32 = arith.constant 0 : index
    %219 = memref.load %arg1[%c0_31, %c0_32] : memref<1x1xf32, #tpu.memory_space<smem>>
    %cst_33 = arith.constant -7.812500e-03 : f32
    %220 = arith.mulf %219, %cst_33 : f32
    %221 = vector.broadcast %220 : f32 to vector<16x128xf32>
    %222 = arith.mulf %221, %207 : vector<16x128xf32>
    %cst_34 = arith.constant 0.000000e+00 : f32
    %cst_35 = arith.constant 1.000000e+30 : f32
    %223 = arith.subf %cst_34, %cst_35 : f32
    %224 = vector.broadcast %223 : f32 to vector<16x128xf32>
    %225 = arith.select %7, %222, %224 : vector<16x128xi1>, vector<16x128xf32>
    %cst_36 = arith.constant dense<0xFF800000> : vector<128xf32>
    %226 = vector.multi_reduction <maximumf>, %225, %cst_36 [0] : vector<16x128xf32> to vector<128xf32>
    %227 = vector.shape_cast %226 : vector<128xf32> to vector<1x128xf32>
    %228 = vector.broadcast %227 : vector<1x128xf32> to vector<16x128xf32>
    %229 = arith.subf %225, %228 : vector<16x128xf32>
    %230 = math.exp %229 : vector<16x128xf32>
    %cst_37 = arith.constant dense<0.000000e+00> : vector<128xf32>
    %231 = vector.multi_reduction <add>, %230, %cst_37 [0] : vector<16x128xf32> to vector<128xf32>
    %232 = vector.shape_cast %231 : vector<128xf32> to vector<1x128xf32>
    %233 = vector.broadcast %4 : vector<1x128xi32> to vector<16x128xi32>
    %234 = arith.cmpi eq, %5, %233 : vector<16x128xi32>
    %cst_38 = arith.constant 0.000000e+00 : f32
    %235 = vector.broadcast %cst_38 : f32 to vector<16x128xf32>
    %236 = arith.select %234, %225, %235 : vector<16x128xi1>, vector<16x128xf32>
    %cst_39 = arith.constant dense<0.000000e+00> : vector<128xf32>
    %237 = vector.multi_reduction <add>, %236, %cst_39 [0] : vector<16x128xf32> to vector<128xf32>
    %238 = vector.shape_cast %237 : vector<128xf32> to vector<1x128xf32>
    %239 = math.log %232 : vector<1x128xf32>
    %240 = arith.addf %239, %227 : vector<1x128xf32>
    %241 = arith.subf %240, %238 : vector<1x128xf32>
    %cst_40 = arith.constant 0.00999999977 : f32
    %242 = vector.broadcast %cst_40 : f32 to vector<1x128xf32>
    %243 = arith.mulf %242, %218 : vector<1x128xf32>
    %244 = arith.addf %241, %243 : vector<1x128xf32>
    %c0_41 = arith.constant 0 : index
    %c0_42 = arith.constant 0 : index
    %245 = vector.load %arg7[%c0_41, %c0_42] : memref<1x128xf32, #tpu.memory_space<vmem>>, vector<1x128xf32>
    tpu.vector_store %arg7[%c0_41, %c0_42], %244 {strides = array<i32>} : memref<1x128xf32, #tpu.memory_space<vmem>>, vector<1x128xf32>,
    %246 = vector.broadcast %227 : vector<1x128xf32> to vector<16x128xf32>
    %247 = arith.cmpf oeq, %225, %246 : vector<16x128xf32>
    %248 = arith.sitofp %5 : vector<16x128xi32> to vector<16x128xf32>
    %cst_43 = arith.constant 1.600000e+01 : f32
    %249 = vector.broadcast %cst_43 : f32 to vector<16x128xf32>
    %250 = arith.select %247, %248, %249 : vector<16x128xi1>, vector<16x128xf32>
    %cst_44 = arith.constant dense<0x7F800000> : vector<128xf32>
    %251 = vector.multi_reduction <minimumf>, %250, %cst_44 [0] : vector<16x128xf32> to vector<128xf32>
    %252 = vector.shape_cast %251 : vector<128xf32> to vector<1x128xf32>
    %253 = arith.fptosi %252 : vector<1x128xf32> to vector<1x128xi32>
    %c0_45 = arith.constant 0 : index
    %c0_46 = arith.constant 0 : index
    %254 = vector.load %arg8[%c0_45, %c0_46] : memref<1x128xi32, #tpu.memory_space<vmem>>, vector<1x128xi32>
    tpu.vector_store %arg8[%c0_45, %c0_46], %253 {strides = array<i32>} : memref<1x128xi32, #tpu.memory_space<vmem>>, vector<1x128xi32>,
    return
  }
  func.func @transform_0(%arg0: i32) -> (i32, i32) {
    %c0_i32 = arith.constant 0 : i32
    %c0_i32_0 = arith.constant 0 : i32
    %c0_i32_1 = arith.constant 0 : i32
    return %c0_i32, %c0_i32_0 : i32, i32
  }
  func.func @transform_1(%arg0: i32) -> (i32, i32) {
    %c0_i32 = arith.constant 0 : i32
    %c0_i32_0 = arith.constant 0 : i32
    return %c0_i32, %arg0 : i32, i32
  }
  func.func @transform_2(%arg0: i32) -> (i32, i32) {
    %c0_i32 = arith.constant 0 : i32
    %c0_i32_0 = arith.constant 0 : i32
    return %c0_i32, %arg0 : i32, i32
  }
  func.func @transform_3(%arg0: i32) -> (i32, i32) {
    %c0_i32 = arith.constant 0 : i32
    %c0_i32_0 = arith.constant 0 : i32
    %c0_i32_1 = arith.constant 0 : i32
    return %c0_i32, %c0_i32_0 : i32, i32
  }
  func.func @transform_4(%arg0: i32) -> (i32, i32) {
    %c0_i32 = arith.constant 0 : i32
    %c0_i32_0 = arith.constant 0 : i32
    %c0_i32_1 = arith.constant 0 : i32
    return %c0_i32, %c0_i32_0 : i32, i32
  }
  func.func @transform_5(%arg0: i32) -> (i32, i32) {
    %c0_i32 = arith.constant 0 : i32
    %c0_i32_0 = arith.constant 0 : i32
    return %c0_i32, %arg0 : i32, i32
  }
  func.func @transform_6(%arg0: i32) -> (i32, i32) {
    %c0_i32 = arith.constant 0 : i32
    %c0_i32_0 = arith.constant 0 : i32
    return %c0_i32, %arg0 : i32, i32
  }
  func.func @transform_7(%arg0: i32) -> (i32, i32) {
    %c0_i32 = arith.constant 0 : i32
    %c0_i32_0 = arith.constant 0 : i32
    return %c0_i32, %arg0 : i32, i32
  }
}

</mosaic_0001>

<llo_original>
// kernel: tpu_custom_call.1
$region0: #{tpu_custom_call.1}
  #allocation0 [shape = 'u32[]', space=smem, size = 0x4, offset = 0x4, fixed_abs, tag = 'smem constant byte address 0x4 - core index']
  #allocation1 [shape = 'u32[144,128]{1,0:T(1,128)}', space=vmem, size = 0x12000, scoped, tag = 'internal scratch']
  #allocation2 [shape = 'f32[1,1]{1,0:T(1,128)S(6)}', space=smem, size = 0x200, scoped, tag = 'scoped memory for tpu_custom_call.1']
  %s0 = inlined_call_operand.<no memory space> [shape: f32[1,1], index: 0, kind: input, shape index: {}]
  %s1 = inlined_call_operand.vmem [shape: f32[128,128], index: 1, kind: input, shape index: {}]
  %s2 = inlined_call_operand.vmem [shape: f32[128,128], index: 2, kind: input, shape index: {}]
  %s3 = inlined_call_operand.vmem [shape: f32[128,9], index: 3, kind: input, shape index: {}]
  %s4 = inlined_call_operand.vmem [shape: f32[128,9], index: 4, kind: input, shape index: {}]
  %s5 = inlined_call_operand.vmem [shape: s32[1,128], index: 5, kind: input, shape index: {}]
  %s6 = inlined_call_operand.hbm [shape: f32[1,128], index: 6, kind: output, shape index: {0}]
  %s7 = inlined_call_operand.hbm [shape: s32[1,128], index: 7, kind: output, shape index: {1}]
  %8 = xla_tuple %s6, %s7
  %s9 = sld [smem:[#allocation0]]
  $region42: #{tpu_custom_call.1} parent=0
    _
  %s11 = ssub.s32 1, %s9
  %s12 = scalar_select 0, %s11, %s9
  %13 = sst [smem:[#allocation2]] %s0
  $region1: #{tpu_custom_call.1} parent=0
    #allocation3 [shape = 'u8[512]{0}', space=vmem, size = 0x400, scoped, tag = 'output window, operand 0, single buffered']
    #allocation4 [shape = 's32[1]{0}', space=sflag, size = 0x4, scoped, tag = 'scoped memory for tpu_custom_call.1']
    #allocation5 [shape = 'u8[512]{0}', space=vmem, size = 0x400, scoped, tag = 'output window, operand 1, single buffered']
    #allocation6 [shape = 's32[1]{0}', space=sflag, size = 0x4, scoped, tag = 'scoped memory for tpu_custom_call.1']
    %14 = vsyncpa [#allocation4], 0
    %15 = vsyncpa [#allocation6], 0
    // Predicated region
    $region2: #{tpu_custom_call.1} parent=1 // pred_check
      _
    $region3: #{tpu_custom_call.1} parent=1 // pred_check_branch
      %17 = sbr.rel (0) target = $region5
    $region4: #{tpu_custom_call.1} parent=1 // pred_region
      _
    $region5: #{tpu_custom_call.1} parent=1 // pred_fallthru
      _
    // Predicated region
    $region6: #{tpu_custom_call.1} parent=1 // pred_check
      _
    $region7: #{tpu_custom_call.1} parent=1 // pred_check_branch
      %19 = sbr.rel (0) target = $region9
    $region8: #{tpu_custom_call.1} parent=1 // pred_region
      _
    $region9: #{tpu_custom_call.1} parent=1 // pred_fallthru
      _
    // Predicated region
    $region10: #{tpu_custom_call.1} parent=1 // pred_check
      _
    $region11: #{tpu_custom_call.1} parent=1 // pred_check_branch
      %21 = sbr.rel (0) target = $region13
    $region12: #{tpu_custom_call.1} parent=1 // pred_region
      _
    $region13: #{tpu_custom_call.1} parent=1 // pred_fallthru
      _
    // Predicated region
    $region14: #{tpu_custom_call.1} parent=1 // pred_check
      _
    $region15: #{tpu_custom_call.1} parent=1 // pred_check_branch
      %23 = sbr.rel (0) target = $region17
    $region16: #{tpu_custom_call.1} parent=1 // pred_region
      _
    $region17: #{tpu_custom_call.1} parent=1 // pred_fallthru
      _
    // Predicated region
    $region18: #{tpu_custom_call.1} parent=1 // pred_check
      _
    $region19: #{tpu_custom_call.1} parent=1 // pred_check_branch
      %25 = sbr.rel (0) target = $region21
    $region20: #{tpu_custom_call.1} parent=1 // pred_region
      _
    $region21: #{tpu_custom_call.1} parent=1 // pred_fallthru
      _
    // Predicated region
    $region22: #{tpu_custom_call.1} parent=1 // pred_check
      _
    $region23: #{tpu_custom_call.1} parent=1 // pred_check_branch
      %27 = sbr.rel (0) target = $region25
    $region24: #{tpu_custom_call.1} parent=1 // pred_region
      _
    $region25: #{tpu_custom_call.1} parent=1 // pred_fallthru
      _
    %v28 = vld [vmem:[%s1] sm:$0xff]
    %v29 = vld [vmem:[%s1 + $0x8] sm:$0xff]
    %v30 = vld [vmem:[%s1 + $0x10] sm:$0xff]
    %v31 = vld [vmem:[%s1 + $0x18] sm:$0xff]
    %v32 = vld [vmem:[%s1 + $0x20] sm:$0xff]
    %v33 = vld [vmem:[%s1 + $0x28] sm:$0xff]
    %v34 = vld [vmem:[%s1 + $0x30] sm:$0xff]
    %v35 = vld [vmem:[%s1 + $0x38] sm:$0xff]
    %v36 = vld [vmem:[%s1 + $0x40] sm:$0xff]
    %v37 = vld [vmem:[%s1 + $0x48] sm:$0xff]
    %v38 = vld [vmem:[%s1 + $0x50] sm:$0xff]
    %v39 = vld [vmem:[%s1 + $0x58] sm:$0xff]
    %v40 = vld [vmem:[%s1 + $0x60] sm:$0xff]
    %v41 = vld [vmem:[%s1 + $0x68] sm:$0xff]
    %v42 = vld [vmem:[%s1 + $0x70] sm:$0xff]
    %v43 = vld [vmem:[%s1 + $0x78] sm:$0xff]
    %v44 = vld [vmem:[%s2] sm:$0xff]
    %v45 = vld [vmem:[%s2 + $0x8] sm:$0xff]
    %v46 = vld [vmem:[%s2 + $0x10] sm:$0xff]
    %v47 = vld [vmem:[%s2 + $0x18] sm:$0xff]
    %v48 = vld [vmem:[%s2 + $0x20] sm:$0xff]
    %v49 = vld [vmem:[%s2 + $0x28] sm:$0xff]
    %v50 = vld [vmem:[%s2 + $0x30] sm:$0xff]
    %v51 = vld [vmem:[%s2 + $0x38] sm:$0xff]
    %v52 = vld [vmem:[%s2 + $0x40] sm:$0xff]
    %v53 = vld [vmem:[%s2 + $0x48] sm:$0xff]
    %v54 = vld [vmem:[%s2 + $0x50] sm:$0xff]
    %v55 = vld [vmem:[%s2 + $0x58] sm:$0xff]
    %v56 = vld [vmem:[%s2 + $0x60] sm:$0xff]
    %v57 = vld [vmem:[%s2 + $0x68] sm:$0xff]
    %v58 = vld [vmem:[%s2 + $0x70] sm:$0xff]
    %v59 = vld [vmem:[%s2 + $0x78] sm:$0xff]
    %v60 = vld [vmem:[%s3] sm:$0xff]
    %v61 = vld [vmem:[%s3 + $0x8] sm:$0xff]
    %v62 = vld [vmem:[%s3 + $0x10] sm:$0xff]
    %v63 = vld [vmem:[%s3 + $0x18] sm:$0xff]
    %v64 = vld [vmem:[%s3 + $0x20] sm:$0xff]
    %v65 = vld [vmem:[%s3 + $0x28] sm:$0xff]
    %v66 = vld [vmem:[%s3 + $0x30] sm:$0xff]
    %v67 = vld [vmem:[%s3 + $0x38] sm:$0xff]
    %v68 = vld [vmem:[%s3 + $0x40] sm:$0xff]
    %v69 = vld [vmem:[%s3 + $0x48] sm:$0xff]
    %v70 = vld [vmem:[%s3 + $0x50] sm:$0xff]
    %v71 = vld [vmem:[%s3 + $0x58] sm:$0xff]
    %v72 = vld [vmem:[%s3 + $0x60] sm:$0xff]
    %v73 = vld [vmem:[%s3 + $0x68] sm:$0xff]
    %v74 = vld [vmem:[%s3 + $0x70] sm:$0xff]
    %v75 = vld [vmem:[%s3 + $0x78] sm:$0xff]
    %v76 = vld [vmem:[%s4] sm:$0xff]
    %v77 = vld [vmem:[%s4 + $0x8] sm:$0xff]
    %v78 = vld [vmem:[%s4 + $0x10] sm:$0xff]
    %v79 = vld [vmem:[%s4 + $0x18] sm:$0xff]
    %v80 = vld [vmem:[%s4 + $0x20] sm:$0xff]
    %v81 = vld [vmem:[%s4 + $0x28] sm:$0xff]
    %v82 = vld [vmem:[%s4 + $0x30] sm:$0xff]
    %v83 = vld [vmem:[%s4 + $0x38] sm:$0xff]
    %v84 = vld [vmem:[%s4 + $0x40] sm:$0xff]
    %v85 = vld [vmem:[%s4 + $0x48] sm:$0xff]
    %v86 = vld [vmem:[%s4 + $0x50] sm:$0xff]
    %v87 = vld [vmem:[%s4 + $0x58] sm:$0xff]
    %v88 = vld [vmem:[%s4 + $0x60] sm:$0xff]
    %v89 = vld [vmem:[%s4 + $0x68] sm:$0xff]
    %v90 = vld [vmem:[%s4 + $0x70] sm:$0xff]
    %v91 = vld [vmem:[%s4 + $0x78] sm:$0xff]
    %v92 = vld [vmem:[%s5] sm:$0x1]
    %v93 = vlaneseq
    %v94 = vshrl.u32 %v93, 7
    %v95 = vadd.s32 %v94, 8
    %vm96 = vcmp.lt.s32.totalorder %v94, 9
    %vm97 = vcmp.lt.s32.totalorder %v95, 9
    %99 = vset.pattern.permute.xlu0 0
    %100 = vperm.xlu0 %99, %v60
    %v101 = vpop.permute.xlu0 %100
    %104 = vset.pattern.permute.xlu0 0
    %105 = vperm.xlu0 %104, %v61
    %v106 = vpop.permute.xlu0 %105
    %109 = vset.pattern.permute.xlu0 0
    %110 = vperm.xlu0 %109, %v62
    %v111 = vpop.permute.xlu0 %110
    %114 = vset.pattern.permute.xlu0 0
    %115 = vperm.xlu0 %114, %v63
    %v116 = vpop.permute.xlu0 %115
    %119 = vset.pattern.permute.xlu0 0
    %120 = vperm.xlu0 %119, %v64
    %v121 = vpop.permute.xlu0 %120
    %124 = vset.pattern.permute.xlu0 0
    %125 = vperm.xlu0 %124, %v65
    %v126 = vpop.permute.xlu0 %125
    %129 = vset.pattern.permute.xlu0 0
    %130 = vperm.xlu0 %129, %v66
    %v131 = vpop.permute.xlu0 %130
    %134 = vset.pattern.permute.xlu0 0
    %135 = vperm.xlu0 %134, %v67
    %v136 = vpop.permute.xlu0 %135
    %139 = vset.pattern.permute.xlu0 0
    %140 = vperm.xlu0 %139, %v68
    %v141 = vpop.permute.xlu0 %140
    %144 = vset.pattern.permute.xlu0 0
    %145 = vperm.xlu0 %144, %v69
    %v146 = vpop.permute.xlu0 %145
    %149 = vset.pattern.permute.xlu0 0
    %150 = vperm.xlu0 %149, %v70
    %v151 = vpop.permute.xlu0 %150
    %154 = vset.pattern.permute.xlu0 0
    %155 = vperm.xlu0 %154, %v71
    %v156 = vpop.permute.xlu0 %155
    %159 = vset.pattern.permute.xlu0 0
    %160 = vperm.xlu0 %159, %v72
    %v161 = vpop.permute.xlu0 %160
    %164 = vset.pattern.permute.xlu0 0
    %165 = vperm.xlu0 %164, %v73
    %v166 = vpop.permute.xlu0 %165
    %169 = vset.pattern.permute.xlu0 0
    %170 = vperm.xlu0 %169, %v74
    %v171 = vpop.permute.xlu0 %170
    %174 = vset.pattern.permute.xlu0 0
    %175 = vperm.xlu0 %174, %v75
    %v176 = vpop.permute.xlu0 %175
    %v178 = vsub.f32 %v28, %v101
    %v179 = vsub.f32 %v29, %v106
    %v180 = vsub.f32 %v30, %v111
    %v181 = vsub.f32 %v31, %v116
    %v182 = vsub.f32 %v32, %v121
    %v183 = vsub.f32 %v33, %v126
    %v184 = vsub.f32 %v34, %v131
    %v185 = vsub.f32 %v35, %v136
    %v186 = vsub.f32 %v36, %v141
    %v187 = vsub.f32 %v37, %v146
    %v188 = vsub.f32 %v38, %v151
    %v189 = vsub.f32 %v39, %v156
    %v190 = vsub.f32 %v40, %v161
    %v191 = vsub.f32 %v41, %v166
    %v192 = vsub.f32 %v42, %v171
    %v193 = vsub.f32 %v43, %v176
    %195 = vset.pattern.permute.xlu0 0
    %196 = vperm.xlu0 %195, %v76
    %v197 = vpop.permute.xlu0 %196
    %200 = vset.pattern.permute.xlu0 0
    %201 = vperm.xlu0 %200, %v77
    %v202 = vpop.permute.xlu0 %201
    %205 = vset.pattern.permute.xlu0 0
    %206 = vperm.xlu0 %205, %v78
    %v207 = vpop.permute.xlu0 %206
    %210 = vset.pattern.permute.xlu0 0
    %211 = vperm.xlu0 %210, %v79
    %v212 = vpop.permute.xlu0 %211
    %215 = vset.pattern.permute.xlu0 0
    %216 = vperm.xlu0 %215, %v80
    %v217 = vpop.permute.xlu0 %216
    %220 = vset.pattern.permute.xlu0 0
    %221 = vperm.xlu0 %220, %v81
    %v222 = vpop.permute.xlu0 %221
    %225 = vset.pattern.permute.xlu0 0
    %226 = vperm.xlu0 %225, %v82
    %v227 = vpop.permute.xlu0 %226
    %230 = vset.pattern.permute.xlu0 0
    %231 = vperm.xlu0 %230, %v83
    %v232 = vpop.permute.xlu0 %231
    %235 = vset.pattern.permute.xlu0 0
    %236 = vperm.xlu0 %235, %v84
    %v237 = vpop.permute.xlu0 %236
    %240 = vset.pattern.permute.xlu0 0
    %241 = vperm.xlu0 %240, %v85
    %v242 = vpop.permute.xlu0 %241
    %245 = vset.pattern.permute.xlu0 0
    %246 = vperm.xlu0 %245, %v86
    %v247 = vpop.permute.xlu0 %246
    %250 = vset.pattern.permute.xlu0 0
    %251 = vperm.xlu0 %250, %v87
    %v252 = vpop.permute.xlu0 %251
    %255 = vset.pattern.permute.xlu0 0
    %256 = vperm.xlu0 %255, %v88
    %v257 = vpop.permute.xlu0 %256
    %260 = vset.pattern.permute.xlu0 0
    %261 = vperm.xlu0 %260, %v89
    %v262 = vpop.permute.xlu0 %261
    %265 = vset.pattern.permute.xlu0 0
    %266 = vperm.xlu0 %265, %v90
    %v267 = vpop.permute.xlu0 %266
    %270 = vset.pattern.permute.xlu0 0
    %271 = vperm.xlu0 %270, %v91
    %v272 = vpop.permute.xlu0 %271
    %v274 = vsub.f32 %v44, %v197
    %v275 = vsub.f32 %v45, %v202
    %v276 = vsub.f32 %v46, %v207
    %v277 = vsub.f32 %v47, %v212
    %v278 = vsub.f32 %v48, %v217
    %v279 = vsub.f32 %v49, %v222
    %v280 = vsub.f32 %v50, %v227
    %v281 = vsub.f32 %v51, %v232
    %v282 = vsub.f32 %v52, %v237
    %v283 = vsub.f32 %v53, %v242
    %v284 = vsub.f32 %v54, %v247
    %v285 = vsub.f32 %v55, %v252
    %v286 = vsub.f32 %v56, %v257
    %v287 = vsub.f32 %v57, %v262
    %v288 = vsub.f32 %v58, %v267
    %v289 = vsub.f32 %v59, %v272
    %v290 = vmul.f32 %v178, %v178
    %v291 = vmul.f32 %v179, %v179
    %v292 = vmul.f32 %v180, %v180
    %v293 = vmul.f32 %v181, %v181
    %v294 = vmul.f32 %v182, %v182
    %v295 = vmul.f32 %v183, %v183
    %v296 = vmul.f32 %v184, %v184
    %v297 = vmul.f32 %v185, %v185
    %v298 = vmul.f32 %v186, %v186
    %v299 = vmul.f32 %v187, %v187
    %v300 = vmul.f32 %v188, %v188
    %v301 = vmul.f32 %v189, %v189
    %v302 = vmul.f32 %v190, %v190
    %v303 = vmul.f32 %v191, %v191
    %v304 = vmul.f32 %v192, %v192
    %v305 = vmul.f32 %v193, %v193
    %v306 = vmul.f32 %v274, %v274
    %v307 = vmul.f32 %v275, %v275
    %v308 = vmul.f32 %v276, %v276
    %v309 = vmul.f32 %v277, %v277
    %v310 = vmul.f32 %v278, %v278
    %v311 = vmul.f32 %v279, %v279
    %v312 = vmul.f32 %v280, %v280
    %v313 = vmul.f32 %v281, %v281
    %v314 = vmul.f32 %v282, %v282
    %v315 = vmul.f32 %v283, %v283
    %v316 = vmul.f32 %v284, %v284
    %v317 = vmul.f32 %v285, %v285
    %v318 = vmul.f32 %v286, %v286
    %v319 = vmul.f32 %v287, %v287
    %v320 = vmul.f32 %v288, %v288
    %v321 = vmul.f32 %v289, %v289
    %v322 = vadd.f32 %v290, %v306
    %v323 = vadd.f32 %v291, %v307
    %v324 = vadd.f32 %v292, %v308
    %v325 = vadd.f32 %v293, %v309
    %v326 = vadd.f32 %v294, %v310
    %v327 = vadd.f32 %v295, %v311
    %v328 = vadd.f32 %v296, %v312
    %v329 = vadd.f32 %v297, %v313
    %v330 = vadd.f32 %v298, %v314
    %v331 = vadd.f32 %v299, %v315
    %v332 = vadd.f32 %v300, %v316
    %v333 = vadd.f32 %v301, %v317
    %v334 = vadd.f32 %v302, %v318
    %v335 = vadd.f32 %v303, %v319
    %v336 = vadd.f32 %v304, %v320
    %v337 = vadd.f32 %v305, %v321
    %v338 = vrsqrt.pop %v322
    %v339 = vmul.f32 %v322, %v338
    %vm340 = vcmp.eq.f32.partialorder %v322, inf
    %v341 = vsel %vm340, %v322, %v339
    %vm342 = vcmp.eq.f32.partialorder %v322, 0.0
    %v343 = vand.u32 %v322, 2147483648
    %v344 = vsel %vm342, %v343, %v341
    %v345 = vrsqrt.pop %v323
    %v346 = vmul.f32 %v323, %v345
    %vm347 = vcmp.eq.f32.partialorder %v323, inf
    %v348 = vsel %vm347, %v323, %v346
    %vm349 = vcmp.eq.f32.partialorder %v323, 0.0
    %v350 = vand.u32 %v323, 2147483648
    %v351 = vsel %vm349, %v350, %v348
    %v352 = vrsqrt.pop %v324
    %v353 = vmul.f32 %v324, %v352
    %vm354 = vcmp.eq.f32.partialorder %v324, inf
    %v355 = vsel %vm354, %v324, %v353
    %vm356 = vcmp.eq.f32.partialorder %v324, 0.0
    %v357 = vand.u32 %v324, 2147483648
    %v358 = vsel %vm356, %v357, %v355
    %v359 = vrsqrt.pop %v325
    %v360 = vmul.f32 %v325, %v359
    %vm361 = vcmp.eq.f32.partialorder %v325, inf
    %v362 = vsel %vm361, %v325, %v360
    %vm363 = vcmp.eq.f32.partialorder %v325, 0.0
    %v364 = vand.u32 %v325, 2147483648
    %v365 = vsel %vm363, %v364, %v362
    %v366 = vrsqrt.pop %v326
    %v367 = vmul.f32 %v326, %v366
    %vm368 = vcmp.eq.f32.partialorder %v326, inf
    %v369 = vsel %vm368, %v326, %v367
    %vm370 = vcmp.eq.f32.partialorder %v326, 0.0
    %v371 = vand.u32 %v326, 2147483648
    %v372 = vsel %vm370, %v371, %v369
    %v373 = vrsqrt.pop %v327
    %v374 = vmul.f32 %v327, %v373
    %vm375 = vcmp.eq.f32.partialorder %v327, inf
    %v376 = vsel %vm375, %v327, %v374
    %vm377 = vcmp.eq.f32.partialorder %v327, 0.0
    %v378 = vand.u32 %v327, 2147483648
    %v379 = vsel %vm377, %v378, %v376
    %v380 = vrsqrt.pop %v328
    %v381 = vmul.f32 %v328, %v380
    %vm382 = vcmp.eq.f32.partialorder %v328, inf
    %v383 = vsel %vm382, %v328, %v381
    %vm384 = vcmp.eq.f32.partialorder %v328, 0.0
    %v385 = vand.u32 %v328, 2147483648
    %v386 = vsel %vm384, %v385, %v383
    %v387 = vrsqrt.pop %v329
    %v388 = vmul.f32 %v329, %v387
    %vm389 = vcmp.eq.f32.partialorder %v329, inf
    %v390 = vsel %vm389, %v329, %v388
    %vm391 = vcmp.eq.f32.partialorder %v329, 0.0
    %v392 = vand.u32 %v329, 2147483648
    %v393 = vsel %vm391, %v392, %v390
    %v394 = vrsqrt.pop %v330
    %v395 = vmul.f32 %v330, %v394
    %vm396 = vcmp.eq.f32.partialorder %v330, inf
    %v397 = vsel %vm396, %v330, %v395
    %vm398 = vcmp.eq.f32.partialorder %v330, 0.0
    %v399 = vand.u32 %v330, 2147483648
    %v400 = vsel %vm398, %v399, %v397
    %v401 = vrsqrt.pop %v331
    %v402 = vmul.f32 %v331, %v401
    %vm403 = vcmp.eq.f32.partialorder %v331, inf
    %v404 = vsel %vm403, %v331, %v402
    %vm405 = vcmp.eq.f32.partialorder %v331, 0.0
    %v406 = vand.u32 %v331, 2147483648
    %v407 = vsel %vm405, %v406, %v404
    %v408 = vrsqrt.pop %v332
    %v409 = vmul.f32 %v332, %v408
    %vm410 = vcmp.eq.f32.partialorder %v332, inf
    %v411 = vsel %vm410, %v332, %v409
    %vm412 = vcmp.eq.f32.partialorder %v332, 0.0
    %v413 = vand.u32 %v332, 2147483648
    %v414 = vsel %vm412, %v413, %v411
    %v415 = vrsqrt.pop %v333
    %v416 = vmul.f32 %v333, %v415
    %vm417 = vcmp.eq.f32.partialorder %v333, inf
    %v418 = vsel %vm417, %v333, %v416
    %vm419 = vcmp.eq.f32.partialorder %v333, 0.0
    %v420 = vand.u32 %v333, 2147483648
    %v421 = vsel %vm419, %v420, %v418
    %v422 = vrsqrt.pop %v334
    %v423 = vmul.f32 %v334, %v422
    %vm424 = vcmp.eq.f32.partialorder %v334, inf
    %v425 = vsel %vm424, %v334, %v423
    %vm426 = vcmp.eq.f32.partialorder %v334, 0.0
    %v427 = vand.u32 %v334, 2147483648
    %v428 = vsel %vm426, %v427, %v425
    %v429 = vrsqrt.pop %v335
    %v430 = vmul.f32 %v335, %v429
    %vm431 = vcmp.eq.f32.partialorder %v335, inf
    %v432 = vsel %vm431, %v335, %v430
    %vm433 = vcmp.eq.f32.partialorder %v335, 0.0
    %v434 = vand.u32 %v335, 2147483648
    %v435 = vsel %vm433, %v434, %v432
    %v436 = vrsqrt.pop %v336
    %v437 = vmul.f32 %v336, %v436
    %vm438 = vcmp.eq.f32.partialorder %v336, inf
    %v439 = vsel %vm438, %v336, %v437
    %vm440 = vcmp.eq.f32.partialorder %v336, 0.0
    %v441 = vand.u32 %v336, 2147483648
    %v442 = vsel %vm440, %v441, %v439
    %v443 = vrsqrt.pop %v337
    %v444 = vmul.f32 %v337, %v443
    %vm445 = vcmp.eq.f32.partialorder %v337, inf
    %v446 = vsel %vm445, %v337, %v444
    %vm447 = vcmp.eq.f32.partialorder %v337, 0.0
    %v448 = vand.u32 %v337, 2147483648
    %v449 = vsel %vm447, %v448, %v446
    %vm450 = vcmp.eq.s32.totalorder %v94, 0
    %vm451 = vcmp.eq.s32.totalorder %v95, 0
    %v452 = vadd.f32 %v322, %v323
    %v453 = vadd.f32 %v452, %v324
    %v454 = vadd.f32 %v453, %v325
    %v455 = vadd.f32 %v454, %v326
    %v456 = vadd.f32 %v455, %v327
    %v457 = vadd.f32 %v456, %v328
    %v458 = vadd.f32 %v457, %v329
    %v459 = vadd.f32 %v458, %v330
    %v460 = vadd.f32 %v459, %v331
    %v461 = vadd.f32 %v460, %v332
    %v462 = vadd.f32 %v461, %v333
    %v463 = vadd.f32 %v462, %v334
    %v464 = vadd.f32 %v463, %v335
    %v465 = vadd.f32 %v464, %v336
    %v466 = vadd.f32 %v465, %v337
    %v467 = vrot.slane %v466, 4
    %v468 = vadd.f32 %v466, %v467
    %v469 = vrot.slane %v468, 2
    %v470 = vadd.f32 %v468, %v469
    %v471 = vrot.slane %v470, 1
    %v472 = vadd.f32 %v470, %v471
    %v473 = vsel %vm450, %v472, 1e+30
    %v474 = vsel %vm451, %v472, 1e+30
    %v475 = vadd.f32 %v344, %v351
    %v476 = vadd.f32 %v475, %v358
    %v477 = vadd.f32 %v476, %v365
    %v478 = vadd.f32 %v477, %v372
    %v479 = vadd.f32 %v478, %v379
    %v480 = vadd.f32 %v479, %v386
    %v481 = vadd.f32 %v480, %v393
    %v482 = vadd.f32 %v481, %v400
    %v483 = vadd.f32 %v482, %v407
    %v484 = vadd.f32 %v483, %v414
    %v485 = vadd.f32 %v484, %v421
    %v486 = vadd.f32 %v485, %v428
    %v487 = vadd.f32 %v486, %v435
    %v488 = vadd.f32 %v487, %v442
    %v489 = vadd.f32 %v488, %v449
    %v490 = vrot.slane %v489, 4
    %v491 = vadd.f32 %v489, %v490
    %v492 = vrot.slane %v491, 2
    %v493 = vadd.f32 %v491, %v492
    %v494 = vrot.slane %v493, 1
    %v495 = vadd.f32 %v493, %v494
    %v496 = vsel %vm450, %v495, 0.0
    %v497 = vsel %vm451, %v495, 0.0
    %498 = vset.pattern.permute.xlu0 1
    %499 = vperm.xlu0 %498, %v60
    %v500 = vpop.permute.xlu0 %499
    %502 = vset.pattern.permute.xlu0 1
    %503 = vperm.xlu0 %502, %v61
    %v504 = vpop.permute.xlu0 %503
    %506 = vset.pattern.permute.xlu0 1
    %507 = vperm.xlu0 %506, %v62
    %v508 = vpop.permute.xlu0 %507
    %510 = vset.pattern.permute.xlu0 1
    %511 = vperm.xlu0 %510, %v63
    %v512 = vpop.permute.xlu0 %511
    %514 = vset.pattern.permute.xlu0 1
    %515 = vperm.xlu0 %514, %v64
    %v516 = vpop.permute.xlu0 %515
    %518 = vset.pattern.permute.xlu0 1
    %519 = vperm.xlu0 %518, %v65
    %v520 = vpop.permute.xlu0 %519
    %522 = vset.pattern.permute.xlu0 1
    %523 = vperm.xlu0 %522, %v66
    %v524 = vpop.permute.xlu0 %523
    %526 = vset.pattern.permute.xlu0 1
    %527 = vperm.xlu0 %526, %v67
    %v528 = vpop.permute.xlu0 %527
    %530 = vset.pattern.permute.xlu0 1
    %531 = vperm.xlu0 %530, %v68
    %v532 = vpop.permute.xlu0 %531
    %534 = vset.pattern.permute.xlu0 1
    %535 = vperm.xlu0 %534, %v69
    %v536 = vpop.permute.xlu0 %535
    %538 = vset.pattern.permute.xlu0 1
    %539 = vperm.xlu0 %538, %v70
    %v540 = vpop.permute.xlu0 %539
    %542 = vset.pattern.permute.xlu0 1
    %543 = vperm.xlu0 %542, %v71
    %v544 = vpop.permute.xlu0 %543
    %546 = vset.pattern.permute.xlu0 1
    %547 = vperm.xlu0 %546, %v72
    %v548 = vpop.permute.xlu0 %547
    %550 = vset.pattern.permute.xlu0 1
    %551 = vperm.xlu0 %550, %v73
    %v552 = vpop.permute.xlu0 %551
    %554 = vset.pattern.permute.xlu0 1
    %555 = vperm.xlu0 %554, %v74
    %v556 = vpop.permute.xlu0 %555
    %558 = vset.pattern.permute.xlu0 1
    %559 = vperm.xlu0 %558, %v75
    %v560 = vpop.permute.xlu0 %559
    %v562 = vsub.f32 %v28, %v500
    %v563 = vsub.f32 %v29, %v504
    %v564 = vsub.f32 %v30, %v508
    %v565 = vsub.f32 %v31, %v512
    %v566 = vsub.f32 %v32, %v516
    %v567 = vsub.f32 %v33, %v520
    %v568 = vsub.f32 %v34, %v524
    %v569 = vsub.f32 %v35, %v528
    %v570 = vsub.f32 %v36, %v532
    %v571 = vsub.f32 %v37, %v536
    %v572 = vsub.f32 %v38, %v540
    %v573 = vsub.f32 %v39, %v544
    %v574 = vsub.f32 %v40, %v548
    %v575 = vsub.f32 %v41, %v552
    %v576 = vsub.f32 %v42, %v556
    %v577 = vsub.f32 %v43, %v560
    %578 = vset.pattern.permute.xlu0 1
    %579 = vperm.xlu0 %578, %v76
    %v580 = vpop.permute.xlu0 %579
    %582 = vset.pattern.permute.xlu0 1
    %583 = vperm.xlu0 %582, %v77
    %v584 = vpop.permute.xlu0 %583
    %586 = vset.pattern.permute.xlu0 1
    %587 = vperm.xlu0 %586, %v78
    %v588 = vpop.permute.xlu0 %587
    %590 = vset.pattern.permute.xlu0 1
    %591 = vperm.xlu0 %590, %v79
    %v592 = vpop.permute.xlu0 %591
    %594 = vset.pattern.permute.xlu0 1
    %595 = vperm.xlu0 %594, %v80
    %v596 = vpop.permute.xlu0 %595
    %598 = vset.pattern.permute.xlu0 1
    %599 = vperm.xlu0 %598, %v81
    %v600 = vpop.permute.xlu0 %599
    %602 = vset.pattern.permute.xlu0 1
    %603 = vperm.xlu0 %602, %v82
    %v604 = vpop.permute.xlu0 %603
    %606 = vset.pattern.permute.xlu0 1
    %607 = vperm.xlu0 %606, %v83
    %v608 = vpop.permute.xlu0 %607
    %610 = vset.pattern.permute.xlu0 1
    %611 = vperm.xlu0 %610, %v84
    %v612 = vpop.permute.xlu0 %611
    %614 = vset.pattern.permute.xlu0 1
    %615 = vperm.xlu0 %614, %v85
    %v616 = vpop.permute.xlu0 %615
    %618 = vset.pattern.permute.xlu0 1
    %619 = vperm.xlu0 %618, %v86
    %v620 = vpop.permute.xlu0 %619
    %622 = vset.pattern.permute.xlu0 1
    %623 = vperm.xlu0 %622, %v87
    %v624 = vpop.permute.xlu0 %623
    %626 = vset.pattern.permute.xlu0 1
    %627 = vperm.xlu0 %626, %v88
    %v628 = vpop.permute.xlu0 %627
    %630 = vset.pattern.permute.xlu0 1
    %631 = vperm.xlu0 %630, %v89
    %v632 = vpop.permute.xlu0 %631
    %634 = vset.pattern.permute.xlu0 1
    %635 = vperm.xlu0 %634, %v90
    %v636 = vpop.permute.xlu0 %635
    %638 = vset.pattern.permute.xlu0 1
    %639 = vperm.xlu0 %638, %v91
    %v640 = vpop.permute.xlu0 %639
    %v642 = vsub.f32 %v44, %v580
    %v643 = vsub.f32 %v45, %v584
    %v644 = vsub.f32 %v46, %v588
    %v645 = vsub.f32 %v47, %v592
    %v646 = vsub.f32 %v48, %v596
    %v647 = vsub.f32 %v49, %v600
    %v648 = vsub.f32 %v50, %v604
    %v649 = vsub.f32 %v51, %v608
    %v650 = vsub.f32 %v52, %v612
    %v651 = vsub.f32 %v53, %v616
    %v652 = vsub.f32 %v54, %v620
    %v653 = vsub.f32 %v55, %v624
    %v654 = vsub.f32 %v56, %v628
    %v655 = vsub.f32 %v57, %v632
    %v656 = vsub.f32 %v58, %v636
    %v657 = vsub.f32 %v59, %v640
    %v658 = vmul.f32 %v562, %v562
    %v659 = vmul.f32 %v563, %v563
    %v660 = vmul.f32 %v564, %v564
    %v661 = vmul.f32 %v565, %v565
    %v662 = vmul.f32 %v566, %v566
    %v663 = vmul.f32 %v567, %v567
    %v664 = vmul.f32 %v568, %v568
    %v665 = vmul.f32 %v569, %v569
    %v666 = vmul.f32 %v570, %v570
    %v667 = vmul.f32 %v571, %v571
    %v668 = vmul.f32 %v572, %v572
    %v669 = vmul.f32 %v573, %v573
    %v670 = vmul.f32 %v574, %v574
    %v671 = vmul.f32 %v575, %v575
    %v672 = vmul.f32 %v576, %v576
    %v673 = vmul.f32 %v577, %v577
    %v674 = vmul.f32 %v642, %v642
    %v675 = vmul.f32 %v643, %v643
    %v676 = vmul.f32 %v644, %v644
    %v677 = vmul.f32 %v645, %v645
    %v678 = vmul.f32 %v646, %v646
    %v679 = vmul.f32 %v647, %v647
    %v680 = vmul.f32 %v648, %v648
    %v681 = vmul.f32 %v649, %v649
    %v682 = vmul.f32 %v650, %v650
    %v683 = vmul.f32 %v651, %v651
    %v684 = vmul.f32 %v652, %v652
    %v685 = vmul.f32 %v653, %v653
    %v686 = vmul.f32 %v654, %v654
    %v687 = vmul.f32 %v655, %v655
    %v688 = vmul.f32 %v656, %v656
    %v689 = vmul.f32 %v657, %v657
    %v690 = vadd.f32 %v658, %v674
    %v691 = vadd.f32 %v659, %v675
    %v692 = vadd.f32 %v660, %v676
    %v693 = vadd.f32 %v661, %v677
    %v694 = vadd.f32 %v662, %v678
    %v695 = vadd.f32 %v663, %v679
    %v696 = vadd.f32 %v664, %v680
    %v697 = vadd.f32 %v665, %v681
    %v698 = vadd.f32 %v666, %v682
    %v699 = vadd.f32 %v667, %v683
    %v700 = vadd.f32 %v668, %v684
    %v701 = vadd.f32 %v669, %v685
    %v702 = vadd.f32 %v670, %v686
    %v703 = vadd.f32 %v671, %v687
    %v704 = vadd.f32 %v672, %v688
    %v705 = vadd.f32 %v673, %v689
    %v706 = vrsqrt.pop %v690
    %v707 = vmul.f32 %v690, %v706
    %vm708 = vcmp.eq.f32.partialorder %v690, inf
    %v709 = vsel %vm708, %v690, %v707
    %vm710 = vcmp.eq.f32.partialorder %v690, 0.0
    %v711 = vand.u32 %v690, 2147483648
    %v712 = vsel %vm710, %v711, %v709
    %v713 = vrsqrt.pop %v691
    %v714 = vmul.f32 %v691, %v713
    %vm715 = vcmp.eq.f32.partialorder %v691, inf
    %v716 = vsel %vm715, %v691, %v714
    %vm717 = vcmp.eq.f32.partialorder %v691, 0.0
    %v718 = vand.u32 %v691, 2147483648
    %v719 = vsel %vm717, %v718, %v716
    %v720 = vrsqrt.pop %v692
    %v721 = vmul.f32 %v692, %v720
    %vm722 = vcmp.eq.f32.partialorder %v692, inf
    %v723 = vsel %vm722, %v692, %v721
    %vm724 = vcmp.eq.f32.partialorder %v692, 0.0
    %v725 = vand.u32 %v692, 2147483648
    %v726 = vsel %vm724, %v725, %v723
    %v727 = vrsqrt.pop %v693
    %v728 = vmul.f32 %v693, %v727
    %vm729 = vcmp.eq.f32.partialorder %v693, inf
    %v730 = vsel %vm729, %v693, %v728
    %vm731 = vcmp.eq.f32.partialorder %v693, 0.0
    %v732 = vand.u32 %v693, 2147483648
    %v733 = vsel %vm731, %v732, %v730
    %v734 = vrsqrt.pop %v694
    %v735 = vmul.f32 %v694, %v734
    %vm736 = vcmp.eq.f32.partialorder %v694, inf
    %v737 = vsel %vm736, %v694, %v735
    %vm738 = vcmp.eq.f32.partialorder %v694, 0.0
    %v739 = vand.u32 %v694, 2147483648
    %v740 = vsel %vm738, %v739, %v737
    %v741 = vrsqrt.pop %v695
    %v742 = vmul.f32 %v695, %v741
    %vm743 = vcmp.eq.f32.partialorder %v695, inf
    %v744 = vsel %vm743, %v695, %v742
    %vm745 = vcmp.eq.f32.partialorder %v695, 0.0
    %v746 = vand.u32 %v695, 2147483648
    %v747 = vsel %vm745, %v746, %v744
    %v748 = vrsqrt.pop %v696
    %v749 = vmul.f32 %v696, %v748
    %vm750 = vcmp.eq.f32.partialorder %v696, inf
    %v751 = vsel %vm750, %v696, %v749
    %vm752 = vcmp.eq.f32.partialorder %v696, 0.0
    %v753 = vand.u32 %v696, 2147483648
    %v754 = vsel %vm752, %v753, %v751
    %v755 = vrsqrt.pop %v697
    %v756 = vmul.f32 %v697, %v755
    %vm757 = vcmp.eq.f32.partialorder %v697, inf
    %v758 = vsel %vm757, %v697, %v756
    %vm759 = vcmp.eq.f32.partialorder %v697, 0.0
    %v760 = vand.u32 %v697, 2147483648
    %v761 = vsel %vm759, %v760, %v758
    %v762 = vrsqrt.pop %v698
    %v763 = vmul.f32 %v698, %v762
    %vm764 = vcmp.eq.f32.partialorder %v698, inf
    %v765 = vsel %vm764, %v698, %v763
    %vm766 = vcmp.eq.f32.partialorder %v698, 0.0
    %v767 = vand.u32 %v698, 2147483648
    %v768 = vsel %vm766, %v767, %v765
    %v769 = vrsqrt.pop %v699
    %v770 = vmul.f32 %v699, %v769
    %vm771 = vcmp.eq.f32.partialorder %v699, inf
    %v772 = vsel %vm771, %v699, %v770
    %vm773 = vcmp.eq.f32.partialorder %v699, 0.0
    %v774 = vand.u32 %v699, 2147483648
    %v775 = vsel %vm773, %v774, %v772
    %v776 = vrsqrt.pop %v700
    %v777 = vmul.f32 %v700, %v776
    %vm778 = vcmp.eq.f32.partialorder %v700, inf
    %v779 = vsel %vm778, %v700, %v777
    %vm780 = vcmp.eq.f32.partialorder %v700, 0.0
    %v781 = vand.u32 %v700, 2147483648
    %v782 = vsel %vm780, %v781, %v779
    %v783 = vrsqrt.pop %v701
    %v784 = vmul.f32 %v701, %v783
    %vm785 = vcmp.eq.f32.partialorder %v701, inf
    %v786 = vsel %vm785, %v701, %v784
    %vm787 = vcmp.eq.f32.partialorder %v701, 0.0
    %v788 = vand.u32 %v701, 2147483648
    %v789 = vsel %vm787, %v788, %v786
    %v790 = vrsqrt.pop %v702
    %v791 = vmul.f32 %v702, %v790
    %vm792 = vcmp.eq.f32.partialorder %v702, inf
    %v793 = vsel %vm792, %v702, %v791
    %vm794 = vcmp.eq.f32.partialorder %v702, 0.0
    %v795 = vand.u32 %v702, 2147483648
    %v796 = vsel %vm794, %v795, %v793
    %v797 = vrsqrt.pop %v703
    %v798 = vmul.f32 %v703, %v797
    %vm799 = vcmp.eq.f32.partialorder %v703, inf
    %v800 = vsel %vm799, %v703, %v798
    %vm801 = vcmp.eq.f32.partialorder %v703, 0.0
    %v802 = vand.u32 %v703, 2147483648
    %v803 = vsel %vm801, %v802, %v800
    %v804 = vrsqrt.pop %v704
    %v805 = vmul.f32 %v704, %v804
    %vm806 = vcmp.eq.f32.partialorder %v704, inf
    %v807 = vsel %vm806, %v704, %v805
    %vm808 = vcmp.eq.f32.partialorder %v704, 0.0
    %v809 = vand.u32 %v704, 2147483648
    %v810 = vsel %vm808, %v809, %v807
    %v811 = vrsqrt.pop %v705
    %v812 = vmul.f32 %v705, %v811
    %vm813 = vcmp.eq.f32.partialorder %v705, inf
    %v814 = vsel %vm813, %v705, %v812
    %vm815 = vcmp.eq.f32.partialorder %v705, 0.0
    %v816 = vand.u32 %v705, 2147483648
    %v817 = vsel %vm815, %v816, %v814
    %vm818 = vcmp.eq.s32.totalorder %v94, 1
    %vm819 = vcmp.eq.s32.totalorder %v95, 1
    %v820 = vadd.f32 %v690, %v691
    %v821 = vadd.f32 %v820, %v692
    %v822 = vadd.f32 %v821, %v693
    %v823 = vadd.f32 %v822, %v694
    %v824 = vadd.f32 %v823, %v695
    %v825 = vadd.f32 %v824, %v696
    %v826 = vadd.f32 %v825, %v697
    %v827 = vadd.f32 %v826, %v698
    %v828 = vadd.f32 %v827, %v699
    %v829 = vadd.f32 %v828, %v700
    %v830 = vadd.f32 %v829, %v701
    %v831 = vadd.f32 %v830, %v702
    %v832 = vadd.f32 %v831, %v703
    %v833 = vadd.f32 %v832, %v704
    %v834 = vadd.f32 %v833, %v705
    %v835 = vrot.slane %v834, 4
    %v836 = vadd.f32 %v834, %v835
    %v837 = vrot.slane %v836, 2
    %v838 = vadd.f32 %v836, %v837
    %v839 = vrot.slane %v838, 1
    %v840 = vadd.f32 %v838, %v839
    %v841 = vsel %vm818, %v840, %v473
    %v842 = vsel %vm819, %v840, %v474
    %v843 = vadd.f32 %v712, %v719
    %v844 = vadd.f32 %v843, %v726
    %v845 = vadd.f32 %v844, %v733
    %v846 = vadd.f32 %v845, %v740
    %v847 = vadd.f32 %v846, %v747
    %v848 = vadd.f32 %v847, %v754
    %v849 = vadd.f32 %v848, %v761
    %v850 = vadd.f32 %v849, %v768
    %v851 = vadd.f32 %v850, %v775
    %v852 = vadd.f32 %v851, %v782
    %v853 = vadd.f32 %v852, %v789
    %v854 = vadd.f32 %v853, %v796
    %v855 = vadd.f32 %v854, %v803
    %v856 = vadd.f32 %v855, %v810
    %v857 = vadd.f32 %v856, %v817
    %v858 = vrot.slane %v857, 4
    %v859 = vadd.f32 %v857, %v858
    %v860 = vrot.slane %v859, 2
    %v861 = vadd.f32 %v859, %v860
    %v862 = vrot.slane %v861, 1
    %v863 = vadd.f32 %v861, %v862
    %v864 = vsel %vm818, %v863, %v496
    %v865 = vsel %vm819, %v863, %v497
    %866 = vset.pattern.permute.xlu0 2
    %867 = vperm.xlu0 %866, %v60
    %v868 = vpop.permute.xlu0 %867
    %870 = vset.pattern.permute.xlu0 2
    %871 = vperm.xlu0 %870, %v61
    %v872 = vpop.permute.xlu0 %871
    %874 = vset.pattern.permute.xlu0 2
    %875 = vperm.xlu0 %874, %v62
    %v876 = vpop.permute.xlu0 %875
    %878 = vset.pattern.permute.xlu0 2
    %879 = vperm.xlu0 %878, %v63
    %v880 = vpop.permute.xlu0 %879
    %882 = vset.pattern.permute.xlu0 2
    %883 = vperm.xlu0 %882, %v64
    %v884 = vpop.permute.xlu0 %883
    %886 = vset.pattern.permute.xlu0 2
    %887 = vperm.xlu0 %886, %v65
    %v888 = vpop.permute.xlu0 %887
    %890 = vset.pattern.permute.xlu0 2
    %891 = vperm.xlu0 %890, %v66
    %v892 = vpop.permute.xlu0 %891
    %894 = vset.pattern.permute.xlu0 2
    %895 = vperm.xlu0 %894, %v67
    %v896 = vpop.permute.xlu0 %895
    %898 = vset.pattern.permute.xlu0 2
    %899 = vperm.xlu0 %898, %v68
    %v900 = vpop.permute.xlu0 %899
    %902 = vset.pattern.permute.xlu0 2
    %903 = vperm.xlu0 %902, %v69
    %v904 = vpop.permute.xlu0 %903
    %906 = vset.pattern.permute.xlu0 2
    %907 = vperm.xlu0 %906, %v70
    %v908 = vpop.permute.xlu0 %907
    %910 = vset.pattern.permute.xlu0 2
    %911 = vperm.xlu0 %910, %v71
    %v912 = vpop.permute.xlu0 %911
    %914 = vset.pattern.permute.xlu0 2
    %915 = vperm.xlu0 %914, %v72
    %v916 = vpop.permute.xlu0 %915
    %918 = vset.pattern.permute.xlu0 2
    %919 = vperm.xlu0 %918, %v73
    %v920 = vpop.permute.xlu0 %919
    %922 = vset.pattern.permute.xlu0 2
    %923 = vperm.xlu0 %922, %v74
    %v924 = vpop.permute.xlu0 %923
    %926 = vset.pattern.permute.xlu0 2
    %927 = vperm.xlu0 %926, %v75
    %v928 = vpop.permute.xlu0 %927
    %v930 = vsub.f32 %v28, %v868
    %v931 = vsub.f32 %v29, %v872
    %v932 = vsub.f32 %v30, %v876
    %v933 = vsub.f32 %v31, %v880
    %v934 = vsub.f32 %v32, %v884
    %v935 = vsub.f32 %v33, %v888
    %v936 = vsub.f32 %v34, %v892
    %v937 = vsub.f32 %v35, %v896
    %v938 = vsub.f32 %v36, %v900
    %v939 = vsub.f32 %v37, %v904
    %v940 = vsub.f32 %v38, %v908
    %v941 = vsub.f32 %v39, %v912
    %v942 = vsub.f32 %v40, %v916
    %v943 = vsub.f32 %v41, %v920
    %v944 = vsub.f32 %v42, %v924
    %v945 = vsub.f32 %v43, %v928
    %946 = vset.pattern.permute.xlu0 2
    %947 = vperm.xlu0 %946, %v76
    %v948 = vpop.permute.xlu0 %947
    %950 = vset.pattern.permute.xlu0 2
    %951 = vperm.xlu0 %950, %v77
    %v952 = vpop.permute.xlu0 %951
    %954 = vset.pattern.permute.xlu0 2
    %955 = vperm.xlu0 %954, %v78
    %v956 = vpop.permute.xlu0 %955
    %958 = vset.pattern.permute.xlu0 2
    %959 = vperm.xlu0 %958, %v79
    %v960 = vpop.permute.xlu0 %959
    %962 = vset.pattern.permute.xlu0 2
    %963 = vperm.xlu0 %962, %v80
    %v964 = vpop.permute.xlu0 %963
    %966 = vset.pattern.permute.xlu0 2
    %967 = vperm.xlu0 %966, %v81
    %v968 = vpop.permute.xlu0 %967
    %970 = vset.pattern.permute.xlu0 2
    %971 = vperm.xlu0 %970, %v82
    %v972 = vpop.permute.xlu0 %971
    %974 = vset.pattern.permute.xlu0 2
    %975 = vperm.xlu0 %974, %v83
    %v976 = vpop.permute.xlu0 %975
    %978 = vset.pattern.permute.xlu0 2
    %979 = vperm.xlu0 %978, %v84
    %v980 = vpop.permute.xlu0 %979
    %982 = vset.pattern.permute.xlu0 2
    %983 = vperm.xlu0 %982, %v85
    %v984 = vpop.permute.xlu0 %983
    %986 = vset.pattern.permute.xlu0 2
    %987 = vperm.xlu0 %986, %v86
    %v988 = vpop.permute.xlu0 %987
    %990 = vset.pattern.permute.xlu0 2
    %991 = vperm.xlu0 %990, %v87
    %v992 = vpop.permute.xlu0 %991
    %994 = vset.pattern.permute.xlu0 2
    %995 = vperm.xlu0 %994, %v88
    %v996 = vpop.permute.xlu0 %995
    %998 = vset.pattern.permute.xlu0 2
    %999 = vperm.xlu0 %998, %v89
    %v1000 = vpop.permute.xlu0 %999
    %1002 = vset.pattern.permute.xlu0 2
    %1003 = vperm.xlu0 %1002, %v90
    %v1004 = vpop.permute.xlu0 %1003
    %1006 = vset.pattern.permute.xlu0 2
    %1007 = vperm.xlu0 %1006, %v91
    %v1008 = vpop.permute.xlu0 %1007
    %v1010 = vsub.f32 %v44, %v948
    %v1011 = vsub.f32 %v45, %v952
    %v1012 = vsub.f32 %v46, %v956
    %v1013 = vsub.f32 %v47, %v960
    %v1014 = vsub.f32 %v48, %v964
    %v1015 = vsub.f32 %v49, %v968
    %v1016 = vsub.f32 %v50, %v972
    %v1017 = vsub.f32 %v51, %v976
    %v1018 = vsub.f32 %v52, %v980
    %v1019 = vsub.f32 %v53, %v984
    %v1020 = vsub.f32 %v54, %v988
    %v1021 = vsub.f32 %v55, %v992
    %v1022 = vsub.f32 %v56, %v996
    %v1023 = vsub.f32 %v57, %v1000
    %v1024 = vsub.f32 %v58, %v1004
    %v1025 = vsub.f32 %v59, %v1008
    %v1026 = vmul.f32 %v930, %v930
    %v1027 = vmul.f32 %v931, %v931
    %v1028 = vmul.f32 %v932, %v932
    %v1029 = vmul.f32 %v933, %v933
    %v1030 = vmul.f32 %v934, %v934
    %v1031 = vmul.f32 %v935, %v935
    %v1032 = vmul.f32 %v936, %v936
    %v1033 = vmul.f32 %v937, %v937
    %v1034 = vmul.f32 %v938, %v938
    %v1035 = vmul.f32 %v939, %v939
    %v1036 = vmul.f32 %v940, %v940
    %v1037 = vmul.f32 %v941, %v941
    %v1038 = vmul.f32 %v942, %v942
    %v1039 = vmul.f32 %v943, %v943
    %v1040 = vmul.f32 %v944, %v944
    %v1041 = vmul.f32 %v945, %v945
    %v1042 = vmul.f32 %v1010, %v1010
    %v1043 = vmul.f32 %v1011, %v1011
    %v1044 = vmul.f32 %v1012, %v1012
    %v1045 = vmul.f32 %v1013, %v1013
    %v1046 = vmul.f32 %v1014, %v1014
    %v1047 = vmul.f32 %v1015, %v1015
    %v1048 = vmul.f32 %v1016, %v1016
    %v1049 = vmul.f32 %v1017, %v1017
    %v1050 = vmul.f32 %v1018, %v1018
    %v1051 = vmul.f32 %v1019, %v1019
    %v1052 = vmul.f32 %v1020, %v1020
    %v1053 = vmul.f32 %v1021, %v1021
    %v1054 = vmul.f32 %v1022, %v1022
    %v1055 = vmul.f32 %v1023, %v1023
    %v1056 = vmul.f32 %v1024, %v1024
    %v1057 = vmul.f32 %v1025, %v1025
    %v1058 = vadd.f32 %v1026, %v1042
    %v1059 = vadd.f32 %v1027, %v1043
    %v1060 = vadd.f32 %v1028, %v1044
    %v1061 = vadd.f32 %v1029, %v1045
    %v1062 = vadd.f32 %v1030, %v1046
    %v1063 = vadd.f32 %v1031, %v1047
    %v1064 = vadd.f32 %v1032, %v1048
    %v1065 = vadd.f32 %v1033, %v1049
    %v1066 = vadd.f32 %v1034, %v1050
    %v1067 = vadd.f32 %v1035, %v1051
    %v1068 = vadd.f32 %v1036, %v1052
    %v1069 = vadd.f32 %v1037, %v1053
    %v1070 = vadd.f32 %v1038, %v1054
    %v1071 = vadd.f32 %v1039, %v1055
    %v1072 = vadd.f32 %v1040, %v1056
    %v1073 = vadd.f32 %v1041, %v1057
    %v1074 = vrsqrt.pop %v1058
    %v1075 = vmul.f32 %v1058, %v1074
    %vm1076 = vcmp.eq.f32.partialorder %v1058, inf
    %v1077 = vsel %vm1076, %v1058, %v1075
    %vm1078 = vcmp.eq.f32.partialorder %v1058, 0.0
    %v1079 = vand.u32 %v1058, 2147483648
    %v1080 = vsel %vm1078, %v1079, %v1077
    %v1081 = vrsqrt.pop %v1059
    %v1082 = vmul.f32 %v1059, %v1081
    %vm1083 = vcmp.eq.f32.partialorder %v1059, inf
    %v1084 = vsel %vm1083, %v1059, %v1082
    %vm1085 = vcmp.eq.f32.partialorder %v1059, 0.0
    %v1086 = vand.u32 %v1059, 2147483648
    %v1087 = vsel %vm1085, %v1086, %v1084
    %v1088 = vrsqrt.pop %v1060
    %v1089 = vmul.f32 %v1060, %v1088
    %vm1090 = vcmp.eq.f32.partialorder %v1060, inf
    %v1091 = vsel %vm1090, %v1060, %v1089
    %vm1092 = vcmp.eq.f32.partialorder %v1060, 0.0
    %v1093 = vand.u32 %v1060, 2147483648
    %v1094 = vsel %vm1092, %v1093, %v1091
    %v1095 = vrsqrt.pop %v1061
    %v1096 = vmul.f32 %v1061, %v1095
    %vm1097 = vcmp.eq.f32.partialorder %v1061, inf
    %v1098 = vsel %vm1097, %v1061, %v1096
    %vm1099 = vcmp.eq.f32.partialorder %v1061, 0.0
    %v1100 = vand.u32 %v1061, 2147483648
    %v1101 = vsel %vm1099, %v1100, %v1098
    %v1102 = vrsqrt.pop %v1062
    %v1103 = vmul.f32 %v1062, %v1102
    %vm1104 = vcmp.eq.f32.partialorder %v1062, inf
    %v1105 = vsel %vm1104, %v1062, %v1103
    %vm1106 = vcmp.eq.f32.partialorder %v1062, 0.0
    %v1107 = vand.u32 %v1062, 2147483648
    %v1108 = vsel %vm1106, %v1107, %v1105
    %v1109 = vrsqrt.pop %v1063
    %v1110 = vmul.f32 %v1063, %v1109
    %vm1111 = vcmp.eq.f32.partialorder %v1063, inf
    %v1112 = vsel %vm1111, %v1063, %v1110
    %vm1113 = vcmp.eq.f32.partialorder %v1063, 0.0
    %v1114 = vand.u32 %v1063, 2147483648
    %v1115 = vsel %vm1113, %v1114, %v1112
    %v1116 = vrsqrt.pop %v1064
    %v1117 = vmul.f32 %v1064, %v1116
    %vm1118 = vcmp.eq.f32.partialorder %v1064, inf
    %v1119 = vsel %vm1118, %v1064, %v1117
    %vm1120 = vcmp.eq.f32.partialorder %v1064, 0.0
    %v1121 = vand.u32 %v1064, 2147483648
    %v1122 = vsel %vm1120, %v1121, %v1119
    %v1123 = vrsqrt.pop %v1065
    %v1124 = vmul.f32 %v1065, %v1123
    %vm1125 = vcmp.eq.f32.partialorder %v1065, inf
    %v1126 = vsel %vm1125, %v1065, %v1124
    %vm1127 = vcmp.eq.f32.partialorder %v1065, 0.0
    %v1128 = vand.u32 %v1065, 2147483648
    %v1129 = vsel %vm1127, %v1128, %v1126
    %v1130 = vrsqrt.pop %v1066
    %v1131 = vmul.f32 %v1066, %v1130
    %vm1132 = vcmp.eq.f32.partialorder %v1066, inf
    %v1133 = vsel %vm1132, %v1066, %v1131
    %vm1134 = vcmp.eq.f32.partialorder %v1066, 0.0
    %v1135 = vand.u32 %v1066, 2147483648
    %v1136 = vsel %vm1134, %v1135, %v1133
    %v1137 = vrsqrt.pop %v1067
    %v1138 = vmul.f32 %v1067, %v1137
    %vm1139 = vcmp.eq.f32.partialorder %v1067, inf
    %v1140 = vsel %vm1139, %v1067, %v1138
    %vm1141 = vcmp.eq.f32.partialorder %v1067, 0.0
    %v1142 = vand.u32 %v1067, 2147483648
    %v1143 = vsel %vm1141, %v1142, %v1140
    %v1144 = vrsqrt.pop %v1068
    %v1145 = vmul.f32 %v1068, %v1144
    %vm1146 = vcmp.eq.f32.partialorder %v1068, inf
    %v1147 = vsel %vm1146, %v1068, %v1145
    %vm1148 = vcmp.eq.f32.partialorder %v1068, 0.0
    %v1149 = vand.u32 %v1068, 2147483648
    %v1150 = vsel %vm1148, %v1149, %v1147
    %v1151 = vrsqrt.pop %v1069
    %v1152 = vmul.f32 %v1069, %v1151
    %vm1153 = vcmp.eq.f32.partialorder %v1069, inf
    %v1154 = vsel %vm1153, %v1069, %v1152
    %vm1155 = vcmp.eq.f32.partialorder %v1069, 0.0
    %v1156 = vand.u32 %v1069, 2147483648
    %v1157 = vsel %vm1155, %v1156, %v1154
    %v1158 = vrsqrt.pop %v1070
    %v1159 = vmul.f32 %v1070, %v1158
    %vm1160 = vcmp.eq.f32.partialorder %v1070, inf
    %v1161 = vsel %vm1160, %v1070, %v1159
    %vm1162 = vcmp.eq.f32.partialorder %v1070, 0.0
    %v1163 = vand.u32 %v1070, 2147483648
    %v1164 = vsel %vm1162, %v1163, %v1161
    %v1165 = vrsqrt.pop %v1071
    %v1166 = vmul.f32 %v1071, %v1165
    %vm1167 = vcmp.eq.f32.partialorder %v1071, inf
    %v1168 = vsel %vm1167, %v1071, %v1166
    %vm1169 = vcmp.eq.f32.partialorder %v1071, 0.0
    %v1170 = vand.u32 %v1071, 2147483648
    %v1171 = vsel %vm1169, %v1170, %v1168
    %v1172 = vrsqrt.pop %v1072
    %v1173 = vmul.f32 %v1072, %v1172
    %vm1174 = vcmp.eq.f32.partialorder %v1072, inf
    %v1175 = vsel %vm1174, %v1072, %v1173
    %vm1176 = vcmp.eq.f32.partialorder %v1072, 0.0
    %v1177 = vand.u32 %v1072, 2147483648
    %v1178 = vsel %vm1176, %v1177, %v1175
    %v1179 = vrsqrt.pop %v1073
    %v1180 = vmul.f32 %v1073, %v1179
    %vm1181 = vcmp.eq.f32.partialorder %v1073, inf
    %v1182 = vsel %vm1181, %v1073, %v1180
    %vm1183 = vcmp.eq.f32.partialorder %v1073, 0.0
    %v1184 = vand.u32 %v1073, 2147483648
    %v1185 = vsel %vm1183, %v1184, %v1182
    %vm1186 = vcmp.eq.s32.totalorder %v94, 2
    %vm1187 = vcmp.eq.s32.totalorder %v95, 2
    %v1188 = vadd.f32 %v1058, %v1059
    %v1189 = vadd.f32 %v1188, %v1060
    %v1190 = vadd.f32 %v1189, %v1061
    %v1191 = vadd.f32 %v1190, %v1062
    %v1192 = vadd.f32 %v1191, %v1063
    %v1193 = vadd.f32 %v1192, %v1064
    %v1194 = vadd.f32 %v1193, %v1065
    %v1195 = vadd.f32 %v1194, %v1066
    %v1196 = vadd.f32 %v1195, %v1067
    %v1197 = vadd.f32 %v1196, %v1068
    %v1198 = vadd.f32 %v1197, %v1069
    %v1199 = vadd.f32 %v1198, %v1070
    %v1200 = vadd.f32 %v1199, %v1071
    %v1201 = vadd.f32 %v1200, %v1072
    %v1202 = vadd.f32 %v1201, %v1073
    %v1203 = vrot.slane %v1202, 4
    %v1204 = vadd.f32 %v1202, %v1203
    %v1205 = vrot.slane %v1204, 2
    %v1206 = vadd.f32 %v1204, %v1205
    %v1207 = vrot.slane %v1206, 1
    %v1208 = vadd.f32 %v1206, %v1207
    %v1209 = vsel %vm1186, %v1208, %v841
    %v1210 = vsel %vm1187, %v1208, %v842
    %v1211 = vadd.f32 %v1080, %v1087
    %v1212 = vadd.f32 %v1211, %v1094
    %v1213 = vadd.f32 %v1212, %v1101
    %v1214 = vadd.f32 %v1213, %v1108
    %v1215 = vadd.f32 %v1214, %v1115
    %v1216 = vadd.f32 %v1215, %v1122
    %v1217 = vadd.f32 %v1216, %v1129
    %v1218 = vadd.f32 %v1217, %v1136
    %v1219 = vadd.f32 %v1218, %v1143
    %v1220 = vadd.f32 %v1219, %v1150
    %v1221 = vadd.f32 %v1220, %v1157
    %v1222 = vadd.f32 %v1221, %v1164
    %v1223 = vadd.f32 %v1222, %v1171
    %v1224 = vadd.f32 %v1223, %v1178
    %v1225 = vadd.f32 %v1224, %v1185
    %v1226 = vrot.slane %v1225, 4
    %v1227 = vadd.f32 %v1225, %v1226
    %v1228 = vrot.slane %v1227, 2
    %v1229 = vadd.f32 %v1227, %v1228
    %v1230 = vrot.slane %v1229, 1
    %v1231 = vadd.f32 %v1229, %v1230
    %v1232 = vsel %vm1186, %v1231, %v864
    %v1233 = vsel %vm1187, %v1231, %v865
    %1234 = vset.pattern.permute.xlu0 3
    %1235 = vperm.xlu0 %1234, %v60
    %v1236 = vpop.permute.xlu0 %1235
    %1238 = vset.pattern.permute.xlu0 3
    %1239 = vperm.xlu0 %1238, %v61
    %v1240 = vpop.permute.xlu0 %1239
    %1242 = vset.pattern.permute.xlu0 3
    %1243 = vperm.xlu0 %1242, %v62
    %v1244 = vpop.permute.xlu0 %1243
    %1246 = vset.pattern.permute.xlu0 3
    %1247 = vperm.xlu0 %1246, %v63
    %v1248 = vpop.permute.xlu0 %1247
    %1250 = vset.pattern.permute.xlu0 3
    %1251 = vperm.xlu0 %1250, %v64
    %v1252 = vpop.permute.xlu0 %1251
    %1254 = vset.pattern.permute.xlu0 3
    %1255 = vperm.xlu0 %1254, %v65
    %v1256 = vpop.permute.xlu0 %1255
    %1258 = vset.pattern.permute.xlu0 3
    %1259 = vperm.xlu0 %1258, %v66
    %v1260 = vpop.permute.xlu0 %1259
    %1262 = vset.pattern.permute.xlu0 3
    %1263 = vperm.xlu0 %1262, %v67
    %v1264 = vpop.permute.xlu0 %1263
    %1266 = vset.pattern.permute.xlu0 3
    %1267 = vperm.xlu0 %1266, %v68
    %v1268 = vpop.permute.xlu0 %1267
    %1270 = vset.pattern.permute.xlu0 3
    %1271 = vperm.xlu0 %1270, %v69
    %v1272 = vpop.permute.xlu0 %1271
    %1274 = vset.pattern.permute.xlu0 3
    %1275 = vperm.xlu0 %1274, %v70
    %v1276 = vpop.permute.xlu0 %1275
    %1278 = vset.pattern.permute.xlu0 3
    %1279 = vperm.xlu0 %1278, %v71
    %v1280 = vpop.permute.xlu0 %1279
    %1282 = vset.pattern.permute.xlu0 3
    %1283 = vperm.xlu0 %1282, %v72
    %v1284 = vpop.permute.xlu0 %1283
    %1286 = vset.pattern.permute.xlu0 3
    %1287 = vperm.xlu0 %1286, %v73
    %v1288 = vpop.permute.xlu0 %1287
    %1290 = vset.pattern.permute.xlu0 3
    %1291 = vperm.xlu0 %1290, %v74
    %v1292 = vpop.permute.xlu0 %1291
    %1294 = vset.pattern.permute.xlu0 3
    %1295 = vperm.xlu0 %1294, %v75
    %v1296 = vpop.permute.xlu0 %1295
    %v1298 = vsub.f32 %v28, %v1236
    %v1299 = vsub.f32 %v29, %v1240
    %v1300 = vsub.f32 %v30, %v1244
    %v1301 = vsub.f32 %v31, %v1248
    %v1302 = vsub.f32 %v32, %v1252
    %v1303 = vsub.f32 %v33, %v1256
    %v1304 = vsub.f32 %v34, %v1260
    %v1305 = vsub.f32 %v35, %v1264
    %v1306 = vsub.f32 %v36, %v1268
    %v1307 = vsub.f32 %v37, %v1272
    %v1308 = vsub.f32 %v38, %v1276
    %v1309 = vsub.f32 %v39, %v1280
    %v1310 = vsub.f32 %v40, %v1284
    %v1311 = vsub.f32 %v41, %v1288
    %v1312 = vsub.f32 %v42, %v1292
    %v1313 = vsub.f32 %v43, %v1296
    %1314 = vset.pattern.permute.xlu0 3
    %1315 = vperm.xlu0 %1314, %v76
    %v1316 = vpop.permute.xlu0 %1315
    %1318 = vset.pattern.permute.xlu0 3
    %1319 = vperm.xlu0 %1318, %v77
    %v1320 = vpop.permute.xlu0 %1319
    %1322 = vset.pattern.permute.xlu0 3
    %1323 = vperm.xlu0 %1322, %v78
    %v1324 = vpop.permute.xlu0 %1323
    %1326 = vset.pattern.permute.xlu0 3
    %1327 = vperm.xlu0 %1326, %v79
    %v1328 = vpop.permute.xlu0 %1327
    %1330 = vset.pattern.permute.xlu0 3
    %1331 = vperm.xlu0 %1330, %v80
    %v1332 = vpop.permute.xlu0 %1331
    %1334 = vset.pattern.permute.xlu0 3
    %1335 = vperm.xlu0 %1334, %v81
    %v1336 = vpop.permute.xlu0 %1335
    %1338 = vset.pattern.permute.xlu0 3
    %1339 = vperm.xlu0 %1338, %v82
    %v1340 = vpop.permute.xlu0 %1339
    %1342 = vset.pattern.permute.xlu0 3
    %1343 = vperm.xlu0 %1342, %v83
    %v1344 = vpop.permute.xlu0 %1343
    %1346 = vset.pattern.permute.xlu0 3
    %1347 = vperm.xlu0 %1346, %v84
    %v1348 = vpop.permute.xlu0 %1347
    %1350 = vset.pattern.permute.xlu0 3
    %1351 = vperm.xlu0 %1350, %v85
    %v1352 = vpop.permute.xlu0 %1351
    %1354 = vset.pattern.permute.xlu0 3
    %1355 = vperm.xlu0 %1354, %v86
    %v1356 = vpop.permute.xlu0 %1355
    %1358 = vset.pattern.permute.xlu0 3
    %1359 = vperm.xlu0 %1358, %v87
    %v1360 = vpop.permute.xlu0 %1359
    %1362 = vset.pattern.permute.xlu0 3
    %1363 = vperm.xlu0 %1362, %v88
    %v1364 = vpop.permute.xlu0 %1363
    %1366 = vset.pattern.permute.xlu0 3
    %1367 = vperm.xlu0 %1366, %v89
    %v1368 = vpop.permute.xlu0 %1367
    %1370 = vset.pattern.permute.xlu0 3
    %1371 = vperm.xlu0 %1370, %v90
    %v1372 = vpop.permute.xlu0 %1371
    %1374 = vset.pattern.permute.xlu0 3
    %1375 = vperm.xlu0 %1374, %v91
    %v1376 = vpop.permute.xlu0 %1375
    %v1378 = vsub.f32 %v44, %v1316
    %v1379 = vsub.f32 %v45, %v1320
    %v1380 = vsub.f32 %v46, %v1324
    %v1381 = vsub.f32 %v47, %v1328
    %v1382 = vsub.f32 %v48, %v1332
    %v1383 = vsub.f32 %v49, %v1336
    %v1384 = vsub.f32 %v50, %v1340
    %v1385 = vsub.f32 %v51, %v1344
    %v1386 = vsub.f32 %v52, %v1348
    %v1387 = vsub.f32 %v53, %v1352
    %v1388 = vsub.f32 %v54, %v1356
    %v1389 = vsub.f32 %v55, %v1360
    %v1390 = vsub.f32 %v56, %v1364
    %v1391 = vsub.f32 %v57, %v1368
    %v1392 = vsub.f32 %v58, %v1372
    %v1393 = vsub.f32 %v59, %v1376
    %v1394 = vmul.f32 %v1298, %v1298
    %v1395 = vmul.f32 %v1299, %v1299
    %v1396 = vmul.f32 %v1300, %v1300
    %v1397 = vmul.f32 %v1301, %v1301
    %v1398 = vmul.f32 %v1302, %v1302
    %v1399 = vmul.f32 %v1303, %v1303
    %v1400 = vmul.f32 %v1304, %v1304
    %v1401 = vmul.f32 %v1305, %v1305
    %v1402 = vmul.f32 %v1306, %v1306
    %v1403 = vmul.f32 %v1307, %v1307
    %v1404 = vmul.f32 %v1308, %v1308
    %v1405 = vmul.f32 %v1309, %v1309
    %v1406 = vmul.f32 %v1310, %v1310
    %v1407 = vmul.f32 %v1311, %v1311
    %v1408 = vmul.f32 %v1312, %v1312
    %v1409 = vmul.f32 %v1313, %v1313
    %v1410 = vmul.f32 %v1378, %v1378
    %v1411 = vmul.f32 %v1379, %v1379
    %v1412 = vmul.f32 %v1380, %v1380
    %v1413 = vmul.f32 %v1381, %v1381
    %v1414 = vmul.f32 %v1382, %v1382
    %v1415 = vmul.f32 %v1383, %v1383
    %v1416 = vmul.f32 %v1384, %v1384
    %v1417 = vmul.f32 %v1385, %v1385
    %v1418 = vmul.f32 %v1386, %v1386
    %v1419 = vmul.f32 %v1387, %v1387
    %v1420 = vmul.f32 %v1388, %v1388
    %v1421 = vmul.f32 %v1389, %v1389
    %v1422 = vmul.f32 %v1390, %v1390
    %v1423 = vmul.f32 %v1391, %v1391
    %v1424 = vmul.f32 %v1392, %v1392
    %v1425 = vmul.f32 %v1393, %v1393
    %v1426 = vadd.f32 %v1394, %v1410
    %v1427 = vadd.f32 %v1395, %v1411
    %v1428 = vadd.f32 %v1396, %v1412
    %v1429 = vadd.f32 %v1397, %v1413
    %v1430 = vadd.f32 %v1398, %v1414
    %v1431 = vadd.f32 %v1399, %v1415
    %v1432 = vadd.f32 %v1400, %v1416
    %v1433 = vadd.f32 %v1401, %v1417
    %v1434 = vadd.f32 %v1402, %v1418
    %v1435 = vadd.f32 %v1403, %v1419
    %v1436 = vadd.f32 %v1404, %v1420
    %v1437 = vadd.f32 %v1405, %v1421
    %v1438 = vadd.f32 %v1406, %v1422
    %v1439 = vadd.f32 %v1407, %v1423
    %v1440 = vadd.f32 %v1408, %v1424
    %v1441 = vadd.f32 %v1409, %v1425
    %v1442 = vrsqrt.pop %v1426
    %v1443 = vmul.f32 %v1426, %v1442
    %vm1444 = vcmp.eq.f32.partialorder %v1426, inf
    %v1445 = vsel %vm1444, %v1426, %v1443
    %vm1446 = vcmp.eq.f32.partialorder %v1426, 0.0
    %v1447 = vand.u32 %v1426, 2147483648
    %v1448 = vsel %vm1446, %v1447, %v1445
    %v1449 = vrsqrt.pop %v1427
    %v1450 = vmul.f32 %v1427, %v1449
    %vm1451 = vcmp.eq.f32.partialorder %v1427, inf
    %v1452 = vsel %vm1451, %v1427, %v1450
    %vm1453 = vcmp.eq.f32.partialorder %v1427, 0.0
    %v1454 = vand.u32 %v1427, 2147483648
    %v1455 = vsel %vm1453, %v1454, %v1452
    %v1456 = vrsqrt.pop %v1428
    %v1457 = vmul.f32 %v1428, %v1456
    %vm1458 = vcmp.eq.f32.partialorder %v1428, inf
    %v1459 = vsel %vm1458, %v1428, %v1457
    %vm1460 = vcmp.eq.f32.partialorder %v1428, 0.0
    %v1461 = vand.u32 %v1428, 2147483648
    %v1462 = vsel %vm1460, %v1461, %v1459
    %v1463 = vrsqrt.pop %v1429
    %v1464 = vmul.f32 %v1429, %v1463
    %vm1465 = vcmp.eq.f32.partialorder %v1429, inf
    %v1466 = vsel %vm1465, %v1429, %v1464
    %vm1467 = vcmp.eq.f32.partialorder %v1429, 0.0
    %v1468 = vand.u32 %v1429, 2147483648
    %v1469 = vsel %vm1467, %v1468, %v1466
    %v1470 = vrsqrt.pop %v1430
    %v1471 = vmul.f32 %v1430, %v1470
    %vm1472 = vcmp.eq.f32.partialorder %v1430, inf
    %v1473 = vsel %vm1472, %v1430, %v1471
    %vm1474 = vcmp.eq.f32.partialorder %v1430, 0.0
    %v1475 = vand.u32 %v1430, 2147483648
    %v1476 = vsel %vm1474, %v1475, %v1473
    %v1477 = vrsqrt.pop %v1431
    %v1478 = vmul.f32 %v1431, %v1477
    %vm1479 = vcmp.eq.f32.partialorder %v1431, inf
    %v1480 = vsel %vm1479, %v1431, %v1478
    %vm1481 = vcmp.eq.f32.partialorder %v1431, 0.0
    %v1482 = vand.u32 %v1431, 2147483648
    %v1483 = vsel %vm1481, %v1482, %v1480
    %v1484 = vrsqrt.pop %v1432
    %v1485 = vmul.f32 %v1432, %v1484
    %vm1486 = vcmp.eq.f32.partialorder %v1432, inf
    %v1487 = vsel %vm1486, %v1432, %v1485
    %vm1488 = vcmp.eq.f32.partialorder %v1432, 0.0
    %v1489 = vand.u32 %v1432, 2147483648
    %v1490 = vsel %vm1488, %v1489, %v1487
    %v1491 = vrsqrt.pop %v1433
    %v1492 = vmul.f32 %v1433, %v1491
    %vm1493 = vcmp.eq.f32.partialorder %v1433, inf
    %v1494 = vsel %vm1493, %v1433, %v1492
    %vm1495 = vcmp.eq.f32.partialorder %v1433, 0.0
    %v1496 = vand.u32 %v1433, 2147483648
    %v1497 = vsel %vm1495, %v1496, %v1494
    %v1498 = vrsqrt.pop %v1434
    %v1499 = vmul.f32 %v1434, %v1498
    %vm1500 = vcmp.eq.f32.partialorder %v1434, inf
    %v1501 = vsel %vm1500, %v1434, %v1499
    %vm1502 = vcmp.eq.f32.partialorder %v1434, 0.0
    %v1503 = vand.u32 %v1434, 2147483648
    %v1504 = vsel %vm1502, %v1503, %v1501
    %v1505 = vrsqrt.pop %v1435
    %v1506 = vmul.f32 %v1435, %v1505
    %vm1507 = vcmp.eq.f32.partialorder %v1435, inf
    %v1508 = vsel %vm1507, %v1435, %v1506
    %vm1509 = vcmp.eq.f32.partialorder %v1435, 0.0
    %v1510 = vand.u32 %v1435, 2147483648
    %v1511 = vsel %vm1509, %v1510, %v1508
    %v1512 = vrsqrt.pop %v1436
    %v1513 = vmul.f32 %v1436, %v1512
    %vm1514 = vcmp.eq.f32.partialorder %v1436, inf
    %v1515 = vsel %vm1514, %v1436, %v1513
    %vm1516 = vcmp.eq.f32.partialorder %v1436, 0.0
    %v1517 = vand.u32 %v1436, 2147483648
    %v1518 = vsel %vm1516, %v1517, %v1515
    %v1519 = vrsqrt.pop %v1437
    %v1520 = vmul.f32 %v1437, %v1519
    %vm1521 = vcmp.eq.f32.partialorder %v1437, inf
    %v1522 = vsel %vm1521, %v1437, %v1520
    %vm1523 = vcmp.eq.f32.partialorder %v1437, 0.0
    %v1524 = vand.u32 %v1437, 2147483648
    %v1525 = vsel %vm1523, %v1524, %v1522
    %v1526 = vrsqrt.pop %v1438
    %v1527 = vmul.f32 %v1438, %v1526
    %vm1528 = vcmp.eq.f32.partialorder %v1438, inf
    %v1529 = vsel %vm1528, %v1438, %v1527
    %vm1530 = vcmp.eq.f32.partialorder %v1438, 0.0
    %v1531 = vand.u32 %v1438, 2147483648
    %v1532 = vsel %vm1530, %v1531, %v1529
    %v1533 = vrsqrt.pop %v1439
    %v1534 = vmul.f32 %v1439, %v1533
    %vm1535 = vcmp.eq.f32.partialorder %v1439, inf
    %v1536 = vsel %vm1535, %v1439, %v1534
    %vm1537 = vcmp.eq.f32.partialorder %v1439, 0.0
    %v1538 = vand.u32 %v1439, 2147483648
    %v1539 = vsel %vm1537, %v1538, %v1536
    %v1540 = vrsqrt.pop %v1440
    %v1541 = vmul.f32 %v1440, %v1540
    %vm1542 = vcmp.eq.f32.partialorder %v1440, inf
    %v1543 = vsel %vm1542, %v1440, %v1541
    %vm1544 = vcmp.eq.f32.partialorder %v1440, 0.0
    %v1545 = vand.u32 %v1440, 2147483648
    %v1546 = vsel %vm1544, %v1545, %v1543
    %v1547 = vrsqrt.pop %v1441
    %v1548 = vmul.f32 %v1441, %v1547
    %vm1549 = vcmp.eq.f32.partialorder %v1441, inf
    %v1550 = vsel %vm1549, %v1441, %v1548
    %vm1551 = vcmp.eq.f32.partialorder %v1441, 0.0
    %v1552 = vand.u32 %v1441, 2147483648
    %v1553 = vsel %vm1551, %v1552, %v1550
    %vm1554 = vcmp.eq.s32.totalorder %v94, 3
    %vm1555 = vcmp.eq.s32.totalorder %v95, 3
    %v1556 = vadd.f32 %v1426, %v1427
    %v1557 = vadd.f32 %v1556, %v1428
    %v1558 = vadd.f32 %v1557, %v1429
    %v1559 = vadd.f32 %v1558, %v1430
    %v1560 = vadd.f32 %v1559, %v1431
    %v1561 = vadd.f32 %v1560, %v1432
    %v1562 = vadd.f32 %v1561, %v1433
    %v1563 = vadd.f32 %v1562, %v1434
    %v1564 = vadd.f32 %v1563, %v1435
    %v1565 = vadd.f32 %v1564, %v1436
    %v1566 = vadd.f32 %v1565, %v1437
    %v1567 = vadd.f32 %v1566, %v1438
    %v1568 = vadd.f32 %v1567, %v1439
    %v1569 = vadd.f32 %v1568, %v1440
    %v1570 = vadd.f32 %v1569, %v1441
    %v1571 = vrot.slane %v1570, 4
    %v1572 = vadd.f32 %v1570, %v1571
    %v1573 = vrot.slane %v1572, 2
    %v1574 = vadd.f32 %v1572, %v1573
    %v1575 = vrot.slane %v1574, 1
    %v1576 = vadd.f32 %v1574, %v1575
    %v1577 = vsel %vm1554, %v1576, %v1209
    %v1578 = vsel %vm1555, %v1576, %v1210
    %v1579 = vadd.f32 %v1448, %v1455
    %v1580 = vadd.f32 %v1579, %v1462
    %v1581 = vadd.f32 %v1580, %v1469
    %v1582 = vadd.f32 %v1581, %v1476
    %v1583 = vadd.f32 %v1582, %v1483
    %v1584 = vadd.f32 %v1583, %v1490
    %v1585 = vadd.f32 %v1584, %v1497
    %v1586 = vadd.f32 %v1585, %v1504
    %v1587 = vadd.f32 %v1586, %v1511
    %v1588 = vadd.f32 %v1587, %v1518
    %v1589 = vadd.f32 %v1588, %v1525
    %v1590 = vadd.f32 %v1589, %v1532
    %v1591 = vadd.f32 %v1590, %v1539
    %v1592 = vadd.f32 %v1591, %v1546
    %v1593 = vadd.f32 %v1592, %v1553
    %v1594 = vrot.slane %v1593, 4
    %v1595 = vadd.f32 %v1593, %v1594
    %v1596 = vrot.slane %v1595, 2
    %v1597 = vadd.f32 %v1595, %v1596
    %v1598 = vrot.slane %v1597, 1
    %v1599 = vadd.f32 %v1597, %v1598
    %v1600 = vsel %vm1554, %v1599, %v1232
    %v1601 = vsel %vm1555, %v1599, %v1233
    %1602 = vset.pattern.permute.xlu0 4
    %1603 = vperm.xlu0 %1602, %v60
    %v1604 = vpop.permute.xlu0 %1603
    %1606 = vset.pattern.permute.xlu0 4
    %1607 = vperm.xlu0 %1606, %v61
    %v1608 = vpop.permute.xlu0 %1607
    %1610 = vset.pattern.permute.xlu0 4
    %1611 = vperm.xlu0 %1610, %v62
    %v1612 = vpop.permute.xlu0 %1611
    %1614 = vset.pattern.permute.xlu0 4
    %1615 = vperm.xlu0 %1614, %v63
    %v1616 = vpop.permute.xlu0 %1615
    %1618 = vset.pattern.permute.xlu0 4
    %1619 = vperm.xlu0 %1618, %v64
    %v1620 = vpop.permute.xlu0 %1619
    %1622 = vset.pattern.permute.xlu0 4
    %1623 = vperm.xlu0 %1622, %v65
    %v1624 = vpop.permute.xlu0 %1623
    %1626 = vset.pattern.permute.xlu0 4
    %1627 = vperm.xlu0 %1626, %v66
    %v1628 = vpop.permute.xlu0 %1627
    %1630 = vset.pattern.permute.xlu0 4
    %1631 = vperm.xlu0 %1630, %v67
    %v1632 = vpop.permute.xlu0 %1631
    %1634 = vset.pattern.permute.xlu0 4
    %1635 = vperm.xlu0 %1634, %v68
    %v1636 = vpop.permute.xlu0 %1635
    %1638 = vset.pattern.permute.xlu0 4
    %1639 = vperm.xlu0 %1638, %v69
    %v1640 = vpop.permute.xlu0 %1639
    %1642 = vset.pattern.permute.xlu0 4
    %1643 = vperm.xlu0 %1642, %v70
    %v1644 = vpop.permute.xlu0 %1643
    %1646 = vset.pattern.permute.xlu0 4
    %1647 = vperm.xlu0 %1646, %v71
    %v1648 = vpop.permute.xlu0 %1647
    %1650 = vset.pattern.permute.xlu0 4
    %1651 = vperm.xlu0 %1650, %v72
    %v1652 = vpop.permute.xlu0 %1651
    %1654 = vset.pattern.permute.xlu0 4
    %1655 = vperm.xlu0 %1654, %v73
    %v1656 = vpop.permute.xlu0 %1655
    %1658 = vset.pattern.permute.xlu0 4
    %1659 = vperm.xlu0 %1658, %v74
    %v1660 = vpop.permute.xlu0 %1659
    %1662 = vset.pattern.permute.xlu0 4
    %1663 = vperm.xlu0 %1662, %v75
    %v1664 = vpop.permute.xlu0 %1663
    %v1666 = vsub.f32 %v28, %v1604
    %v1667 = vsub.f32 %v29, %v1608
    %v1668 = vsub.f32 %v30, %v1612
    %v1669 = vsub.f32 %v31, %v1616
    %v1670 = vsub.f32 %v32, %v1620
    %v1671 = vsub.f32 %v33, %v1624
    %v1672 = vsub.f32 %v34, %v1628
    %v1673 = vsub.f32 %v35, %v1632
    %v1674 = vsub.f32 %v36, %v1636
    %v1675 = vsub.f32 %v37, %v1640
    %v1676 = vsub.f32 %v38, %v1644
    %v1677 = vsub.f32 %v39, %v1648
    %v1678 = vsub.f32 %v40, %v1652
    %v1679 = vsub.f32 %v41, %v1656
    %v1680 = vsub.f32 %v42, %v1660
    %v1681 = vsub.f32 %v43, %v1664
    %1682 = vset.pattern.permute.xlu0 4
    %1683 = vperm.xlu0 %1682, %v76
    %v1684 = vpop.permute.xlu0 %1683
    %1686 = vset.pattern.permute.xlu0 4
    %1687 = vperm.xlu0 %1686, %v77
    %v1688 = vpop.permute.xlu0 %1687
    %1690 = vset.pattern.permute.xlu0 4
    %1691 = vperm.xlu0 %1690, %v78
    %v1692 = vpop.permute.xlu0 %1691
    %1694 = vset.pattern.permute.xlu0 4
    %1695 = vperm.xlu0 %1694, %v79
    %v1696 = vpop.permute.xlu0 %1695
    %1698 = vset.pattern.permute.xlu0 4
    %1699 = vperm.xlu0 %1698, %v80
    %v1700 = vpop.permute.xlu0 %1699
    %1702 = vset.pattern.permute.xlu0 4
    %1703 = vperm.xlu0 %1702, %v81
    %v1704 = vpop.permute.xlu0 %1703
    %1706 = vset.pattern.permute.xlu0 4
    %1707 = vperm.xlu0 %1706, %v82
    %v1708 = vpop.permute.xlu0 %1707
    %1710 = vset.pattern.permute.xlu0 4
    %1711 = vperm.xlu0 %1710, %v83
    %v1712 = vpop.permute.xlu0 %1711
    %1714 = vset.pattern.permute.xlu0 4
    %1715 = vperm.xlu0 %1714, %v84
    %v1716 = vpop.permute.xlu0 %1715
    %1718 = vset.pattern.permute.xlu0 4
    %1719 = vperm.xlu0 %1718, %v85
    %v1720 = vpop.permute.xlu0 %1719
    %1722 = vset.pattern.permute.xlu0 4
    %1723 = vperm.xlu0 %1722, %v86
    %v1724 = vpop.permute.xlu0 %1723
    %1726 = vset.pattern.permute.xlu0 4
    %1727 = vperm.xlu0 %1726, %v87
    %v1728 = vpop.permute.xlu0 %1727
    %1730 = vset.pattern.permute.xlu0 4
    %1731 = vperm.xlu0 %1730, %v88
    %v1732 = vpop.permute.xlu0 %1731
    %1734 = vset.pattern.permute.xlu0 4
    %1735 = vperm.xlu0 %1734, %v89
    %v1736 = vpop.permute.xlu0 %1735
    %1738 = vset.pattern.permute.xlu0 4
    %1739 = vperm.xlu0 %1738, %v90
    %v1740 = vpop.permute.xlu0 %1739
    %1742 = vset.pattern.permute.xlu0 4
    %1743 = vperm.xlu0 %1742, %v91
    %v1744 = vpop.permute.xlu0 %1743
    %v1746 = vsub.f32 %v44, %v1684
    %v1747 = vsub.f32 %v45, %v1688
    %v1748 = vsub.f32 %v46, %v1692
    %v1749 = vsub.f32 %v47, %v1696
    %v1750 = vsub.f32 %v48, %v1700
    %v1751 = vsub.f32 %v49, %v1704
    %v1752 = vsub.f32 %v50, %v1708
    %v1753 = vsub.f32 %v51, %v1712
    %v1754 = vsub.f32 %v52, %v1716
    %v1755 = vsub.f32 %v53, %v1720
    %v1756 = vsub.f32 %v54, %v1724
    %v1757 = vsub.f32 %v55, %v1728
    %v1758 = vsub.f32 %v56, %v1732
    %v1759 = vsub.f32 %v57, %v1736
    %v1760 = vsub.f32 %v58, %v1740
    %v1761 = vsub.f32 %v59, %v1744
    %v1762 = vmul.f32 %v1666, %v1666
    %v1763 = vmul.f32 %v1667, %v1667
    %v1764 = vmul.f32 %v1668, %v1668
    %v1765 = vmul.f32 %v1669, %v1669
    %v1766 = vmul.f32 %v1670, %v1670
    %v1767 = vmul.f32 %v1671, %v1671
    %v1768 = vmul.f32 %v1672, %v1672
    %v1769 = vmul.f32 %v1673, %v1673
    %v1770 = vmul.f32 %v1674, %v1674
    %v1771 = vmul.f32 %v1675, %v1675
    %v1772 = vmul.f32 %v1676, %v1676
    %v1773 = vmul.f32 %v1677, %v1677
    %v1774 = vmul.f32 %v1678, %v1678
    %v1775 = vmul.f32 %v1679, %v1679
    %v1776 = vmul.f32 %v1680, %v1680
    %v1777 = vmul.f32 %v1681, %v1681
    %v1778 = vmul.f32 %v1746, %v1746
    %v1779 = vmul.f32 %v1747, %v1747
    %v1780 = vmul.f32 %v1748, %v1748
    %v1781 = vmul.f32 %v1749, %v1749
    %v1782 = vmul.f32 %v1750, %v1750
    %v1783 = vmul.f32 %v1751, %v1751
    %v1784 = vmul.f32 %v1752, %v1752
    %v1785 = vmul.f32 %v1753, %v1753
    %v1786 = vmul.f32 %v1754, %v1754
    %v1787 = vmul.f32 %v1755, %v1755
    %v1788 = vmul.f32 %v1756, %v1756
    %v1789 = vmul.f32 %v1757, %v1757
    %v1790 = vmul.f32 %v1758, %v1758
    %v1791 = vmul.f32 %v1759, %v1759
    %v1792 = vmul.f32 %v1760, %v1760
    %v1793 = vmul.f32 %v1761, %v1761
    %v1794 = vadd.f32 %v1762, %v1778
    %v1795 = vadd.f32 %v1763, %v1779
    %v1796 = vadd.f32 %v1764, %v1780
    %v1797 = vadd.f32 %v1765, %v1781
    %v1798 = vadd.f32 %v1766, %v1782
    %v1799 = vadd.f32 %v1767, %v1783
    %v1800 = vadd.f32 %v1768, %v1784
    %v1801 = vadd.f32 %v1769, %v1785
    %v1802 = vadd.f32 %v1770, %v1786
    %v1803 = vadd.f32 %v1771, %v1787
    %v1804 = vadd.f32 %v1772, %v1788
    %v1805 = vadd.f32 %v1773, %v1789
    %v1806 = vadd.f32 %v1774, %v1790
    %v1807 = vadd.f32 %v1775, %v1791
    %v1808 = vadd.f32 %v1776, %v1792
    %v1809 = vadd.f32 %v1777, %v1793
    %v1810 = vrsqrt.pop %v1794
    %v1811 = vmul.f32 %v1794, %v1810
    %vm1812 = vcmp.eq.f32.partialorder %v1794, inf
    %v1813 = vsel %vm1812, %v1794, %v1811
    %vm1814 = vcmp.eq.f32.partialorder %v1794, 0.0
    %v1815 = vand.u32 %v1794, 2147483648
    %v1816 = vsel %vm1814, %v1815, %v1813
    %v1817 = vrsqrt.pop %v1795
    %v1818 = vmul.f32 %v1795, %v1817
    %vm1819 = vcmp.eq.f32.partialorder %v1795, inf
    %v1820 = vsel %vm1819, %v1795, %v1818
    %vm1821 = vcmp.eq.f32.partialorder %v1795, 0.0
    %v1822 = vand.u32 %v1795, 2147483648
    %v1823 = vsel %vm1821, %v1822, %v1820
    %v1824 = vrsqrt.pop %v1796
    %v1825 = vmul.f32 %v1796, %v1824
    %vm1826 = vcmp.eq.f32.partialorder %v1796, inf
    %v1827 = vsel %vm1826, %v1796, %v1825
    %vm1828 = vcmp.eq.f32.partialorder %v1796, 0.0
    %v1829 = vand.u32 %v1796, 2147483648
    %v1830 = vsel %vm1828, %v1829, %v1827
    %v1831 = vrsqrt.pop %v1797
    %v1832 = vmul.f32 %v1797, %v1831
    %vm1833 = vcmp.eq.f32.partialorder %v1797, inf
    %v1834 = vsel %vm1833, %v1797, %v1832
    %vm1835 = vcmp.eq.f32.partialorder %v1797, 0.0
    %v1836 = vand.u32 %v1797, 2147483648
    %v1837 = vsel %vm1835, %v1836, %v1834
    %v1838 = vrsqrt.pop %v1798
    %v1839 = vmul.f32 %v1798, %v1838
    %vm1840 = vcmp.eq.f32.partialorder %v1798, inf
    %v1841 = vsel %vm1840, %v1798, %v1839
    %vm1842 = vcmp.eq.f32.partialorder %v1798, 0.0
    %v1843 = vand.u32 %v1798, 2147483648
    %v1844 = vsel %vm1842, %v1843, %v1841
    %v1845 = vrsqrt.pop %v1799
    %v1846 = vmul.f32 %v1799, %v1845
    %vm1847 = vcmp.eq.f32.partialorder %v1799, inf
    %v1848 = vsel %vm1847, %v1799, %v1846
    %vm1849 = vcmp.eq.f32.partialorder %v1799, 0.0
    %v1850 = vand.u32 %v1799, 2147483648
    %v1851 = vsel %vm1849, %v1850, %v1848
    %v1852 = vrsqrt.pop %v1800
    %v1853 = vmul.f32 %v1800, %v1852
    %vm1854 = vcmp.eq.f32.partialorder %v1800, inf
    %v1855 = vsel %vm1854, %v1800, %v1853
    %vm1856 = vcmp.eq.f32.partialorder %v1800, 0.0
    %v1857 = vand.u32 %v1800, 2147483648
    %v1858 = vsel %vm1856, %v1857, %v1855
    %v1859 = vrsqrt.pop %v1801
    %v1860 = vmul.f32 %v1801, %v1859
    %vm1861 = vcmp.eq.f32.partialorder %v1801, inf
    %v1862 = vsel %vm1861, %v1801, %v1860
    %vm1863 = vcmp.eq.f32.partialorder %v1801, 0.0
    %v1864 = vand.u32 %v1801, 2147483648
    %v1865 = vsel %vm1863, %v1864, %v1862
    %v1866 = vrsqrt.pop %v1802
    %v1867 = vmul.f32 %v1802, %v1866
    %vm1868 = vcmp.eq.f32.partialorder %v1802, inf
    %v1869 = vsel %vm1868, %v1802, %v1867
    %vm1870 = vcmp.eq.f32.partialorder %v1802, 0.0
    %v1871 = vand.u32 %v1802, 2147483648
    %v1872 = vsel %vm1870, %v1871, %v1869
    %v1873 = vrsqrt.pop %v1803
    %v1874 = vmul.f32 %v1803, %v1873
    %vm1875 = vcmp.eq.f32.partialorder %v1803, inf
    %v1876 = vsel %vm1875, %v1803, %v1874
    %vm1877 = vcmp.eq.f32.partialorder %v1803, 0.0
    %v1878 = vand.u32 %v1803, 2147483648
    %v1879 = vsel %vm1877, %v1878, %v1876
    %v1880 = vrsqrt.pop %v1804
    %v1881 = vmul.f32 %v1804, %v1880
    %vm1882 = vcmp.eq.f32.partialorder %v1804, inf
    %v1883 = vsel %vm1882, %v1804, %v1881
    %vm1884 = vcmp.eq.f32.partialorder %v1804, 0.0
    %v1885 = vand.u32 %v1804, 2147483648
    %v1886 = vsel %vm1884, %v1885, %v1883
    %v1887 = vrsqrt.pop %v1805
    %v1888 = vmul.f32 %v1805, %v1887
    %vm1889 = vcmp.eq.f32.partialorder %v1805, inf
    %v1890 = vsel %vm1889, %v1805, %v1888
    %vm1891 = vcmp.eq.f32.partialorder %v1805, 0.0
    %v1892 = vand.u32 %v1805, 2147483648
    %v1893 = vsel %vm1891, %v1892, %v1890
    %v1894 = vrsqrt.pop %v1806
    %v1895 = vmul.f32 %v1806, %v1894
    %vm1896 = vcmp.eq.f32.partialorder %v1806, inf
    %v1897 = vsel %vm1896, %v1806, %v1895
    %vm1898 = vcmp.eq.f32.partialorder %v1806, 0.0
    %v1899 = vand.u32 %v1806, 2147483648
    %v1900 = vsel %vm1898, %v1899, %v1897
    %v1901 = vrsqrt.pop %v1807
    %v1902 = vmul.f32 %v1807, %v1901
    %vm1903 = vcmp.eq.f32.partialorder %v1807, inf
    %v1904 = vsel %vm1903, %v1807, %v1902
    %vm1905 = vcmp.eq.f32.partialorder %v1807, 0.0
    %v1906 = vand.u32 %v1807, 2147483648
    %v1907 = vsel %vm1905, %v1906, %v1904
    %v1908 = vrsqrt.pop %v1808
    %v1909 = vmul.f32 %v1808, %v1908
    %vm1910 = vcmp.eq.f32.partialorder %v1808, inf
    %v1911 = vsel %vm1910, %v1808, %v1909
    %vm1912 = vcmp.eq.f32.partialorder %v1808, 0.0
    %v1913 = vand.u32 %v1808, 2147483648
    %v1914 = vsel %vm1912, %v1913, %v1911
    %v1915 = vrsqrt.pop %v1809
    %v1916 = vmul.f32 %v1809, %v1915
    %vm1917 = vcmp.eq.f32.partialorder %v1809, inf
    %v1918 = vsel %vm1917, %v1809, %v1916
    %vm1919 = vcmp.eq.f32.partialorder %v1809, 0.0
    %v1920 = vand.u32 %v1809, 2147483648
    %v1921 = vsel %vm1919, %v1920, %v1918
    %vm1922 = vcmp.eq.s32.totalorder %v94, 4
    %vm1923 = vcmp.eq.s32.totalorder %v95, 4
    %v1924 = vadd.f32 %v1794, %v1795
    %v1925 = vadd.f32 %v1924, %v1796
    %v1926 = vadd.f32 %v1925, %v1797
    %v1927 = vadd.f32 %v1926, %v1798
    %v1928 = vadd.f32 %v1927, %v1799
    %v1929 = vadd.f32 %v1928, %v1800
    %v1930 = vadd.f32 %v1929, %v1801
    %v1931 = vadd.f32 %v1930, %v1802
    %v1932 = vadd.f32 %v1931, %v1803
    %v1933 = vadd.f32 %v1932, %v1804
    %v1934 = vadd.f32 %v1933, %v1805
    %v1935 = vadd.f32 %v1934, %v1806
    %v1936 = vadd.f32 %v1935, %v1807
    %v1937 = vadd.f32 %v1936, %v1808
    %v1938 = vadd.f32 %v1937, %v1809
    %v1939 = vrot.slane %v1938, 4
    %v1940 = vadd.f32 %v1938, %v1939
    %v1941 = vrot.slane %v1940, 2
    %v1942 = vadd.f32 %v1940, %v1941
    %v1943 = vrot.slane %v1942, 1
    %v1944 = vadd.f32 %v1942, %v1943
    %v1945 = vsel %vm1922, %v1944, %v1577
    %v1946 = vsel %vm1923, %v1944, %v1578
    %v1947 = vadd.f32 %v1816, %v1823
    %v1948 = vadd.f32 %v1947, %v1830
    %v1949 = vadd.f32 %v1948, %v1837
    %v1950 = vadd.f32 %v1949, %v1844
    %v1951 = vadd.f32 %v1950, %v1851
    %v1952 = vadd.f32 %v1951, %v1858
    %v1953 = vadd.f32 %v1952, %v1865
    %v1954 = vadd.f32 %v1953, %v1872
    %v1955 = vadd.f32 %v1954, %v1879
    %v1956 = vadd.f32 %v1955, %v1886
    %v1957 = vadd.f32 %v1956, %v1893
    %v1958 = vadd.f32 %v1957, %v1900
    %v1959 = vadd.f32 %v1958, %v1907
    %v1960 = vadd.f32 %v1959, %v1914
    %v1961 = vadd.f32 %v1960, %v1921
    %v1962 = vrot.slane %v1961, 4
    %v1963 = vadd.f32 %v1961, %v1962
    %v1964 = vrot.slane %v1963, 2
    %v1965 = vadd.f32 %v1963, %v1964
    %v1966 = vrot.slane %v1965, 1
    %v1967 = vadd.f32 %v1965, %v1966
    %v1968 = vsel %vm1922, %v1967, %v1600
    %v1969 = vsel %vm1923, %v1967, %v1601
    %1970 = vset.pattern.permute.xlu0 5
    %1971 = vperm.xlu0 %1970, %v60
    %v1972 = vpop.permute.xlu0 %1971
    %1974 = vset.pattern.permute.xlu0 5
    %1975 = vperm.xlu0 %1974, %v61
    %v1976 = vpop.permute.xlu0 %1975
    %1978 = vset.pattern.permute.xlu0 5
    %1979 = vperm.xlu0 %1978, %v62
    %v1980 = vpop.permute.xlu0 %1979
    %1982 = vset.pattern.permute.xlu0 5
    %1983 = vperm.xlu0 %1982, %v63
    %v1984 = vpop.permute.xlu0 %1983
    %1986 = vset.pattern.permute.xlu0 5
    %1987 = vperm.xlu0 %1986, %v64
    %v1988 = vpop.permute.xlu0 %1987
    %1990 = vset.pattern.permute.xlu0 5
    %1991 = vperm.xlu0 %1990, %v65
    %v1992 = vpop.permute.xlu0 %1991
    %1994 = vset.pattern.permute.xlu0 5
    %1995 = vperm.xlu0 %1994, %v66
    %v1996 = vpop.permute.xlu0 %1995
    %1998 = vset.pattern.permute.xlu0 5
    %1999 = vperm.xlu0 %1998, %v67
    %v2000 = vpop.permute.xlu0 %1999
    %2002 = vset.pattern.permute.xlu0 5
    %2003 = vperm.xlu0 %2002, %v68
    %v2004 = vpop.permute.xlu0 %2003
    %2006 = vset.pattern.permute.xlu0 5
    %2007 = vperm.xlu0 %2006, %v69
    %v2008 = vpop.permute.xlu0 %2007
    %2010 = vset.pattern.permute.xlu0 5
    %2011 = vperm.xlu0 %2010, %v70
    %v2012 = vpop.permute.xlu0 %2011
    %2014 = vset.pattern.permute.xlu0 5
    %2015 = vperm.xlu0 %2014, %v71
    %v2016 = vpop.permute.xlu0 %2015
    %2018 = vset.pattern.permute.xlu0 5
    %2019 = vperm.xlu0 %2018, %v72
    %v2020 = vpop.permute.xlu0 %2019
    %2022 = vset.pattern.permute.xlu0 5
    %2023 = vperm.xlu0 %2022, %v73
    %v2024 = vpop.permute.xlu0 %2023
    %2026 = vset.pattern.permute.xlu0 5
    %2027 = vperm.xlu0 %2026, %v74
    %v2028 = vpop.permute.xlu0 %2027
    %2030 = vset.pattern.permute.xlu0 5
    %2031 = vperm.xlu0 %2030, %v75
    %v2032 = vpop.permute.xlu0 %2031
    %v2034 = vsub.f32 %v28, %v1972
    %v2035 = vsub.f32 %v29, %v1976
    %v2036 = vsub.f32 %v30, %v1980
    %v2037 = vsub.f32 %v31, %v1984
    %v2038 = vsub.f32 %v32, %v1988
    %v2039 = vsub.f32 %v33, %v1992
    %v2040 = vsub.f32 %v34, %v1996
    %v2041 = vsub.f32 %v35, %v2000
    %v2042 = vsub.f32 %v36, %v2004
    %v2043 = vsub.f32 %v37, %v2008
    %v2044 = vsub.f32 %v38, %v2012
    %v2045 = vsub.f32 %v39, %v2016
    %v2046 = vsub.f32 %v40, %v2020
    %v2047 = vsub.f32 %v41, %v2024
    %v2048 = vsub.f32 %v42, %v2028
    %v2049 = vsub.f32 %v43, %v2032
    %2050 = vset.pattern.permute.xlu0 5
    %2051 = vperm.xlu0 %2050, %v76
    %v2052 = vpop.permute.xlu0 %2051
    %2054 = vset.pattern.permute.xlu0 5
    %2055 = vperm.xlu0 %2054, %v77
    %v2056 = vpop.permute.xlu0 %2055
    %2058 = vset.pattern.permute.xlu0 5
    %2059 = vperm.xlu0 %2058, %v78
    %v2060 = vpop.permute.xlu0 %2059
    %2062 = vset.pattern.permute.xlu0 5
    %2063 = vperm.xlu0 %2062, %v79
    %v2064 = vpop.permute.xlu0 %2063
    %2066 = vset.pattern.permute.xlu0 5
    %2067 = vperm.xlu0 %2066, %v80
    %v2068 = vpop.permute.xlu0 %2067
    %2070 = vset.pattern.permute.xlu0 5
    %2071 = vperm.xlu0 %2070, %v81
    %v2072 = vpop.permute.xlu0 %2071
    %2074 = vset.pattern.permute.xlu0 5
    %2075 = vperm.xlu0 %2074, %v82
    %v2076 = vpop.permute.xlu0 %2075
    %2078 = vset.pattern.permute.xlu0 5
    %2079 = vperm.xlu0 %2078, %v83
    %v2080 = vpop.permute.xlu0 %2079
    %2082 = vset.pattern.permute.xlu0 5
    %2083 = vperm.xlu0 %2082, %v84
    %v2084 = vpop.permute.xlu0 %2083
    %2086 = vset.pattern.permute.xlu0 5
    %2087 = vperm.xlu0 %2086, %v85
    %v2088 = vpop.permute.xlu0 %2087
    %2090 = vset.pattern.permute.xlu0 5
    %2091 = vperm.xlu0 %2090, %v86
    %v2092 = vpop.permute.xlu0 %2091
    %2094 = vset.pattern.permute.xlu0 5
    %2095 = vperm.xlu0 %2094, %v87
    %v2096 = vpop.permute.xlu0 %2095
    %2098 = vset.pattern.permute.xlu0 5
    %2099 = vperm.xlu0 %2098, %v88
    %v2100 = vpop.permute.xlu0 %2099
    %2102 = vset.pattern.permute.xlu0 5
    %2103 = vperm.xlu0 %2102, %v89
    %v2104 = vpop.permute.xlu0 %2103
    %2106 = vset.pattern.permute.xlu0 5
    %2107 = vperm.xlu0 %2106, %v90
    %v2108 = vpop.permute.xlu0 %2107
    %2110 = vset.pattern.permute.xlu0 5
    %2111 = vperm.xlu0 %2110, %v91
    %v2112 = vpop.permute.xlu0 %2111
    %v2114 = vsub.f32 %v44, %v2052
    %v2115 = vsub.f32 %v45, %v2056
    %v2116 = vsub.f32 %v46, %v2060
    %v2117 = vsub.f32 %v47, %v2064
    %v2118 = vsub.f32 %v48, %v2068
    %v2119 = vsub.f32 %v49, %v2072
    %v2120 = vsub.f32 %v50, %v2076
    %v2121 = vsub.f32 %v51, %v2080
    %v2122 = vsub.f32 %v52, %v2084
    %v2123 = vsub.f32 %v53, %v2088
    %v2124 = vsub.f32 %v54, %v2092
    %v2125 = vsub.f32 %v55, %v2096
    %v2126 = vsub.f32 %v56, %v2100
    %v2127 = vsub.f32 %v57, %v2104
    %v2128 = vsub.f32 %v58, %v2108
    %v2129 = vsub.f32 %v59, %v2112
    %v2130 = vmul.f32 %v2034, %v2034
    %v2131 = vmul.f32 %v2035, %v2035
    %v2132 = vmul.f32 %v2036, %v2036
    %v2133 = vmul.f32 %v2037, %v2037
    %v2134 = vmul.f32 %v2038, %v2038
    %v2135 = vmul.f32 %v2039, %v2039
    %v2136 = vmul.f32 %v2040, %v2040
    %v2137 = vmul.f32 %v2041, %v2041
    %v2138 = vmul.f32 %v2042, %v2042
    %v2139 = vmul.f32 %v2043, %v2043
    %v2140 = vmul.f32 %v2044, %v2044
    %v2141 = vmul.f32 %v2045, %v2045
    %v2142 = vmul.f32 %v2046, %v2046
    %v2143 = vmul.f32 %v2047, %v2047
    %v2144 = vmul.f32 %v2048, %v2048
    %v2145 = vmul.f32 %v2049, %v2049
    %v2146 = vmul.f32 %v2114, %v2114
    %v2147 = vmul.f32 %v2115, %v2115
    %v2148 = vmul.f32 %v2116, %v2116
    %v2149 = vmul.f32 %v2117, %v2117
    %v2150 = vmul.f32 %v2118, %v2118
    %v2151 = vmul.f32 %v2119, %v2119
    %v2152 = vmul.f32 %v2120, %v2120
    %v2153 = vmul.f32 %v2121, %v2121
    %v2154 = vmul.f32 %v2122, %v2122
    %v2155 = vmul.f32 %v2123, %v2123
    %v2156 = vmul.f32 %v2124, %v2124
    %v2157 = vmul.f32 %v2125, %v2125
    %v2158 = vmul.f32 %v2126, %v2126
    %v2159 = vmul.f32 %v2127, %v2127
    %v2160 = vmul.f32 %v2128, %v2128
    %v2161 = vmul.f32 %v2129, %v2129
    %v2162 = vadd.f32 %v2130, %v2146
    %v2163 = vadd.f32 %v2131, %v2147
    %v2164 = vadd.f32 %v2132, %v2148
    %v2165 = vadd.f32 %v2133, %v2149
    %v2166 = vadd.f32 %v2134, %v2150
    %v2167 = vadd.f32 %v2135, %v2151
    %v2168 = vadd.f32 %v2136, %v2152
    %v2169 = vadd.f32 %v2137, %v2153
    %v2170 = vadd.f32 %v2138, %v2154
    %v2171 = vadd.f32 %v2139, %v2155
    %v2172 = vadd.f32 %v2140, %v2156
    %v2173 = vadd.f32 %v2141, %v2157
    %v2174 = vadd.f32 %v2142, %v2158
    %v2175 = vadd.f32 %v2143, %v2159
    %v2176 = vadd.f32 %v2144, %v2160
    %v2177 = vadd.f32 %v2145, %v2161
    %v2178 = vrsqrt.pop %v2162
    %v2179 = vmul.f32 %v2162, %v2178
    %vm2180 = vcmp.eq.f32.partialorder %v2162, inf
    %v2181 = vsel %vm2180, %v2162, %v2179
    %vm2182 = vcmp.eq.f32.partialorder %v2162, 0.0
    %v2183 = vand.u32 %v2162, 2147483648
    %v2184 = vsel %vm2182, %v2183, %v2181
    %v2185 = vrsqrt.pop %v2163
    %v2186 = vmul.f32 %v2163, %v2185
    %vm2187 = vcmp.eq.f32.partialorder %v2163, inf
    %v2188 = vsel %vm2187, %v2163, %v2186
    %vm2189 = vcmp.eq.f32.partialorder %v2163, 0.0
    %v2190 = vand.u32 %v2163, 2147483648
    %v2191 = vsel %vm2189, %v2190, %v2188
    %v2192 = vrsqrt.pop %v2164
    %v2193 = vmul.f32 %v2164, %v2192
    %vm2194 = vcmp.eq.f32.partialorder %v2164, inf
    %v2195 = vsel %vm2194, %v2164, %v2193
    %vm2196 = vcmp.eq.f32.partialorder %v2164, 0.0
    %v2197 = vand.u32 %v2164, 2147483648
    %v2198 = vsel %vm2196, %v2197, %v2195
    %v2199 = vrsqrt.pop %v2165
    %v2200 = vmul.f32 %v2165, %v2199
    %vm2201 = vcmp.eq.f32.partialorder %v2165, inf
    %v2202 = vsel %vm2201, %v2165, %v2200
    %vm2203 = vcmp.eq.f32.partialorder %v2165, 0.0
    %v2204 = vand.u32 %v2165, 2147483648
    %v2205 = vsel %vm2203, %v2204, %v2202
    %v2206 = vrsqrt.pop %v2166
    %v2207 = vmul.f32 %v2166, %v2206
    %vm2208 = vcmp.eq.f32.partialorder %v2166, inf
    %v2209 = vsel %vm2208, %v2166, %v2207
    %vm2210 = vcmp.eq.f32.partialorder %v2166, 0.0
    %v2211 = vand.u32 %v2166, 2147483648
    %v2212 = vsel %vm2210, %v2211, %v2209
    %v2213 = vrsqrt.pop %v2167
    %v2214 = vmul.f32 %v2167, %v2213
    %vm2215 = vcmp.eq.f32.partialorder %v2167, inf
    %v2216 = vsel %vm2215, %v2167, %v2214
    %vm2217 = vcmp.eq.f32.partialorder %v2167, 0.0
    %v2218 = vand.u32 %v2167, 2147483648
    %v2219 = vsel %vm2217, %v2218, %v2216
    %v2220 = vrsqrt.pop %v2168
    %v2221 = vmul.f32 %v2168, %v2220
    %vm2222 = vcmp.eq.f32.partialorder %v2168, inf
    %v2223 = vsel %vm2222, %v2168, %v2221
    %vm2224 = vcmp.eq.f32.partialorder %v2168, 0.0
    %v2225 = vand.u32 %v2168, 2147483648
    %v2226 = vsel %vm2224, %v2225, %v2223
    %v2227 = vrsqrt.pop %v2169
    %v2228 = vmul.f32 %v2169, %v2227
    %vm2229 = vcmp.eq.f32.partialorder %v2169, inf
    %v2230 = vsel %vm2229, %v2169, %v2228
    %vm2231 = vcmp.eq.f32.partialorder %v2169, 0.0
    %v2232 = vand.u32 %v2169, 2147483648
    %v2233 = vsel %vm2231, %v2232, %v2230
    %v2234 = vrsqrt.pop %v2170
    %v2235 = vmul.f32 %v2170, %v2234
    %vm2236 = vcmp.eq.f32.partialorder %v2170, inf
    %v2237 = vsel %vm2236, %v2170, %v2235
    %vm2238 = vcmp.eq.f32.partialorder %v2170, 0.0
    %v2239 = vand.u32 %v2170, 2147483648
    %v2240 = vsel %vm2238, %v2239, %v2237
    %v2241 = vrsqrt.pop %v2171
    %v2242 = vmul.f32 %v2171, %v2241
    %vm2243 = vcmp.eq.f32.partialorder %v2171, inf
    %v2244 = vsel %vm2243, %v2171, %v2242
    %vm2245 = vcmp.eq.f32.partialorder %v2171, 0.0
    %v2246 = vand.u32 %v2171, 2147483648
    %v2247 = vsel %vm2245, %v2246, %v2244
    %v2248 = vrsqrt.pop %v2172
    %v2249 = vmul.f32 %v2172, %v2248
    %vm2250 = vcmp.eq.f32.partialorder %v2172, inf
    %v2251 = vsel %vm2250, %v2172, %v2249
    %vm2252 = vcmp.eq.f32.partialorder %v2172, 0.0
    %v2253 = vand.u32 %v2172, 2147483648
    %v2254 = vsel %vm2252, %v2253, %v2251
    %v2255 = vrsqrt.pop %v2173
    %v2256 = vmul.f32 %v2173, %v2255
    %vm2257 = vcmp.eq.f32.partialorder %v2173, inf
    %v2258 = vsel %vm2257, %v2173, %v2256
    %vm2259 = vcmp.eq.f32.partialorder %v2173, 0.0
    %v2260 = vand.u32 %v2173, 2147483648
    %v2261 = vsel %vm2259, %v2260, %v2258
    %v2262 = vrsqrt.pop %v2174
    %v2263 = vmul.f32 %v2174, %v2262
    %vm2264 = vcmp.eq.f32.partialorder %v2174, inf
    %v2265 = vsel %vm2264, %v2174, %v2263
    %vm2266 = vcmp.eq.f32.partialorder %v2174, 0.0
    %v2267 = vand.u32 %v2174, 2147483648
    %v2268 = vsel %vm2266, %v2267, %v2265
    %v2269 = vrsqrt.pop %v2175
    %v2270 = vmul.f32 %v2175, %v2269
    %vm2271 = vcmp.eq.f32.partialorder %v2175, inf
    %v2272 = vsel %vm2271, %v2175, %v2270
    %vm2273 = vcmp.eq.f32.partialorder %v2175, 0.0
    %v2274 = vand.u32 %v2175, 2147483648
    %v2275 = vsel %vm2273, %v2274, %v2272
    %v2276 = vrsqrt.pop %v2176
    %v2277 = vmul.f32 %v2176, %v2276
    %vm2278 = vcmp.eq.f32.partialorder %v2176, inf
    %v2279 = vsel %vm2278, %v2176, %v2277
    %vm2280 = vcmp.eq.f32.partialorder %v2176, 0.0
    %v2281 = vand.u32 %v2176, 2147483648
    %v2282 = vsel %vm2280, %v2281, %v2279
    %v2283 = vrsqrt.pop %v2177
    %v2284 = vmul.f32 %v2177, %v2283
    %vm2285 = vcmp.eq.f32.partialorder %v2177, inf
    %v2286 = vsel %vm2285, %v2177, %v2284
    %vm2287 = vcmp.eq.f32.partialorder %v2177, 0.0
    %v2288 = vand.u32 %v2177, 2147483648
    %v2289 = vsel %vm2287, %v2288, %v2286
    %vm2290 = vcmp.eq.s32.totalorder %v94, 5
    %vm2291 = vcmp.eq.s32.totalorder %v95, 5
    %v2292 = vadd.f32 %v2162, %v2163
    %v2293 = vadd.f32 %v2292, %v2164
    %v2294 = vadd.f32 %v2293, %v2165
    %v2295 = vadd.f32 %v2294, %v2166
    %v2296 = vadd.f32 %v2295, %v2167
    %v2297 = vadd.f32 %v2296, %v2168
    %v2298 = vadd.f32 %v2297, %v2169
    %v2299 = vadd.f32 %v2298, %v2170
    %v2300 = vadd.f32 %v2299, %v2171
    %v2301 = vadd.f32 %v2300, %v2172
    %v2302 = vadd.f32 %v2301, %v2173
    %v2303 = vadd.f32 %v2302, %v2174
    %v2304 = vadd.f32 %v2303, %v2175
    %v2305 = vadd.f32 %v2304, %v2176
    %v2306 = vadd.f32 %v2305, %v2177
    %v2307 = vrot.slane %v2306, 4
    %v2308 = vadd.f32 %v2306, %v2307
    %v2309 = vrot.slane %v2308, 2
    %v2310 = vadd.f32 %v2308, %v2309
    %v2311 = vrot.slane %v2310, 1
    %v2312 = vadd.f32 %v2310, %v2311
    %v2313 = vsel %vm2290, %v2312, %v1945
    %v2314 = vsel %vm2291, %v2312, %v1946
    %v2315 = vadd.f32 %v2184, %v2191
    %v2316 = vadd.f32 %v2315, %v2198
    %v2317 = vadd.f32 %v2316, %v2205
    %v2318 = vadd.f32 %v2317, %v2212
    %v2319 = vadd.f32 %v2318, %v2219
    %v2320 = vadd.f32 %v2319, %v2226
    %v2321 = vadd.f32 %v2320, %v2233
    %v2322 = vadd.f32 %v2321, %v2240
    %v2323 = vadd.f32 %v2322, %v2247
    %v2324 = vadd.f32 %v2323, %v2254
    %v2325 = vadd.f32 %v2324, %v2261
    %v2326 = vadd.f32 %v2325, %v2268
    %v2327 = vadd.f32 %v2326, %v2275
    %v2328 = vadd.f32 %v2327, %v2282
    %v2329 = vadd.f32 %v2328, %v2289
    %v2330 = vrot.slane %v2329, 4
    %v2331 = vadd.f32 %v2329, %v2330
    %v2332 = vrot.slane %v2331, 2
    %v2333 = vadd.f32 %v2331, %v2332
    %v2334 = vrot.slane %v2333, 1
    %v2335 = vadd.f32 %v2333, %v2334
    %v2336 = vsel %vm2290, %v2335, %v1968
    %v2337 = vsel %vm2291, %v2335, %v1969
    %2338 = vset.pattern.permute.xlu0 6
    %2339 = vperm.xlu0 %2338, %v60
    %v2340 = vpop.permute.xlu0 %2339
    %2342 = vset.pattern.permute.xlu0 6
    %2343 = vperm.xlu0 %2342, %v61
    %v2344 = vpop.permute.xlu0 %2343
    %2346 = vset.pattern.permute.xlu0 6
    %2347 = vperm.xlu0 %2346, %v62
    %v2348 = vpop.permute.xlu0 %2347
    %2350 = vset.pattern.permute.xlu0 6
    %2351 = vperm.xlu0 %2350, %v63
    %v2352 = vpop.permute.xlu0 %2351
    %2354 = vset.pattern.permute.xlu0 6
    %2355 = vperm.xlu0 %2354, %v64
    %v2356 = vpop.permute.xlu0 %2355
    %2358 = vset.pattern.permute.xlu0 6
    %2359 = vperm.xlu0 %2358, %v65
    %v2360 = vpop.permute.xlu0 %2359
    %2362 = vset.pattern.permute.xlu0 6
    %2363 = vperm.xlu0 %2362, %v66
    %v2364 = vpop.permute.xlu0 %2363
    %2366 = vset.pattern.permute.xlu0 6
    %2367 = vperm.xlu0 %2366, %v67
    %v2368 = vpop.permute.xlu0 %2367
    %2370 = vset.pattern.permute.xlu0 6
    %2371 = vperm.xlu0 %2370, %v68
    %v2372 = vpop.permute.xlu0 %2371
    %2374 = vset.pattern.permute.xlu0 6
    %2375 = vperm.xlu0 %2374, %v69
    %v2376 = vpop.permute.xlu0 %2375
    %2378 = vset.pattern.permute.xlu0 6
    %2379 = vperm.xlu0 %2378, %v70
    %v2380 = vpop.permute.xlu0 %2379
    %2382 = vset.pattern.permute.xlu0 6
    %2383 = vperm.xlu0 %2382, %v71
    %v2384 = vpop.permute.xlu0 %2383
    %2386 = vset.pattern.permute.xlu0 6
    %2387 = vperm.xlu0 %2386, %v72
    %v2388 = vpop.permute.xlu0 %2387
    %2390 = vset.pattern.permute.xlu0 6
    %2391 = vperm.xlu0 %2390, %v73
    %v2392 = vpop.permute.xlu0 %2391
    %2394 = vset.pattern.permute.xlu0 6
    %2395 = vperm.xlu0 %2394, %v74
    %v2396 = vpop.permute.xlu0 %2395
    %2398 = vset.pattern.permute.xlu0 6
    %2399 = vperm.xlu0 %2398, %v75
    %v2400 = vpop.permute.xlu0 %2399
    %v2402 = vsub.f32 %v28, %v2340
    %v2403 = vsub.f32 %v29, %v2344
    %v2404 = vsub.f32 %v30, %v2348
    %v2405 = vsub.f32 %v31, %v2352
    %v2406 = vsub.f32 %v32, %v2356
    %v2407 = vsub.f32 %v33, %v2360
    %v2408 = vsub.f32 %v34, %v2364
    %v2409 = vsub.f32 %v35, %v2368
    %v2410 = vsub.f32 %v36, %v2372
    %v2411 = vsub.f32 %v37, %v2376
    %v2412 = vsub.f32 %v38, %v2380
    %v2413 = vsub.f32 %v39, %v2384
    %v2414 = vsub.f32 %v40, %v2388
    %v2415 = vsub.f32 %v41, %v2392
    %v2416 = vsub.f32 %v42, %v2396
    %v2417 = vsub.f32 %v43, %v2400
    %2418 = vset.pattern.permute.xlu0 6
    %2419 = vperm.xlu0 %2418, %v76
    %v2420 = vpop.permute.xlu0 %2419
    %2422 = vset.pattern.permute.xlu0 6
    %2423 = vperm.xlu0 %2422, %v77
    %v2424 = vpop.permute.xlu0 %2423
    %2426 = vset.pattern.permute.xlu0 6
    %2427 = vperm.xlu0 %2426, %v78
    %v2428 = vpop.permute.xlu0 %2427
    %2430 = vset.pattern.permute.xlu0 6
    %2431 = vperm.xlu0 %2430, %v79
    %v2432 = vpop.permute.xlu0 %2431
    %2434 = vset.pattern.permute.xlu0 6
    %2435 = vperm.xlu0 %2434, %v80
    %v2436 = vpop.permute.xlu0 %2435
    %2438 = vset.pattern.permute.xlu0 6
    %2439 = vperm.xlu0 %2438, %v81
    %v2440 = vpop.permute.xlu0 %2439
    %2442 = vset.pattern.permute.xlu0 6
    %2443 = vperm.xlu0 %2442, %v82
    %v2444 = vpop.permute.xlu0 %2443
    %2446 = vset.pattern.permute.xlu0 6
    %2447 = vperm.xlu0 %2446, %v83
    %v2448 = vpop.permute.xlu0 %2447
    %2450 = vset.pattern.permute.xlu0 6
    %2451 = vperm.xlu0 %2450, %v84
    %v2452 = vpop.permute.xlu0 %2451
    %2454 = vset.pattern.permute.xlu0 6
    %2455 = vperm.xlu0 %2454, %v85
    %v2456 = vpop.permute.xlu0 %2455
    %2458 = vset.pattern.permute.xlu0 6
    %2459 = vperm.xlu0 %2458, %v86
    %v2460 = vpop.permute.xlu0 %2459
    %2462 = vset.pattern.permute.xlu0 6
    %2463 = vperm.xlu0 %2462, %v87
    %v2464 = vpop.permute.xlu0 %2463
    %2466 = vset.pattern.permute.xlu0 6
    %2467 = vperm.xlu0 %2466, %v88
    %v2468 = vpop.permute.xlu0 %2467
    %2470 = vset.pattern.permute.xlu0 6
    %2471 = vperm.xlu0 %2470, %v89
    %v2472 = vpop.permute.xlu0 %2471
    %2474 = vset.pattern.permute.xlu0 6
    %2475 = vperm.xlu0 %2474, %v90
    %v2476 = vpop.permute.xlu0 %2475
    %2478 = vset.pattern.permute.xlu0 6
    %2479 = vperm.xlu0 %2478, %v91
    %v2480 = vpop.permute.xlu0 %2479
    %v2482 = vsub.f32 %v44, %v2420
    %v2483 = vsub.f32 %v45, %v2424
    %v2484 = vsub.f32 %v46, %v2428
    %v2485 = vsub.f32 %v47, %v2432
    %v2486 = vsub.f32 %v48, %v2436
    %v2487 = vsub.f32 %v49, %v2440
    %v2488 = vsub.f32 %v50, %v2444
    %v2489 = vsub.f32 %v51, %v2448
    %v2490 = vsub.f32 %v52, %v2452
    %v2491 = vsub.f32 %v53, %v2456
    %v2492 = vsub.f32 %v54, %v2460
    %v2493 = vsub.f32 %v55, %v2464
    %v2494 = vsub.f32 %v56, %v2468
    %v2495 = vsub.f32 %v57, %v2472
    %v2496 = vsub.f32 %v58, %v2476
    %v2497 = vsub.f32 %v59, %v2480
    %v2498 = vmul.f32 %v2402, %v2402
    %v2499 = vmul.f32 %v2403, %v2403
    %v2500 = vmul.f32 %v2404, %v2404
    %v2501 = vmul.f32 %v2405, %v2405
    %v2502 = vmul.f32 %v2406, %v2406
    %v2503 = vmul.f32 %v2407, %v2407
    %v2504 = vmul.f32 %v2408, %v2408
    %v2505 = vmul.f32 %v2409, %v2409
    %v2506 = vmul.f32 %v2410, %v2410
    %v2507 = vmul.f32 %v2411, %v2411
    %v2508 = vmul.f32 %v2412, %v2412
    %v2509 = vmul.f32 %v2413, %v2413
    %v2510 = vmul.f32 %v2414, %v2414
    %v2511 = vmul.f32 %v2415, %v2415
    %v2512 = vmul.f32 %v2416, %v2416
    %v2513 = vmul.f32 %v2417, %v2417
    %v2514 = vmul.f32 %v2482, %v2482
    %v2515 = vmul.f32 %v2483, %v2483
    %v2516 = vmul.f32 %v2484, %v2484
    %v2517 = vmul.f32 %v2485, %v2485
    %v2518 = vmul.f32 %v2486, %v2486
    %v2519 = vmul.f32 %v2487, %v2487
    %v2520 = vmul.f32 %v2488, %v2488
    %v2521 = vmul.f32 %v2489, %v2489
    %v2522 = vmul.f32 %v2490, %v2490
    %v2523 = vmul.f32 %v2491, %v2491
    %v2524 = vmul.f32 %v2492, %v2492
    %v2525 = vmul.f32 %v2493, %v2493
    %v2526 = vmul.f32 %v2494, %v2494
    %v2527 = vmul.f32 %v2495, %v2495
    %v2528 = vmul.f32 %v2496, %v2496
    %v2529 = vmul.f32 %v2497, %v2497
    %v2530 = vadd.f32 %v2498, %v2514
    %v2531 = vadd.f32 %v2499, %v2515
    %v2532 = vadd.f32 %v2500, %v2516
    %v2533 = vadd.f32 %v2501, %v2517
    %v2534 = vadd.f32 %v2502, %v2518
    %v2535 = vadd.f32 %v2503, %v2519
    %v2536 = vadd.f32 %v2504, %v2520
    %v2537 = vadd.f32 %v2505, %v2521
    %v2538 = vadd.f32 %v2506, %v2522
    %v2539 = vadd.f32 %v2507, %v2523
    %v2540 = vadd.f32 %v2508, %v2524
    %v2541 = vadd.f32 %v2509, %v2525
    %v2542 = vadd.f32 %v2510, %v2526
    %v2543 = vadd.f32 %v2511, %v2527
    %v2544 = vadd.f32 %v2512, %v2528
    %v2545 = vadd.f32 %v2513, %v2529
    %v2546 = vrsqrt.pop %v2530
    %v2547 = vmul.f32 %v2530, %v2546
    %vm2548 = vcmp.eq.f32.partialorder %v2530, inf
    %v2549 = vsel %vm2548, %v2530, %v2547
    %vm2550 = vcmp.eq.f32.partialorder %v2530, 0.0
    %v2551 = vand.u32 %v2530, 2147483648
    %v2552 = vsel %vm2550, %v2551, %v2549
    %v2553 = vrsqrt.pop %v2531
    %v2554 = vmul.f32 %v2531, %v2553
    %vm2555 = vcmp.eq.f32.partialorder %v2531, inf
    %v2556 = vsel %vm2555, %v2531, %v2554
    %vm2557 = vcmp.eq.f32.partialorder %v2531, 0.0
    %v2558 = vand.u32 %v2531, 2147483648
    %v2559 = vsel %vm2557, %v2558, %v2556
    %v2560 = vrsqrt.pop %v2532
    %v2561 = vmul.f32 %v2532, %v2560
    %vm2562 = vcmp.eq.f32.partialorder %v2532, inf
    %v2563 = vsel %vm2562, %v2532, %v2561
    %vm2564 = vcmp.eq.f32.partialorder %v2532, 0.0
    %v2565 = vand.u32 %v2532, 2147483648
    %v2566 = vsel %vm2564, %v2565, %v2563
    %v2567 = vrsqrt.pop %v2533
    %v2568 = vmul.f32 %v2533, %v2567
    %vm2569 = vcmp.eq.f32.partialorder %v2533, inf
    %v2570 = vsel %vm2569, %v2533, %v2568
    %vm2571 = vcmp.eq.f32.partialorder %v2533, 0.0
    %v2572 = vand.u32 %v2533, 2147483648
    %v2573 = vsel %vm2571, %v2572, %v2570
    %v2574 = vrsqrt.pop %v2534
    %v2575 = vmul.f32 %v2534, %v2574
    %vm2576 = vcmp.eq.f32.partialorder %v2534, inf
    %v2577 = vsel %vm2576, %v2534, %v2575
    %vm2578 = vcmp.eq.f32.partialorder %v2534, 0.0
    %v2579 = vand.u32 %v2534, 2147483648
    %v2580 = vsel %vm2578, %v2579, %v2577
    %v2581 = vrsqrt.pop %v2535
    %v2582 = vmul.f32 %v2535, %v2581
    %vm2583 = vcmp.eq.f32.partialorder %v2535, inf
    %v2584 = vsel %vm2583, %v2535, %v2582
    %vm2585 = vcmp.eq.f32.partialorder %v2535, 0.0
    %v2586 = vand.u32 %v2535, 2147483648
    %v2587 = vsel %vm2585, %v2586, %v2584
    %v2588 = vrsqrt.pop %v2536
    %v2589 = vmul.f32 %v2536, %v2588
    %vm2590 = vcmp.eq.f32.partialorder %v2536, inf
    %v2591 = vsel %vm2590, %v2536, %v2589
    %vm2592 = vcmp.eq.f32.partialorder %v2536, 0.0
    %v2593 = vand.u32 %v2536, 2147483648
    %v2594 = vsel %vm2592, %v2593, %v2591
    %v2595 = vrsqrt.pop %v2537
    %v2596 = vmul.f32 %v2537, %v2595
    %vm2597 = vcmp.eq.f32.partialorder %v2537, inf
    %v2598 = vsel %vm2597, %v2537, %v2596
    %vm2599 = vcmp.eq.f32.partialorder %v2537, 0.0
    %v2600 = vand.u32 %v2537, 2147483648
    %v2601 = vsel %vm2599, %v2600, %v2598
    %v2602 = vrsqrt.pop %v2538
    %v2603 = vmul.f32 %v2538, %v2602
    %vm2604 = vcmp.eq.f32.partialorder %v2538, inf
    %v2605 = vsel %vm2604, %v2538, %v2603
    %vm2606 = vcmp.eq.f32.partialorder %v2538, 0.0
    %v2607 = vand.u32 %v2538, 2147483648
    %v2608 = vsel %vm2606, %v2607, %v2605
    %v2609 = vrsqrt.pop %v2539
    %v2610 = vmul.f32 %v2539, %v2609
    %vm2611 = vcmp.eq.f32.partialorder %v2539, inf
    %v2612 = vsel %vm2611, %v2539, %v2610
    %vm2613 = vcmp.eq.f32.partialorder %v2539, 0.0
    %v2614 = vand.u32 %v2539, 2147483648
    %v2615 = vsel %vm2613, %v2614, %v2612
    %v2616 = vrsqrt.pop %v2540
    %v2617 = vmul.f32 %v2540, %v2616
    %vm2618 = vcmp.eq.f32.partialorder %v2540, inf
    %v2619 = vsel %vm2618, %v2540, %v2617
    %vm2620 = vcmp.eq.f32.partialorder %v2540, 0.0
    %v2621 = vand.u32 %v2540, 2147483648
    %v2622 = vsel %vm2620, %v2621, %v2619
    %v2623 = vrsqrt.pop %v2541
    %v2624 = vmul.f32 %v2541, %v2623
    %vm2625 = vcmp.eq.f32.partialorder %v2541, inf
    %v2626 = vsel %vm2625, %v2541, %v2624
    %vm2627 = vcmp.eq.f32.partialorder %v2541, 0.0
    %v2628 = vand.u32 %v2541, 2147483648
    %v2629 = vsel %vm2627, %v2628, %v2626
    %v2630 = vrsqrt.pop %v2542
    %v2631 = vmul.f32 %v2542, %v2630
    %vm2632 = vcmp.eq.f32.partialorder %v2542, inf
    %v2633 = vsel %vm2632, %v2542, %v2631
    %vm2634 = vcmp.eq.f32.partialorder %v2542, 0.0
    %v2635 = vand.u32 %v2542, 2147483648
    %v2636 = vsel %vm2634, %v2635, %v2633
    %v2637 = vrsqrt.pop %v2543
    %v2638 = vmul.f32 %v2543, %v2637
    %vm2639 = vcmp.eq.f32.partialorder %v2543, inf
    %v2640 = vsel %vm2639, %v2543, %v2638
    %vm2641 = vcmp.eq.f32.partialorder %v2543, 0.0
    %v2642 = vand.u32 %v2543, 2147483648
    %v2643 = vsel %vm2641, %v2642, %v2640
    %v2644 = vrsqrt.pop %v2544
    %v2645 = vmul.f32 %v2544, %v2644
    %vm2646 = vcmp.eq.f32.partialorder %v2544, inf
    %v2647 = vsel %vm2646, %v2544, %v2645
    %vm2648 = vcmp.eq.f32.partialorder %v2544, 0.0
    %v2649 = vand.u32 %v2544, 2147483648
    %v2650 = vsel %vm2648, %v2649, %v2647
    %v2651 = vrsqrt.pop %v2545
    %v2652 = vmul.f32 %v2545, %v2651
    %vm2653 = vcmp.eq.f32.partialorder %v2545, inf
    %v2654 = vsel %vm2653, %v2545, %v2652
    %vm2655 = vcmp.eq.f32.partialorder %v2545, 0.0
    %v2656 = vand.u32 %v2545, 2147483648
    %v2657 = vsel %vm2655, %v2656, %v2654
    %vm2658 = vcmp.eq.s32.totalorder %v94, 6
    %vm2659 = vcmp.eq.s32.totalorder %v95, 6
    %v2660 = vadd.f32 %v2530, %v2531
    %v2661 = vadd.f32 %v2660, %v2532
    %v2662 = vadd.f32 %v2661, %v2533
    %v2663 = vadd.f32 %v2662, %v2534
    %v2664 = vadd.f32 %v2663, %v2535
    %v2665 = vadd.f32 %v2664, %v2536
    %v2666 = vadd.f32 %v2665, %v2537
    %v2667 = vadd.f32 %v2666, %v2538
    %v2668 = vadd.f32 %v2667, %v2539
    %v2669 = vadd.f32 %v2668, %v2540
    %v2670 = vadd.f32 %v2669, %v2541
    %v2671 = vadd.f32 %v2670, %v2542
    %v2672 = vadd.f32 %v2671, %v2543
    %v2673 = vadd.f32 %v2672, %v2544
    %v2674 = vadd.f32 %v2673, %v2545
    %v2675 = vrot.slane %v2674, 4
    %v2676 = vadd.f32 %v2674, %v2675
    %v2677 = vrot.slane %v2676, 2
    %v2678 = vadd.f32 %v2676, %v2677
    %v2679 = vrot.slane %v2678, 1
    %v2680 = vadd.f32 %v2678, %v2679
    %v2681 = vsel %vm2658, %v2680, %v2313
    %v2682 = vsel %vm2659, %v2680, %v2314
    %v2683 = vadd.f32 %v2552, %v2559
    %v2684 = vadd.f32 %v2683, %v2566
    %v2685 = vadd.f32 %v2684, %v2573
    %v2686 = vadd.f32 %v2685, %v2580
    %v2687 = vadd.f32 %v2686, %v2587
    %v2688 = vadd.f32 %v2687, %v2594
    %v2689 = vadd.f32 %v2688, %v2601
    %v2690 = vadd.f32 %v2689, %v2608
    %v2691 = vadd.f32 %v2690, %v2615
    %v2692 = vadd.f32 %v2691, %v2622
    %v2693 = vadd.f32 %v2692, %v2629
    %v2694 = vadd.f32 %v2693, %v2636
    %v2695 = vadd.f32 %v2694, %v2643
    %v2696 = vadd.f32 %v2695, %v2650
    %v2697 = vadd.f32 %v2696, %v2657
    %v2698 = vrot.slane %v2697, 4
    %v2699 = vadd.f32 %v2697, %v2698
    %v2700 = vrot.slane %v2699, 2
    %v2701 = vadd.f32 %v2699, %v2700
    %v2702 = vrot.slane %v2701, 1
    %v2703 = vadd.f32 %v2701, %v2702
    %v2704 = vsel %vm2658, %v2703, %v2336
    %v2705 = vsel %vm2659, %v2703, %v2337
    %2706 = vset.pattern.permute.xlu0 7
    %2707 = vperm.xlu0 %2706, %v60
    %v2708 = vpop.permute.xlu0 %2707
    %2710 = vset.pattern.permute.xlu0 7
    %2711 = vperm.xlu0 %2710, %v61
    %v2712 = vpop.permute.xlu0 %2711
    %2714 = vset.pattern.permute.xlu0 7
    %2715 = vperm.xlu0 %2714, %v62
    %v2716 = vpop.permute.xlu0 %2715
    %2718 = vset.pattern.permute.xlu0 7
    %2719 = vperm.xlu0 %2718, %v63
    %v2720 = vpop.permute.xlu0 %2719
    %2722 = vset.pattern.permute.xlu0 7
    %2723 = vperm.xlu0 %2722, %v64
    %v2724 = vpop.permute.xlu0 %2723
    %2726 = vset.pattern.permute.xlu0 7
    %2727 = vperm.xlu0 %2726, %v65
    %v2728 = vpop.permute.xlu0 %2727
    %2730 = vset.pattern.permute.xlu0 7
    %2731 = vperm.xlu0 %2730, %v66
    %v2732 = vpop.permute.xlu0 %2731
    %2734 = vset.pattern.permute.xlu0 7
    %2735 = vperm.xlu0 %2734, %v67
    %v2736 = vpop.permute.xlu0 %2735
    %2738 = vset.pattern.permute.xlu0 7
    %2739 = vperm.xlu0 %2738, %v68
    %v2740 = vpop.permute.xlu0 %2739
    %2742 = vset.pattern.permute.xlu0 7
    %2743 = vperm.xlu0 %2742, %v69
    %v2744 = vpop.permute.xlu0 %2743
    %2746 = vset.pattern.permute.xlu0 7
    %2747 = vperm.xlu0 %2746, %v70
    %v2748 = vpop.permute.xlu0 %2747
    %2750 = vset.pattern.permute.xlu0 7
    %2751 = vperm.xlu0 %2750, %v71
    %v2752 = vpop.permute.xlu0 %2751
    %2754 = vset.pattern.permute.xlu0 7
    %2755 = vperm.xlu0 %2754, %v72
    %v2756 = vpop.permute.xlu0 %2755
    %2758 = vset.pattern.permute.xlu0 7
    %2759 = vperm.xlu0 %2758, %v73
    %v2760 = vpop.permute.xlu0 %2759
    %2762 = vset.pattern.permute.xlu0 7
    %2763 = vperm.xlu0 %2762, %v74
    %v2764 = vpop.permute.xlu0 %2763
    %2766 = vset.pattern.permute.xlu0 7
    %2767 = vperm.xlu0 %2766, %v75
    %v2768 = vpop.permute.xlu0 %2767
    %v2770 = vsub.f32 %v28, %v2708
    %v2771 = vsub.f32 %v29, %v2712
    %v2772 = vsub.f32 %v30, %v2716
    %v2773 = vsub.f32 %v31, %v2720
    %v2774 = vsub.f32 %v32, %v2724
    %v2775 = vsub.f32 %v33, %v2728
    %v2776 = vsub.f32 %v34, %v2732
    %v2777 = vsub.f32 %v35, %v2736
    %v2778 = vsub.f32 %v36, %v2740
    %v2779 = vsub.f32 %v37, %v2744
    %v2780 = vsub.f32 %v38, %v2748
    %v2781 = vsub.f32 %v39, %v2752
    %v2782 = vsub.f32 %v40, %v2756
    %v2783 = vsub.f32 %v41, %v2760
    %v2784 = vsub.f32 %v42, %v2764
    %v2785 = vsub.f32 %v43, %v2768
    %2786 = vset.pattern.permute.xlu0 7
    %2787 = vperm.xlu0 %2786, %v76
    %v2788 = vpop.permute.xlu0 %2787
    %2790 = vset.pattern.permute.xlu0 7
    %2791 = vperm.xlu0 %2790, %v77
    %v2792 = vpop.permute.xlu0 %2791
    %2794 = vset.pattern.permute.xlu0 7
    %2795 = vperm.xlu0 %2794, %v78
    %v2796 = vpop.permute.xlu0 %2795
    %2798 = vset.pattern.permute.xlu0 7
    %2799 = vperm.xlu0 %2798, %v79
    %v2800 = vpop.permute.xlu0 %2799
    %2802 = vset.pattern.permute.xlu0 7
    %2803 = vperm.xlu0 %2802, %v80
    %v2804 = vpop.permute.xlu0 %2803
    %2806 = vset.pattern.permute.xlu0 7
    %2807 = vperm.xlu0 %2806, %v81
    %v2808 = vpop.permute.xlu0 %2807
    %2810 = vset.pattern.permute.xlu0 7
    %2811 = vperm.xlu0 %2810, %v82
    %v2812 = vpop.permute.xlu0 %2811
    %2814 = vset.pattern.permute.xlu0 7
    %2815 = vperm.xlu0 %2814, %v83
    %v2816 = vpop.permute.xlu0 %2815
    %2818 = vset.pattern.permute.xlu0 7
    %2819 = vperm.xlu0 %2818, %v84
    %v2820 = vpop.permute.xlu0 %2819
    %2822 = vset.pattern.permute.xlu0 7
    %2823 = vperm.xlu0 %2822, %v85
    %v2824 = vpop.permute.xlu0 %2823
    %2826 = vset.pattern.permute.xlu0 7
    %2827 = vperm.xlu0 %2826, %v86
    %v2828 = vpop.permute.xlu0 %2827
    %2830 = vset.pattern.permute.xlu0 7
    %2831 = vperm.xlu0 %2830, %v87
    %v2832 = vpop.permute.xlu0 %2831
    %2834 = vset.pattern.permute.xlu0 7
    %2835 = vperm.xlu0 %2834, %v88
    %v2836 = vpop.permute.xlu0 %2835
    %2838 = vset.pattern.permute.xlu0 7
    %2839 = vperm.xlu0 %2838, %v89
    %v2840 = vpop.permute.xlu0 %2839
    %2842 = vset.pattern.permute.xlu0 7
    %2843 = vperm.xlu0 %2842, %v90
    %v2844 = vpop.permute.xlu0 %2843
    %2846 = vset.pattern.permute.xlu0 7
    %2847 = vperm.xlu0 %2846, %v91
    %v2848 = vpop.permute.xlu0 %2847
    %v2850 = vsub.f32 %v44, %v2788
    %v2851 = vsub.f32 %v45, %v2792
    %v2852 = vsub.f32 %v46, %v2796
    %v2853 = vsub.f32 %v47, %v2800
    %v2854 = vsub.f32 %v48, %v2804
    %v2855 = vsub.f32 %v49, %v2808
    %v2856 = vsub.f32 %v50, %v2812
    %v2857 = vsub.f32 %v51, %v2816
    %v2858 = vsub.f32 %v52, %v2820
    %v2859 = vsub.f32 %v53, %v2824
    %v2860 = vsub.f32 %v54, %v2828
    %v2861 = vsub.f32 %v55, %v2832
    %v2862 = vsub.f32 %v56, %v2836
    %v2863 = vsub.f32 %v57, %v2840
    %v2864 = vsub.f32 %v58, %v2844
    %v2865 = vsub.f32 %v59, %v2848
    %v2866 = vmul.f32 %v2770, %v2770
    %v2867 = vmul.f32 %v2771, %v2771
    %v2868 = vmul.f32 %v2772, %v2772
    %v2869 = vmul.f32 %v2773, %v2773
    %v2870 = vmul.f32 %v2774, %v2774
    %v2871 = vmul.f32 %v2775, %v2775
    %v2872 = vmul.f32 %v2776, %v2776
    %v2873 = vmul.f32 %v2777, %v2777
    %v2874 = vmul.f32 %v2778, %v2778
    %v2875 = vmul.f32 %v2779, %v2779
    %v2876 = vmul.f32 %v2780, %v2780
    %v2877 = vmul.f32 %v2781, %v2781
    %v2878 = vmul.f32 %v2782, %v2782
    %v2879 = vmul.f32 %v2783, %v2783
    %v2880 = vmul.f32 %v2784, %v2784
    %v2881 = vmul.f32 %v2785, %v2785
    %v2882 = vmul.f32 %v2850, %v2850
    %v2883 = vmul.f32 %v2851, %v2851
    %v2884 = vmul.f32 %v2852, %v2852
    %v2885 = vmul.f32 %v2853, %v2853
    %v2886 = vmul.f32 %v2854, %v2854
    %v2887 = vmul.f32 %v2855, %v2855
    %v2888 = vmul.f32 %v2856, %v2856
    %v2889 = vmul.f32 %v2857, %v2857
    %v2890 = vmul.f32 %v2858, %v2858
    %v2891 = vmul.f32 %v2859, %v2859
    %v2892 = vmul.f32 %v2860, %v2860
    %v2893 = vmul.f32 %v2861, %v2861
    %v2894 = vmul.f32 %v2862, %v2862
    %v2895 = vmul.f32 %v2863, %v2863
    %v2896 = vmul.f32 %v2864, %v2864
    %v2897 = vmul.f32 %v2865, %v2865
    %v2898 = vadd.f32 %v2866, %v2882
    %v2899 = vadd.f32 %v2867, %v2883
    %v2900 = vadd.f32 %v2868, %v2884
    %v2901 = vadd.f32 %v2869, %v2885
    %v2902 = vadd.f32 %v2870, %v2886
    %v2903 = vadd.f32 %v2871, %v2887
    %v2904 = vadd.f32 %v2872, %v2888
    %v2905 = vadd.f32 %v2873, %v2889
    %v2906 = vadd.f32 %v2874, %v2890
    %v2907 = vadd.f32 %v2875, %v2891
    %v2908 = vadd.f32 %v2876, %v2892
    %v2909 = vadd.f32 %v2877, %v2893
    %v2910 = vadd.f32 %v2878, %v2894
    %v2911 = vadd.f32 %v2879, %v2895
    %v2912 = vadd.f32 %v2880, %v2896
    %v2913 = vadd.f32 %v2881, %v2897
    %v2914 = vrsqrt.pop %v2898
    %v2915 = vmul.f32 %v2898, %v2914
    %vm2916 = vcmp.eq.f32.partialorder %v2898, inf
    %v2917 = vsel %vm2916, %v2898, %v2915
    %vm2918 = vcmp.eq.f32.partialorder %v2898, 0.0
    %v2919 = vand.u32 %v2898, 2147483648
    %v2920 = vsel %vm2918, %v2919, %v2917
    %v2921 = vrsqrt.pop %v2899
    %v2922 = vmul.f32 %v2899, %v2921
    %vm2923 = vcmp.eq.f32.partialorder %v2899, inf
    %v2924 = vsel %vm2923, %v2899, %v2922
    %vm2925 = vcmp.eq.f32.partialorder %v2899, 0.0
    %v2926 = vand.u32 %v2899, 2147483648
    %v2927 = vsel %vm2925, %v2926, %v2924
    %v2928 = vrsqrt.pop %v2900
    %v2929 = vmul.f32 %v2900, %v2928
    %vm2930 = vcmp.eq.f32.partialorder %v2900, inf
    %v2931 = vsel %vm2930, %v2900, %v2929
    %vm2932 = vcmp.eq.f32.partialorder %v2900, 0.0
    %v2933 = vand.u32 %v2900, 2147483648
    %v2934 = vsel %vm2932, %v2933, %v2931
    %v2935 = vrsqrt.pop %v2901
    %v2936 = vmul.f32 %v2901, %v2935
    %vm2937 = vcmp.eq.f32.partialorder %v2901, inf
    %v2938 = vsel %vm2937, %v2901, %v2936
    %vm2939 = vcmp.eq.f32.partialorder %v2901, 0.0
    %v2940 = vand.u32 %v2901, 2147483648
    %v2941 = vsel %vm2939, %v2940, %v2938
    %v2942 = vrsqrt.pop %v2902
    %v2943 = vmul.f32 %v2902, %v2942
    %vm2944 = vcmp.eq.f32.partialorder %v2902, inf
    %v2945 = vsel %vm2944, %v2902, %v2943
    %vm2946 = vcmp.eq.f32.partialorder %v2902, 0.0
    %v2947 = vand.u32 %v2902, 2147483648
    %v2948 = vsel %vm2946, %v2947, %v2945
    %v2949 = vrsqrt.pop %v2903
    %v2950 = vmul.f32 %v2903, %v2949
    %vm2951 = vcmp.eq.f32.partialorder %v2903, inf
    %v2952 = vsel %vm2951, %v2903, %v2950
    %vm2953 = vcmp.eq.f32.partialorder %v2903, 0.0
    %v2954 = vand.u32 %v2903, 2147483648
    %v2955 = vsel %vm2953, %v2954, %v2952
    %v2956 = vrsqrt.pop %v2904
    %v2957 = vmul.f32 %v2904, %v2956
    %vm2958 = vcmp.eq.f32.partialorder %v2904, inf
    %v2959 = vsel %vm2958, %v2904, %v2957
    %vm2960 = vcmp.eq.f32.partialorder %v2904, 0.0
    %v2961 = vand.u32 %v2904, 2147483648
    %v2962 = vsel %vm2960, %v2961, %v2959
    %v2963 = vrsqrt.pop %v2905
    %v2964 = vmul.f32 %v2905, %v2963
    %vm2965 = vcmp.eq.f32.partialorder %v2905, inf
    %v2966 = vsel %vm2965, %v2905, %v2964
    %vm2967 = vcmp.eq.f32.partialorder %v2905, 0.0
    %v2968 = vand.u32 %v2905, 2147483648
    %v2969 = vsel %vm2967, %v2968, %v2966
    %v2970 = vrsqrt.pop %v2906
    %v2971 = vmul.f32 %v2906, %v2970
    %vm2972 = vcmp.eq.f32.partialorder %v2906, inf
    %v2973 = vsel %vm2972, %v2906, %v2971
    %vm2974 = vcmp.eq.f32.partialorder %v2906, 0.0
    %v2975 = vand.u32 %v2906, 2147483648
    %v2976 = vsel %vm2974, %v2975, %v2973
    %v2977 = vrsqrt.pop %v2907
    %v2978 = vmul.f32 %v2907, %v2977
    %vm2979 = vcmp.eq.f32.partialorder %v2907, inf
    %v2980 = vsel %vm2979, %v2907, %v2978
    %vm2981 = vcmp.eq.f32.partialorder %v2907, 0.0
    %v2982 = vand.u32 %v2907, 2147483648
    %v2983 = vsel %vm2981, %v2982, %v2980
    %v2984 = vrsqrt.pop %v2908
    %v2985 = vmul.f32 %v2908, %v2984
    %vm2986 = vcmp.eq.f32.partialorder %v2908, inf
    %v2987 = vsel %vm2986, %v2908, %v2985
    %vm2988 = vcmp.eq.f32.partialorder %v2908, 0.0
    %v2989 = vand.u32 %v2908, 2147483648
    %v2990 = vsel %vm2988, %v2989, %v2987
    %v2991 = vrsqrt.pop %v2909
    %v2992 = vmul.f32 %v2909, %v2991
    %vm2993 = vcmp.eq.f32.partialorder %v2909, inf
    %v2994 = vsel %vm2993, %v2909, %v2992
    %vm2995 = vcmp.eq.f32.partialorder %v2909, 0.0
    %v2996 = vand.u32 %v2909, 2147483648
    %v2997 = vsel %vm2995, %v2996, %v2994
    %v2998 = vrsqrt.pop %v2910
    %v2999 = vmul.f32 %v2910, %v2998
    %vm3000 = vcmp.eq.f32.partialorder %v2910, inf
    %v3001 = vsel %vm3000, %v2910, %v2999
    %vm3002 = vcmp.eq.f32.partialorder %v2910, 0.0
    %v3003 = vand.u32 %v2910, 2147483648
    %v3004 = vsel %vm3002, %v3003, %v3001
    %v3005 = vrsqrt.pop %v2911
    %v3006 = vmul.f32 %v2911, %v3005
    %vm3007 = vcmp.eq.f32.partialorder %v2911, inf
    %v3008 = vsel %vm3007, %v2911, %v3006
    %vm3009 = vcmp.eq.f32.partialorder %v2911, 0.0
    %v3010 = vand.u32 %v2911, 2147483648
    %v3011 = vsel %vm3009, %v3010, %v3008
    %v3012 = vrsqrt.pop %v2912
    %v3013 = vmul.f32 %v2912, %v3012
    %vm3014 = vcmp.eq.f32.partialorder %v2912, inf
    %v3015 = vsel %vm3014, %v2912, %v3013
    %vm3016 = vcmp.eq.f32.partialorder %v2912, 0.0
    %v3017 = vand.u32 %v2912, 2147483648
    %v3018 = vsel %vm3016, %v3017, %v3015
    %v3019 = vrsqrt.pop %v2913
    %v3020 = vmul.f32 %v2913, %v3019
    %vm3021 = vcmp.eq.f32.partialorder %v2913, inf
    %v3022 = vsel %vm3021, %v2913, %v3020
    %vm3023 = vcmp.eq.f32.partialorder %v2913, 0.0
    %v3024 = vand.u32 %v2913, 2147483648
    %v3025 = vsel %vm3023, %v3024, %v3022
    %vm3026 = vcmp.eq.s32.totalorder %v94, 7
    %vm3027 = vcmp.eq.s32.totalorder %v95, 7
    %v3028 = vadd.f32 %v2898, %v2899
    %v3029 = vadd.f32 %v3028, %v2900
    %v3030 = vadd.f32 %v3029, %v2901
    %v3031 = vadd.f32 %v3030, %v2902
    %v3032 = vadd.f32 %v3031, %v2903
    %v3033 = vadd.f32 %v3032, %v2904
    %v3034 = vadd.f32 %v3033, %v2905
    %v3035 = vadd.f32 %v3034, %v2906
    %v3036 = vadd.f32 %v3035, %v2907
    %v3037 = vadd.f32 %v3036, %v2908
    %v3038 = vadd.f32 %v3037, %v2909
    %v3039 = vadd.f32 %v3038, %v2910
    %v3040 = vadd.f32 %v3039, %v2911
    %v3041 = vadd.f32 %v3040, %v2912
    %v3042 = vadd.f32 %v3041, %v2913
    %v3043 = vrot.slane %v3042, 4
    %v3044 = vadd.f32 %v3042, %v3043
    %v3045 = vrot.slane %v3044, 2
    %v3046 = vadd.f32 %v3044, %v3045
    %v3047 = vrot.slane %v3046, 1
    %v3048 = vadd.f32 %v3046, %v3047
    %v3049 = vsel %vm3026, %v3048, %v2681
    %v3050 = vsel %vm3027, %v3048, %v2682
    %v3051 = vadd.f32 %v2920, %v2927
    %v3052 = vadd.f32 %v3051, %v2934
    %v3053 = vadd.f32 %v3052, %v2941
    %v3054 = vadd.f32 %v3053, %v2948
    %v3055 = vadd.f32 %v3054, %v2955
    %v3056 = vadd.f32 %v3055, %v2962
    %v3057 = vadd.f32 %v3056, %v2969
    %v3058 = vadd.f32 %v3057, %v2976
    %v3059 = vadd.f32 %v3058, %v2983
    %v3060 = vadd.f32 %v3059, %v2990
    %v3061 = vadd.f32 %v3060, %v2997
    %v3062 = vadd.f32 %v3061, %v3004
    %v3063 = vadd.f32 %v3062, %v3011
    %v3064 = vadd.f32 %v3063, %v3018
    %v3065 = vadd.f32 %v3064, %v3025
    %v3066 = vrot.slane %v3065, 4
    %v3067 = vadd.f32 %v3065, %v3066
    %v3068 = vrot.slane %v3067, 2
    %v3069 = vadd.f32 %v3067, %v3068
    %v3070 = vrot.slane %v3069, 1
    %v3071 = vadd.f32 %v3069, %v3070
    %v3072 = vsel %vm3026, %v3071, %v2704
    %v3073 = vsel %vm3027, %v3071, %v2705
    %3074 = vset.pattern.permute.xlu0 8
    %3075 = vperm.xlu0 %3074, %v60
    %v3076 = vpop.permute.xlu0 %3075
    %3078 = vset.pattern.permute.xlu0 8
    %3079 = vperm.xlu0 %3078, %v61
    %v3080 = vpop.permute.xlu0 %3079
    %3082 = vset.pattern.permute.xlu0 8
    %3083 = vperm.xlu0 %3082, %v62
    %v3084 = vpop.permute.xlu0 %3083
    %3086 = vset.pattern.permute.xlu0 8
    %3087 = vperm.xlu0 %3086, %v63
    %v3088 = vpop.permute.xlu0 %3087
    %3090 = vset.pattern.permute.xlu0 8
    %3091 = vperm.xlu0 %3090, %v64
    %v3092 = vpop.permute.xlu0 %3091
    %3094 = vset.pattern.permute.xlu0 8
    %3095 = vperm.xlu0 %3094, %v65
    %v3096 = vpop.permute.xlu0 %3095
    %3098 = vset.pattern.permute.xlu0 8
    %3099 = vperm.xlu0 %3098, %v66
    %v3100 = vpop.permute.xlu0 %3099
    %3102 = vset.pattern.permute.xlu0 8
    %3103 = vperm.xlu0 %3102, %v67
    %v3104 = vpop.permute.xlu0 %3103
    %3106 = vset.pattern.permute.xlu0 8
    %3107 = vperm.xlu0 %3106, %v68
    %v3108 = vpop.permute.xlu0 %3107
    %3110 = vset.pattern.permute.xlu0 8
    %3111 = vperm.xlu0 %3110, %v69
    %v3112 = vpop.permute.xlu0 %3111
    %3114 = vset.pattern.permute.xlu0 8
    %3115 = vperm.xlu0 %3114, %v70
    %v3116 = vpop.permute.xlu0 %3115
    %3118 = vset.pattern.permute.xlu0 8
    %3119 = vperm.xlu0 %3118, %v71
    %v3120 = vpop.permute.xlu0 %3119
    %3122 = vset.pattern.permute.xlu0 8
    %3123 = vperm.xlu0 %3122, %v72
    %v3124 = vpop.permute.xlu0 %3123
    %3126 = vset.pattern.permute.xlu0 8
    %3127 = vperm.xlu0 %3126, %v73
    %v3128 = vpop.permute.xlu0 %3127
    %3130 = vset.pattern.permute.xlu0 8
    %3131 = vperm.xlu0 %3130, %v74
    %v3132 = vpop.permute.xlu0 %3131
    %3134 = vset.pattern.permute.xlu0 8
    %3135 = vperm.xlu0 %3134, %v75
    %v3136 = vpop.permute.xlu0 %3135
    %v3138 = vsub.f32 %v28, %v3076
    %v3139 = vsub.f32 %v29, %v3080
    %v3140 = vsub.f32 %v30, %v3084
    %v3141 = vsub.f32 %v31, %v3088
    %v3142 = vsub.f32 %v32, %v3092
    %v3143 = vsub.f32 %v33, %v3096
    %v3144 = vsub.f32 %v34, %v3100
    %v3145 = vsub.f32 %v35, %v3104
    %v3146 = vsub.f32 %v36, %v3108
    %v3147 = vsub.f32 %v37, %v3112
    %v3148 = vsub.f32 %v38, %v3116
    %v3149 = vsub.f32 %v39, %v3120
    %v3150 = vsub.f32 %v40, %v3124
    %v3151 = vsub.f32 %v41, %v3128
    %v3152 = vsub.f32 %v42, %v3132
    %v3153 = vsub.f32 %v43, %v3136
    %3154 = vset.pattern.permute.xlu0 8
    %3155 = vperm.xlu0 %3154, %v76
    %v3156 = vpop.permute.xlu0 %3155
    %3158 = vset.pattern.permute.xlu0 8
    %3159 = vperm.xlu0 %3158, %v77
    %v3160 = vpop.permute.xlu0 %3159
    %3162 = vset.pattern.permute.xlu0 8
    %3163 = vperm.xlu0 %3162, %v78
    %v3164 = vpop.permute.xlu0 %3163
    %3166 = vset.pattern.permute.xlu0 8
    %3167 = vperm.xlu0 %3166, %v79
    %v3168 = vpop.permute.xlu0 %3167
    %3170 = vset.pattern.permute.xlu0 8
    %3171 = vperm.xlu0 %3170, %v80
    %v3172 = vpop.permute.xlu0 %3171
    %3174 = vset.pattern.permute.xlu0 8
    %3175 = vperm.xlu0 %3174, %v81
    %v3176 = vpop.permute.xlu0 %3175
    %3178 = vset.pattern.permute.xlu0 8
    %3179 = vperm.xlu0 %3178, %v82
    %v3180 = vpop.permute.xlu0 %3179
    %3182 = vset.pattern.permute.xlu0 8
    %3183 = vperm.xlu0 %3182, %v83
    %v3184 = vpop.permute.xlu0 %3183
    %3186 = vset.pattern.permute.xlu0 8
    %3187 = vperm.xlu0 %3186, %v84
    %v3188 = vpop.permute.xlu0 %3187
    %3190 = vset.pattern.permute.xlu0 8
    %3191 = vperm.xlu0 %3190, %v85
    %v3192 = vpop.permute.xlu0 %3191
    %3194 = vset.pattern.permute.xlu0 8
    %3195 = vperm.xlu0 %3194, %v86
    %v3196 = vpop.permute.xlu0 %3195
    %3198 = vset.pattern.permute.xlu0 8
    %3199 = vperm.xlu0 %3198, %v87
    %v3200 = vpop.permute.xlu0 %3199
    %3202 = vset.pattern.permute.xlu0 8
    %3203 = vperm.xlu0 %3202, %v88
    %v3204 = vpop.permute.xlu0 %3203
    %3206 = vset.pattern.permute.xlu0 8
    %3207 = vperm.xlu0 %3206, %v89
    %v3208 = vpop.permute.xlu0 %3207
    %3210 = vset.pattern.permute.xlu0 8
    %3211 = vperm.xlu0 %3210, %v90
    %v3212 = vpop.permute.xlu0 %3211
    %3214 = vset.pattern.permute.xlu0 8
    %3215 = vperm.xlu0 %3214, %v91
    %v3216 = vpop.permute.xlu0 %3215
    %v3218 = vsub.f32 %v44, %v3156
    %v3219 = vsub.f32 %v45, %v3160
    %v3220 = vsub.f32 %v46, %v3164
    %v3221 = vsub.f32 %v47, %v3168
    %v3222 = vsub.f32 %v48, %v3172
    %v3223 = vsub.f32 %v49, %v3176
    %v3224 = vsub.f32 %v50, %v3180
    %v3225 = vsub.f32 %v51, %v3184
    %v3226 = vsub.f32 %v52, %v3188
    %v3227 = vsub.f32 %v53, %v3192
    %v3228 = vsub.f32 %v54, %v3196
    %v3229 = vsub.f32 %v55, %v3200
    %v3230 = vsub.f32 %v56, %v3204
    %v3231 = vsub.f32 %v57, %v3208
    %v3232 = vsub.f32 %v58, %v3212
    %v3233 = vsub.f32 %v59, %v3216
    %v3234 = vmul.f32 %v3138, %v3138
    %v3235 = vmul.f32 %v3139, %v3139
    %v3236 = vmul.f32 %v3140, %v3140
    %v3237 = vmul.f32 %v3141, %v3141
    %v3238 = vmul.f32 %v3142, %v3142
    %v3239 = vmul.f32 %v3143, %v3143
    %v3240 = vmul.f32 %v3144, %v3144
    %v3241 = vmul.f32 %v3145, %v3145
    %v3242 = vmul.f32 %v3146, %v3146
    %v3243 = vmul.f32 %v3147, %v3147
    %v3244 = vmul.f32 %v3148, %v3148
    %v3245 = vmul.f32 %v3149, %v3149
    %v3246 = vmul.f32 %v3150, %v3150
    %v3247 = vmul.f32 %v3151, %v3151
    %v3248 = vmul.f32 %v3152, %v3152
    %v3249 = vmul.f32 %v3153, %v3153
    %v3250 = vmul.f32 %v3218, %v3218
    %v3251 = vmul.f32 %v3219, %v3219
    %v3252 = vmul.f32 %v3220, %v3220
    %v3253 = vmul.f32 %v3221, %v3221
    %v3254 = vmul.f32 %v3222, %v3222
    %v3255 = vmul.f32 %v3223, %v3223
    %v3256 = vmul.f32 %v3224, %v3224
    %v3257 = vmul.f32 %v3225, %v3225
    %v3258 = vmul.f32 %v3226, %v3226
    %v3259 = vmul.f32 %v3227, %v3227
    %v3260 = vmul.f32 %v3228, %v3228
    %v3261 = vmul.f32 %v3229, %v3229
    %v3262 = vmul.f32 %v3230, %v3230
    %v3263 = vmul.f32 %v3231, %v3231
    %v3264 = vmul.f32 %v3232, %v3232
    %v3265 = vmul.f32 %v3233, %v3233
    %v3266 = vadd.f32 %v3234, %v3250
    %v3267 = vadd.f32 %v3235, %v3251
    %v3268 = vadd.f32 %v3236, %v3252
    %v3269 = vadd.f32 %v3237, %v3253
    %v3270 = vadd.f32 %v3238, %v3254
    %v3271 = vadd.f32 %v3239, %v3255
    %v3272 = vadd.f32 %v3240, %v3256
    %v3273 = vadd.f32 %v3241, %v3257
    %v3274 = vadd.f32 %v3242, %v3258
    %v3275 = vadd.f32 %v3243, %v3259
    %v3276 = vadd.f32 %v3244, %v3260
    %v3277 = vadd.f32 %v3245, %v3261
    %v3278 = vadd.f32 %v3246, %v3262
    %v3279 = vadd.f32 %v3247, %v3263
    %v3280 = vadd.f32 %v3248, %v3264
    %v3281 = vadd.f32 %v3249, %v3265
    %v3282 = vrsqrt.pop %v3266
    %v3283 = vmul.f32 %v3266, %v3282
    %vm3284 = vcmp.eq.f32.partialorder %v3266, inf
    %v3285 = vsel %vm3284, %v3266, %v3283
    %vm3286 = vcmp.eq.f32.partialorder %v3266, 0.0
    %v3287 = vand.u32 %v3266, 2147483648
    %v3288 = vsel %vm3286, %v3287, %v3285
    %v3289 = vrsqrt.pop %v3267
    %v3290 = vmul.f32 %v3267, %v3289
    %vm3291 = vcmp.eq.f32.partialorder %v3267, inf
    %v3292 = vsel %vm3291, %v3267, %v3290
    %vm3293 = vcmp.eq.f32.partialorder %v3267, 0.0
    %v3294 = vand.u32 %v3267, 2147483648
    %v3295 = vsel %vm3293, %v3294, %v3292
    %v3296 = vrsqrt.pop %v3268
    %v3297 = vmul.f32 %v3268, %v3296
    %vm3298 = vcmp.eq.f32.partialorder %v3268, inf
    %v3299 = vsel %vm3298, %v3268, %v3297
    %vm3300 = vcmp.eq.f32.partialorder %v3268, 0.0
    %v3301 = vand.u32 %v3268, 2147483648
    %v3302 = vsel %vm3300, %v3301, %v3299
    %v3303 = vrsqrt.pop %v3269
    %v3304 = vmul.f32 %v3269, %v3303
    %vm3305 = vcmp.eq.f32.partialorder %v3269, inf
    %v3306 = vsel %vm3305, %v3269, %v3304
    %vm3307 = vcmp.eq.f32.partialorder %v3269, 0.0
    %v3308 = vand.u32 %v3269, 2147483648
    %v3309 = vsel %vm3307, %v3308, %v3306
    %v3310 = vrsqrt.pop %v3270
    %v3311 = vmul.f32 %v3270, %v3310
    %vm3312 = vcmp.eq.f32.partialorder %v3270, inf
    %v3313 = vsel %vm3312, %v3270, %v3311
    %vm3314 = vcmp.eq.f32.partialorder %v3270, 0.0
    %v3315 = vand.u32 %v3270, 2147483648
    %v3316 = vsel %vm3314, %v3315, %v3313
    %v3317 = vrsqrt.pop %v3271
    %v3318 = vmul.f32 %v3271, %v3317
    %vm3319 = vcmp.eq.f32.partialorder %v3271, inf
    %v3320 = vsel %vm3319, %v3271, %v3318
    %vm3321 = vcmp.eq.f32.partialorder %v3271, 0.0
    %v3322 = vand.u32 %v3271, 2147483648
    %v3323 = vsel %vm3321, %v3322, %v3320
    %v3324 = vrsqrt.pop %v3272
    %v3325 = vmul.f32 %v3272, %v3324
    %vm3326 = vcmp.eq.f32.partialorder %v3272, inf
    %v3327 = vsel %vm3326, %v3272, %v3325
    %vm3328 = vcmp.eq.f32.partialorder %v3272, 0.0
    %v3329 = vand.u32 %v3272, 2147483648
    %v3330 = vsel %vm3328, %v3329, %v3327
    %v3331 = vrsqrt.pop %v3273
    %v3332 = vmul.f32 %v3273, %v3331
    %vm3333 = vcmp.eq.f32.partialorder %v3273, inf
    %v3334 = vsel %vm3333, %v3273, %v3332
    %vm3335 = vcmp.eq.f32.partialorder %v3273, 0.0
    %v3336 = vand.u32 %v3273, 2147483648
    %v3337 = vsel %vm3335, %v3336, %v3334
    %v3338 = vrsqrt.pop %v3274
    %v3339 = vmul.f32 %v3274, %v3338
    %vm3340 = vcmp.eq.f32.partialorder %v3274, inf
    %v3341 = vsel %vm3340, %v3274, %v3339
    %vm3342 = vcmp.eq.f32.partialorder %v3274, 0.0
    %v3343 = vand.u32 %v3274, 2147483648
    %v3344 = vsel %vm3342, %v3343, %v3341
    %v3345 = vrsqrt.pop %v3275
    %v3346 = vmul.f32 %v3275, %v3345
    %vm3347 = vcmp.eq.f32.partialorder %v3275, inf
    %v3348 = vsel %vm3347, %v3275, %v3346
    %vm3349 = vcmp.eq.f32.partialorder %v3275, 0.0
    %v3350 = vand.u32 %v3275, 2147483648
    %v3351 = vsel %vm3349, %v3350, %v3348
    %v3352 = vrsqrt.pop %v3276
    %v3353 = vmul.f32 %v3276, %v3352
    %vm3354 = vcmp.eq.f32.partialorder %v3276, inf
    %v3355 = vsel %vm3354, %v3276, %v3353
    %vm3356 = vcmp.eq.f32.partialorder %v3276, 0.0
    %v3357 = vand.u32 %v3276, 2147483648
    %v3358 = vsel %vm3356, %v3357, %v3355
    %v3359 = vrsqrt.pop %v3277
    %v3360 = vmul.f32 %v3277, %v3359
    %vm3361 = vcmp.eq.f32.partialorder %v3277, inf
    %v3362 = vsel %vm3361, %v3277, %v3360
    %vm3363 = vcmp.eq.f32.partialorder %v3277, 0.0
    %v3364 = vand.u32 %v3277, 2147483648
    %v3365 = vsel %vm3363, %v3364, %v3362
    %v3366 = vrsqrt.pop %v3278
    %v3367 = vmul.f32 %v3278, %v3366
    %vm3368 = vcmp.eq.f32.partialorder %v3278, inf
    %v3369 = vsel %vm3368, %v3278, %v3367
    %vm3370 = vcmp.eq.f32.partialorder %v3278, 0.0
    %v3371 = vand.u32 %v3278, 2147483648
    %v3372 = vsel %vm3370, %v3371, %v3369
    %v3373 = vrsqrt.pop %v3279
    %v3374 = vmul.f32 %v3279, %v3373
    %vm3375 = vcmp.eq.f32.partialorder %v3279, inf
    %v3376 = vsel %vm3375, %v3279, %v3374
    %vm3377 = vcmp.eq.f32.partialorder %v3279, 0.0
    %v3378 = vand.u32 %v3279, 2147483648
    %v3379 = vsel %vm3377, %v3378, %v3376
    %v3380 = vrsqrt.pop %v3280
    %v3381 = vmul.f32 %v3280, %v3380
    %vm3382 = vcmp.eq.f32.partialorder %v3280, inf
    %v3383 = vsel %vm3382, %v3280, %v3381
    %vm3384 = vcmp.eq.f32.partialorder %v3280, 0.0
    %v3385 = vand.u32 %v3280, 2147483648
    %v3386 = vsel %vm3384, %v3385, %v3383
    %v3387 = vrsqrt.pop %v3281
    %v3388 = vmul.f32 %v3281, %v3387
    %vm3389 = vcmp.eq.f32.partialorder %v3281, inf
    %v3390 = vsel %vm3389, %v3281, %v3388
    %vm3391 = vcmp.eq.f32.partialorder %v3281, 0.0
    %v3392 = vand.u32 %v3281, 2147483648
    %v3393 = vsel %vm3391, %v3392, %v3390
    %vm3394 = vcmp.eq.s32.totalorder %v94, 8
    %vm3395 = vcmp.eq.s32.totalorder %v95, 8
    %v3396 = vadd.f32 %v3266, %v3267
    %v3397 = vadd.f32 %v3396, %v3268
    %v3398 = vadd.f32 %v3397, %v3269
    %v3399 = vadd.f32 %v3398, %v3270
    %v3400 = vadd.f32 %v3399, %v3271
    %v3401 = vadd.f32 %v3400, %v3272
    %v3402 = vadd.f32 %v3401, %v3273
    %v3403 = vadd.f32 %v3402, %v3274
    %v3404 = vadd.f32 %v3403, %v3275
    %v3405 = vadd.f32 %v3404, %v3276
    %v3406 = vadd.f32 %v3405, %v3277
    %v3407 = vadd.f32 %v3406, %v3278
    %v3408 = vadd.f32 %v3407, %v3279
    %v3409 = vadd.f32 %v3408, %v3280
    %v3410 = vadd.f32 %v3409, %v3281
    %v3411 = vrot.slane %v3410, 4
    %v3412 = vadd.f32 %v3410, %v3411
    %v3413 = vrot.slane %v3412, 2
    %v3414 = vadd.f32 %v3412, %v3413
    %v3415 = vrot.slane %v3414, 1
    %v3416 = vadd.f32 %v3414, %v3415
    %v3417 = vsel %vm3394, %v3416, %v3049
    %v3418 = vsel %vm3395, %v3416, %v3050
    %v3419 = vadd.f32 %v3288, %v3295
    %v3420 = vadd.f32 %v3419, %v3302
    %v3421 = vadd.f32 %v3420, %v3309
    %v3422 = vadd.f32 %v3421, %v3316
    %v3423 = vadd.f32 %v3422, %v3323
    %v3424 = vadd.f32 %v3423, %v3330
    %v3425 = vadd.f32 %v3424, %v3337
    %v3426 = vadd.f32 %v3425, %v3344
    %v3427 = vadd.f32 %v3426, %v3351
    %v3428 = vadd.f32 %v3427, %v3358
    %v3429 = vadd.f32 %v3428, %v3365
    %v3430 = vadd.f32 %v3429, %v3372
    %v3431 = vadd.f32 %v3430, %v3379
    %v3432 = vadd.f32 %v3431, %v3386
    %v3433 = vadd.f32 %v3432, %v3393
    %v3434 = vrot.slane %v3433, 4
    %v3435 = vadd.f32 %v3433, %v3434
    %v3436 = vrot.slane %v3435, 2
    %v3437 = vadd.f32 %v3435, %v3436
    %v3438 = vrot.slane %v3437, 1
    %v3439 = vadd.f32 %v3437, %v3438
    %v3440 = vsel %vm3394, %v3439, %v3072
    %v3441 = vsel %vm3395, %v3439, %v3073
    %v3442 = vmin.f32 %v3417, %v3418
    %v3443 = vrot.slane %v3442, 4
    %v3444 = vmin.f32 %v3442, %v3443
    %v3445 = vrot.slane %v3444, 2
    %v3446 = vmin.f32 %v3444, %v3445
    %v3447 = vrot.slane %v3446, 1
    %v3448 = vmin.f32 %v3446, %v3447
    %v3449 = vsub.f32 %v3448, %v3417
    %v3450 = vsub.f32 %v3448, %v3418
    %v3451 = vmul.f32 %v3449, 1.442695
    %v3452 = vpow.pop %v3451
    %v3453 = vmul.f32 %v3450, 1.442695
    %v3454 = vpow.pop %v3453
    %v3455 = vadd.f32 %v3452, %v3454
    %v3456 = vrot.slane %v3455, 4
    %v3457 = vadd.f32 %v3455, %v3456
    %v3458 = vrot.slane %v3457, 2
    %v3459 = vadd.f32 %v3457, %v3458
    %v3460 = vrot.slane %v3459, 1
    %v3461 = vadd.f32 %v3459, %v3460
    %v3462 = vmul.f32 %v3452, %v3417
    %v3463 = vmul.f32 %v3454, %v3418
    %v3464 = vadd.f32 %v3462, %v3463
    %v3465 = vrot.slane %v3464, 4
    %v3466 = vadd.f32 %v3464, %v3465
    %v3467 = vrot.slane %v3466, 2
    %v3468 = vadd.f32 %v3466, %v3467
    %v3469 = vrot.slane %v3468, 1
    %v3470 = vadd.f32 %v3468, %v3469
    %v3471 = vrcp.pop %v3461
    %v3472 = vmul.f32 %v3470, %v3471
    %s3473 = sld [smem:[#allocation2]]
    %s3474 = smul.f32 %s3473, -0.0078125
    %v3475 = vstv %s3474
    %v3476 = vmul.f32 %v3475, %v3440
    %v3477 = vmul.f32 %v3475, %v3441
    %v3478 = vsel %vm96, %v3476, -1e+30
    %v3479 = vsel %vm97, %v3477, -1e+30
    %v3480 = vmax.f32 %v3478, %v3479
    %v3481 = vrot.slane %v3480, 4
    %v3482 = vmax.f32 %v3480, %v3481
    %v3483 = vrot.slane %v3482, 2
    %v3484 = vmax.f32 %v3482, %v3483
    %v3485 = vrot.slane %v3484, 1
    %v3486 = vmax.f32 %v3484, %v3485
    %v3487 = vsub.f32 %v3478, %v3486
    %v3488 = vsub.f32 %v3479, %v3486
    %v3489 = vmul.f32 %v3487, 1.442695
    %v3490 = vpow.pop %v3489
    %v3491 = vmul.f32 %v3488, 1.442695
    %v3492 = vpow.pop %v3491
    %v3493 = vadd.f32 %v3490, %v3492
    %v3494 = vrot.slane %v3493, 4
    %v3495 = vadd.f32 %v3493, %v3494
    %v3496 = vrot.slane %v3495, 2
    %v3497 = vadd.f32 %v3495, %v3496
    %v3498 = vrot.slane %v3497, 1
    %v3499 = vadd.f32 %v3497, %v3498
    %v3500 = vlaneseq
    %v3501 = vshrl.u32 %v3500, 7
    %v3502 = vsub.s32 0, %v3501
    %v3503 = vrot.slane %v92, %v3502
    %vm3504 = vcmp.eq.s32.totalorder %v94, %v3503
    %vm3505 = vcmp.eq.s32.totalorder %v95, %v3503
    %v3506 = vsel %vm3504, %v3478, 0.0
    %v3507 = vsel %vm3505, %v3479, 0.0
    %v3508 = vadd.f32 %v3506, %v3507
    %v3509 = vrot.slane %v3508, 4
    %v3510 = vadd.f32 %v3508, %v3509
    %v3511 = vrot.slane %v3510, 2
    %v3512 = vadd.f32 %v3510, %v3511
    %v3513 = vrot.slane %v3512, 1
    %v3514 = vadd.f32 %v3512, %v3513
    %v3515 = vlog2.pop %v3499
    %v3516 = vmul.f32 %v3515, 0.6931472
    %v3517 = vadd.f32 %v3516, %v3486
    %v3518 = vsub.f32 %v3517, %v3514
    %v3519 = vmul.f32 %v3472, 0.01
    %v3520 = vadd.f32 %v3518, %v3519
    %3521 = vst [vmem:[#allocation3] sm:$0x1] %v3520
    %vm3522 = vcmp.eq.f32.partialorder %v3478, %v3486
    %vm3523 = vcmp.eq.f32.partialorder %v3479, %v3486
    %v3524 = vcvt.s32.f32 %v94
    %v3525 = vcvt.s32.f32 %v95
    %v3526 = vsel %vm3522, %v3524, 16.0
    %v3527 = vsel %vm3523, %v3525, 16.0
    %v3528 = vmin.f32 %v3526, %v3527
    %v3529 = vrot.slane %v3528, 4
    %v3530 = vmin.f32 %v3528, %v3529
    %v3531 = vrot.slane %v3530, 2
    %v3532 = vmin.f32 %v3530, %v3531
    %v3533 = vrot.slane %v3532, 1
    %v3534 = vmin.f32 %v3532, %v3533
    %v3535 = vcvt.f32.s32.to.zero.pseudo %v3534
    %3536 = vst [vmem:[#allocation5] sm:$0x1] %v3535
    // Predicated region
    $region26: #{tpu_custom_call.1} parent=1 // pred_check
      _
    $region27: #{tpu_custom_call.1} parent=1 // pred_check_branch
      %3538 = sbr.rel (0) target = $region29
    $region28: #{tpu_custom_call.1} parent=1 // pred_region
      %s3540 = ssub.s32 16, 16
      %3541 = vsyncadd [#allocation4], %s3540
      %s3543 = sshll.u32 [#allocation3], 4
      %s3544 = int_to_ptr.vmem [resolvable:$true] %s3543
      %3546 = dma.vmem_to_hbm [thread:$0]  %s3544, 16, %s6, [#allocation4]
    $region29: #{tpu_custom_call.1} parent=1 // pred_fallthru
      _
    // Predicated region
    $region30: #{tpu_custom_call.1} parent=1 // pred_check
      _
    $region31: #{tpu_custom_call.1} parent=1 // pred_check_branch
      %3548 = sbr.rel (0) target = $region33
    $region32: #{tpu_custom_call.1} parent=1 // pred_region
      %s3550 = ssub.s32 16, 16
      %3551 = vsyncadd [#allocation6], %s3550
      %s3553 = sshll.u32 [#allocation5], 4
      %s3554 = int_to_ptr.vmem [resolvable:$true] %s3553
      %3556 = dma.vmem_to_hbm [thread:$0]  %s3554, 16, %s7, [#allocation6]
    $region33: #{tpu_custom_call.1} parent=1 // pred_fallthru
      _
    // Predicated region
    $region34: #{tpu_custom_call.1} parent=1 // pred_check
      _
    $region35: #{tpu_custom_call.1} parent=1 // pred_check_branch
      %3558 = sbr.rel (0) target = $region37
    $region36: #{tpu_custom_call.1} parent=1 // pred_region
      %3559 = dma.done [#allocation4], 16
    $region37: #{tpu_custom_call.1} parent=1 // pred_fallthru
      _
    // Predicated region
    $region38: #{tpu_custom_call.1} parent=1 // pred_check
      _
    $region39: #{tpu_custom_call.1} parent=1 // pred_check_branch
      %3561 = sbr.rel (0) target = $region41
    $region40: #{tpu_custom_call.1} parent=1 // pred_region
      %3562 = dma.done [#allocation6], 16
    $region41: #{tpu_custom_call.1} parent=1 // pred_fallthru
      _
    %3563 = vsyncpa [#allocation4], 1
    %3564 = vsyncpa [#allocation6], 1

</llo_original>
